<compile_context>
chip_gen: v5e
topology: v5e:2x2
jax: 0.10.0
libtpu: 0.0.40
codegen_flags: <defaults>
</compile_context>

<pallas_src>
import math

import numpy as np
import jax
import jax.numpy as jnp
from jax import lax
from jax.experimental import pallas as pl
from jax.experimental.pallas import tpu as pltpu

_COMPUTE_DTYPE = jnp.bfloat16   # MXU input dtype (accumulation stays f32)


# ----------------------------------------------------------------------------
# Helpers
# ----------------------------------------------------------------------------
def _pad_c(c):
    """Pad a channel count up to a multiple of 128 (lane-dense)."""
    return ((c + 127) // 128) * 128


def _pick_row_tile(ho, cap=16, even=False):
    """Largest divisor of `ho` that is <= cap (and even if requested)."""
    best = 2 if even else 1
    for d in range(1, min(ho, cap) + 1):
        if ho % d == 0 and (not even or d % 2 == 0):
            best = d
    return best


def _vmem_limit(*byte_counts):
    """Scoped-VMEM request: live blocks x2 (double buffering) + headroom."""
    need = 2 * sum(int(b) for b in byte_counts) + (4 << 20)
    return int(min(max(need, 32 << 20), 64 << 20))


# ----------------------------------------------------------------------------
# Kernel bodies
# ----------------------------------------------------------------------------
def _conv3x3_relu_body(x_ref, w_ref, b_ref, th, wo, cout):
    """VALID 3x3 conv + bias + ReLU on one row tile.

    x_ref: (H, W, Cin_p)  activation (bf16), whole image for this batch element
    w_ref: (3, 3*Cin_p, Cout_p)  weights with (dx, cin) flattened into K
    b_ref: (1, Cout_p) f32
    returns (th, wo, cout) f32 post-ReLU tile for output rows [r*th, (r+1)*th).
    """
    cin3 = w_ref.shape[1]                       # 3 * Cin_p
    r = pl.program_id(1)
    row0 = r * th
    xwin = x_ref[pl.ds(row0, th + 2), :, :]     # (th+2, W, Cin_p) halo window

    acc = jnp.zeros((th * wo, cout), jnp.float32)
    for dy in range(3):                          # 3 matmuls, each K = 3*Cin_p
        rows = xwin[dy:dy + th]                  # (th, W, Cin_p)
        taps = jnp.concatenate(
            [rows[:, dx:dx + wo, :] for dx in range(3)], axis=-1)  # (th, wo, 3*Cin_p)
        acc = acc + jnp.dot(taps.reshape(th * wo, cin3), w_ref[dy],
                            preferred_element_type=jnp.float32)

    y = jnp.maximum(acc + b_ref[...], 0.0)       # f32 bias + ReLU epilogue
    return y.reshape(th, wo, cout)


def _conv_kernel(x_ref, w_ref, b_ref, o_ref):
    th, wo, cout = o_ref.shape
    y = _conv3x3_relu_body(x_ref, w_ref, b_ref, th, wo, cout)
    o_ref[...] = y.astype(o_ref.dtype)


def _conv_pool_kernel(x_ref, w_ref, b_ref, o_ref, p_ref):
    """conv3x3 + ReLU, writes the pre-pool feature AND its 2x2/stride-2 max pool."""
    th, wo, cout = o_ref.shape
    y = _conv3x3_relu_body(x_ref, w_ref, b_ref, th, wo, cout)
    o_ref[...] = y.astype(o_ref.dtype)
    # Pool straight from the just-written VMEM tile (no extra HBM round trip).
    hp, wp, _ = p_ref.shape                      # hp = th // 2, wp = wo // 2
    a = o_ref[pl.ds(0, hp, 2), pl.ds(0, wp, 2), :]
    b = o_ref[pl.ds(0, hp, 2), pl.ds(1, wp, 2), :]
    c = o_ref[pl.ds(1, hp, 2), pl.ds(0, wp, 2), :]
    d = o_ref[pl.ds(1, hp, 2), pl.ds(1, wp, 2), :]
    p_ref[...] = jnp.maximum(jnp.maximum(a, b), jnp.maximum(c, d)).astype(p_ref.dtype)


def _maxpool2_kernel(x_ref, o_ref):
    """Standalone 2x2 max pool (fallback for odd row counts); crop handled in-kernel."""
    hp, wp, _ = o_ref.shape
    a = x_ref[pl.ds(0, hp, 2), pl.ds(0, wp, 2), :]
    b = x_ref[pl.ds(0, hp, 2), pl.ds(1, wp, 2), :]
    c = x_ref[pl.ds(1, hp, 2), pl.ds(0, wp, 2), :]
    d = x_ref[pl.ds(1, hp, 2), pl.ds(1, wp, 2), :]
    o_ref[...] = jnp.maximum(jnp.maximum(a, b), jnp.maximum(c, d))


# ----------------------------------------------------------------------------
# pallas_call wrappers
# ----------------------------------------------------------------------------
def conv3x3_relu(x, w, b, *, out_dtype, row_tile_cap=16):
    N, H, W, cin_p = x.shape
    cout_p = w.shape[-1]
    ho, wo = H - 2, W - 2
    th = _pick_row_tile(ho, cap=row_tile_cap, even=False)
    vmem = _vmem_limit(H * W * cin_p * x.dtype.itemsize,
                       w.size * w.dtype.itemsize,
                       b.size * 4,
                       th * wo * cout_p * np.dtype(out_dtype).itemsize)
    return pl.pallas_call(
        _conv_kernel,
        out_shape=jax.ShapeDtypeStruct((N, ho, wo, cout_p), out_dtype),
        grid=(N, ho // th),
        in_specs=[
            pl.BlockSpec((None, H, W, cin_p), lambda n, r: (n, 0, 0, 0)),
            pl.BlockSpec(w.shape, lambda n, r: (0, 0, 0)),
            pl.BlockSpec(b.shape, lambda n, r: (0, 0)),
        ],
        out_specs=pl.BlockSpec((None, th, wo, cout_p), lambda n, r: (n, r, 0, 0)),
        compiler_params=pltpu.CompilerParams(
            dimension_semantics=("parallel", "arbitrary"),
            vmem_limit_bytes=vmem),
    )(x, w, b)


def conv3x3_relu_pool(x, w, b, *, feat_dtype, act_dtype, row_tile_cap=16):
    N, H, W, cin_p = x.shape
    cout_p = w.shape[-1]
    ho, wo = H - 2, W - 2
    assert ho % 2 == 0, "fused conv+pool path requires an even output height"
    hp, wp = ho // 2, wo // 2
    th = _pick_row_tile(ho, cap=row_tile_cap, even=True)
    vmem = _vmem_limit(H * W * cin_p * x.dtype.itemsize,
                       w.size * w.dtype.itemsize,
                       b.size * 4,
                       th * wo * cout_p * np.dtype(feat_dtype).itemsize,
                       (th // 2) * wp * cout_p * np.dtype(act_dtype).itemsize)
    return pl.pallas_call(
        _conv_pool_kernel,
        out_shape=(jax.ShapeDtypeStruct((N, ho, wo, cout_p), feat_dtype),
                   jax.ShapeDtypeStruct((N, hp, wp, cout_p), act_dtype)),
        grid=(N, ho // th),
        in_specs=[
            pl.BlockSpec((None, H, W, cin_p), lambda n, r: (n, 0, 0, 0)),
            pl.BlockSpec(w.shape, lambda n, r: (0, 0, 0)),
            pl.BlockSpec(b.shape, lambda n, r: (0, 0)),
        ],
        out_specs=(
            pl.BlockSpec((None, th, wo, cout_p), lambda n, r: (n, r, 0, 0)),
            pl.BlockSpec((None, th // 2, wp, cout_p), lambda n, r: (n, r, 0, 0)),
        ),
        compiler_params=pltpu.CompilerParams(
            dimension_semantics=("parallel", "arbitrary"),
            vmem_limit_bytes=vmem),
    )(x, w, b)


def maxpool2(x):
    N, H, W, C = x.shape
    hp, wp = H // 2, W // 2
    return pl.pallas_call(
        _maxpool2_kernel,
        out_shape=jax.ShapeDtypeStruct((N, hp, wp, C), x.dtype),
        grid=(N,),
        in_specs=[pl.BlockSpec((None, H, W, C), lambda n: (n, 0, 0, 0))],
        out_specs=pl.BlockSpec((None, hp, wp, C), lambda n: (n, 0, 0, 0)),
        compiler_params=pltpu.CompilerParams(dimension_semantics=("parallel",)),
    )(x)


# ----------------------------------------------------------------------------
# Parameters (synthetic init).  Kernel-side weights are packed: HWIO, zero-padded to
# 128-lane channels, bf16, with (dx, cin) flattened -> (3, 3*Cin_p, Cout_p).
# ----------------------------------------------------------------------------
def _pack_w(w, dtype):
    kh, kw, cin, cout = w.shape
    cin_p, cout_p = _pad_c(cin), _pad_c(cout)
    wp = jnp.zeros((kh, kw, cin_p, cout_p), dtype)
    wp = wp.at[:, :, :cin, :cout].set(w.astype(dtype))
    return wp.reshape(kh, kw * cin_p, cout_p)


def _pack_b(b):
    cout = b.shape[0]
    return jnp.zeros((1, _pad_c(cout)), jnp.float32).at[0, :cout].set(b)


def init_encoder_params(key, channels, compute_dtype=_COMPUTE_DTYPE):
    blocks = []
    for i in range(len(channels) - 1):
        cin, cout = channels[i], channels[i + 1]
        key, k1, k2, k3, k4 = jax.random.split(key, 5)
        w1 = jax.random.normal(k1, (3, 3, cin, cout), jnp.float32) / math.sqrt(9 * cin)
        b1 = 0.02 * jax.random.normal(k2, (cout,), jnp.float32)
        w2 = jax.random.normal(k3, (3, 3, cout, cout), jnp.float32) / math.sqrt(9 * cout)
        b2 = 0.02 * jax.random.normal(k4, (cout,), jnp.float32)
        blocks.append({
            "raw": (w1, b1, w2, b2),
            "cout": cout,
            "w1": _pack_w(w1, compute_dtype), "b1": _pack_b(b1),
            "w2": _pack_w(w2, compute_dtype), "b2": _pack_b(b2),
        })
    return blocks


# ----------------------------------------------------------------------------
# Encoder.forward: per-block pre-pool features, returned in NCHW like the PyTorch module.
# ----------------------------------------------------------------------------
def encoder_forward(x_nchw, params, compute_dtype=_COMPUTE_DTYPE):
    N, cin, H, W = x_nchw.shape
    cin_p = _pad_c(cin)
    x = jnp.transpose(x_nchw, (0, 2, 3, 1))                       # NCHW -> NHWC
    x = jnp.pad(x, ((0, 0), (0, 0), (0, 0), (0, cin_p - cin))).astype(compute_dtype)

    feats = []
    for blk in params:
        cout = blk["cout"]
        x = conv3x3_relu(x, blk["w1"], blk["b1"], out_dtype=compute_dtype)
        ho2 = x.shape[1] - 2
        if ho2 >= 2 and ho2 % 2 == 0:
            feat, x = conv3x3_relu_pool(x, blk["w2"], blk["b2"],
                                        feat_dtype=jnp.float32, act_dtype=compute_dtype)
        else:
            # TODO(synk): odd output height -> no row-tile-aligned pooling; fall back to
            # conv kernel + standalone pool kernel (still no host-side crop).
            feat = conv3x3_relu(x, blk["w2"], blk["b2"], out_dtype=jnp.float32)
            x = maxpool2(feat.astype(compute_dtype))
        feats.append(jnp.transpose(feat[..., :cout], (0, 3, 1, 2)))  # NHWC -> NCHW
    return feats


# ----------------------------------------------------------------------------
# Pure-JAX reference (same bf16-input / f32-accumulate numerics) for validation.
# ----------------------------------------------------------------------------
def _ref_encoder_forward(x_nchw, params, compute_dtype=_COMPUTE_DTYPE):
    dn = ("NHWC", "HWIO", "NHWC")
    x = jnp.transpose(x_nchw, (0, 2, 3, 1)).astype(compute_dtype)
    outs = []
    for blk in params:
        w1, b1, w2, b2 = blk["raw"]
        y = lax.conv_general_dilated(x, w1.astype(compute_dtype), (1, 1), "VALID",
                                     dimension_numbers=dn,
                                     preferred_element_type=jnp.float32)
        y = jnp.maximum(y + b1, 0.0).astype(compute_dtype)
        z = lax.conv_general_dilated(y, w2.astype(compute_dtype), (1, 1), "VALID",
                                     dimension_numbers=dn,
                                     preferred_element_type=jnp.float32)
        z = jnp.maximum(z + b2, 0.0)                              # f32 feature
        outs.append(jnp.transpose(z, (0, 3, 1, 2)))
        x = lax.reduce_window(z, -jnp.inf, lax.max,
                              (1, 2, 2, 1), (1, 2, 2, 1), "VALID").astype(compute_dtype)
    return outs


if __name__ == "__main__":
    key = jax.random.PRNGKey(0)
    # Scaled-down channel plan consistent with the module's (1, 32, 64, 128, 256, 512).
    channels = (1, 8, 16)
    kx, kp = jax.random.split(key)
    x = jax.random.normal(kx, (2, channels[0], 24, 24), jnp.float32)  # NCHW input
    params = init_encoder_params(kp, channels)

    outs = encoder_forward(x, params)
    outs = jax.block_until_ready(outs)

    refs = _ref_encoder_forward(x, params)
    for o, r in zip(outs, refs):
        assert o.shape == r.shape and o.dtype == r.dtype, (o.shape, r.shape, o.dtype, r.dtype)
        err = float(jnp.max(jnp.abs(o - r)))
        assert jnp.allclose(o, r, atol=2e-2, rtol=2e-2), err

    print("KERNEL_OK")
</pallas_src>

<mosaic_0001>
module attributes {stable_mosaic.version = 11 : i64} {
  func.func @_conv_kernel(%arg0: i32, %arg1: i32, %arg2: memref<1x24x24x128xbf16, #tpu.memory_space<vmem>>, %arg3: memref<3x384x128xbf16, #tpu.memory_space<vmem>>, %arg4: memref<1x128xf32, #tpu.memory_space<vmem>>, %arg5: memref<1x11x22x128xbf16, #tpu.memory_space<vmem>>) attributes {dimension_semantics = [#tpu.dimension_semantics<parallel>, #tpu.dimension_semantics<arbitrary>], iteration_bounds = array<i64: 2, 2>, scalar_prefetch = 0 : i64, scratch_operands = 0 : i64, tpu.core_type = #tpu.core_type<tc>, window_params = [{transform_indices = @transform_0, window_bounds = array<i64: 1, 24, 24, 128>}, {pipeline_mode = #tpu.pipeline_mode<synchronous>, transform_indices = @transform_1, window_bounds = array<i64: 3, 384, 128>}, {pipeline_mode = #tpu.pipeline_mode<synchronous>, transform_indices = @transform_2, window_bounds = array<i64: 1, 128>}, {transform_indices = @transform_3, window_bounds = array<i64: 1, 11, 22, 128>}]} {
    %c11_i32 = arith.constant 11 : i32
    %0 = arith.muli %arg1, %c11_i32 : i32
    %c0 = arith.constant 0 : index
    %1 = arith.index_cast %0 : i32 to index
    %c0_0 = arith.constant 0 : index
    %c0_1 = arith.constant 0 : index
    %2 = vector.load %arg2[%c0, %1, %c0_0, %c0_1] : memref<1x24x24x128xbf16, #tpu.memory_space<vmem>>, vector<1x13x24x128xbf16>
    %3 = vector.shape_cast %2 : vector<1x13x24x128xbf16> to vector<13x24x128xbf16>
    %cst = arith.constant 0.000000e+00 : f32
    %4 = vector.broadcast %cst : f32 to vector<242x128xf32>
    %5 = vector.extract_strided_slice %3 {offsets = [0, 0, 0], sizes = [11, 24, 128], strides = [1, 1, 1]} : vector<13x24x128xbf16> to vector<11x24x128xbf16>
    %6 = vector.extract_strided_slice %5 {offsets = [0, 0, 0], sizes = [11, 22, 128], strides = [1, 1, 1]} : vector<11x24x128xbf16> to vector<11x22x128xbf16>
    %7 = vector.extract_strided_slice %5 {offsets = [0, 1, 0], sizes = [11, 22, 128], strides = [1, 1, 1]} : vector<11x24x128xbf16> to vector<11x22x128xbf16>
    %8 = vector.extract_strided_slice %5 {offsets = [0, 2, 0], sizes = [11, 22, 128], strides = [1, 1, 1]} : vector<11x24x128xbf16> to vector<11x22x128xbf16>
    %9 = tpu.concatenate %6, %7, %8 in 2 : vector<11x22x128xbf16>, vector<11x22x128xbf16>, vector<11x22x128xbf16> -> vector<11x22x384xbf16>
    %10 = vector.shape_cast %9 : vector<11x22x384xbf16> to vector<242x384xbf16>
    %c0_2 = arith.constant 0 : index
    %c0_3 = arith.constant 0 : index
    %c0_4 = arith.constant 0 : index
    %11 = vector.load %arg3[%c0_2, %c0_3, %c0_4] : memref<3x384x128xbf16, #tpu.memory_space<vmem>>, vector<1x384x128xbf16>
    %12 = vector.shape_cast %11 : vector<1x384x128xbf16> to vector<384x128xbf16>
    %cst_5 = arith.constant dense<0.000000e+00> : vector<242x128xf32>
    %13 = tpu.matmul %10, %12, %cst_5 {dimension_numbers = #tpu.dot_dimension_numbers<[1], [0], [0], [1], [0, 0, 1, 1], [], []>} : vector<242x384xbf16>, vector<384x128xbf16>, vector<242x128xf32> -> vector<242x128xf32>
    %14 = arith.addf %4, %13 : vector<242x128xf32>
    %15 = vector.extract_strided_slice %3 {offsets = [1, 0, 0], sizes = [11, 24, 128], strides = [1, 1, 1]} : vector<13x24x128xbf16> to vector<11x24x128xbf16>
    %16 = vector.extract_strided_slice %15 {offsets = [0, 0, 0], sizes = [11, 22, 128], strides = [1, 1, 1]} : vector<11x24x128xbf16> to vector<11x22x128xbf16>
    %17 = vector.extract_strided_slice %15 {offsets = [0, 1, 0], sizes = [11, 22, 128], strides = [1, 1, 1]} : vector<11x24x128xbf16> to vector<11x22x128xbf16>
    %18 = vector.extract_strided_slice %15 {offsets = [0, 2, 0], sizes = [11, 22, 128], strides = [1, 1, 1]} : vector<11x24x128xbf16> to vector<11x22x128xbf16>
    %19 = tpu.concatenate %16, %17, %18 in 2 : vector<11x22x128xbf16>, vector<11x22x128xbf16>, vector<11x22x128xbf16> -> vector<11x22x384xbf16>
    %20 = vector.shape_cast %19 : vector<11x22x384xbf16> to vector<242x384xbf16>
    %c1 = arith.constant 1 : index
    %c0_6 = arith.constant 0 : index
    %c0_7 = arith.constant 0 : index
    %21 = vector.load %arg3[%c1, %c0_6, %c0_7] : memref<3x384x128xbf16, #tpu.memory_space<vmem>>, vector<1x384x128xbf16>
    %22 = vector.shape_cast %21 : vector<1x384x128xbf16> to vector<384x128xbf16>
    %cst_8 = arith.constant dense<0.000000e+00> : vector<242x128xf32>
    %23 = tpu.matmul %20, %22, %cst_8 {dimension_numbers = #tpu.dot_dimension_numbers<[1], [0], [0], [1], [0, 0, 1, 1], [], []>} : vector<242x384xbf16>, vector<384x128xbf16>, vector<242x128xf32> -> vector<242x128xf32>
    %24 = arith.addf %14, %23 : vector<242x128xf32>
    %25 = vector.extract_strided_slice %3 {offsets = [2, 0, 0], sizes = [11, 24, 128], strides = [1, 1, 1]} : vector<13x24x128xbf16> to vector<11x24x128xbf16>
    %26 = vector.extract_strided_slice %25 {offsets = [0, 0, 0], sizes = [11, 22, 128], strides = [1, 1, 1]} : vector<11x24x128xbf16> to vector<11x22x128xbf16>
    %27 = vector.extract_strided_slice %25 {offsets = [0, 1, 0], sizes = [11, 22, 128], strides = [1, 1, 1]} : vector<11x24x128xbf16> to vector<11x22x128xbf16>
    %28 = vector.extract_strided_slice %25 {offsets = [0, 2, 0], sizes = [11, 22, 128], strides = [1, 1, 1]} : vector<11x24x128xbf16> to vector<11x22x128xbf16>
    %29 = tpu.concatenate %26, %27, %28 in 2 : vector<11x22x128xbf16>, vector<11x22x128xbf16>, vector<11x22x128xbf16> -> vector<11x22x384xbf16>
    %30 = vector.shape_cast %29 : vector<11x22x384xbf16> to vector<242x384xbf16>
    %c2 = arith.constant 2 : index
    %c0_9 = arith.constant 0 : index
    %c0_10 = arith.constant 0 : index
    %31 = vector.load %arg3[%c2, %c0_9, %c0_10] : memref<3x384x128xbf16, #tpu.memory_space<vmem>>, vector<1x384x128xbf16>
    %32 = vector.shape_cast %31 : vector<1x384x128xbf16> to vector<384x128xbf16>
    %cst_11 = arith.constant dense<0.000000e+00> : vector<242x128xf32>
    %33 = tpu.matmul %30, %32, %cst_11 {dimension_numbers = #tpu.dot_dimension_numbers<[1], [0], [0], [1], [0, 0, 1, 1], [], []>} : vector<242x384xbf16>, vector<384x128xbf16>, vector<242x128xf32> -> vector<242x128xf32>
    %34 = arith.addf %24, %33 : vector<242x128xf32>
    %c0_12 = arith.constant 0 : index
    %c0_13 = arith.constant 0 : index
    %35 = vector.load %arg4[%c0_12, %c0_13] : memref<1x128xf32, #tpu.memory_space<vmem>>, vector<1x128xf32>
    %36 = vector.broadcast %35 : vector<1x128xf32> to vector<242x128xf32>
    %37 = arith.addf %34, %36 : vector<242x128xf32>
    %cst_14 = arith.constant 0.000000e+00 : f32
    %38 = vector.broadcast %cst_14 : f32 to vector<242x128xf32>
    %39 = arith.maximumf %37, %38 : vector<242x128xf32>
    %40 = vector.shape_cast %39 : vector<242x128xf32> to vector<11x22x128xf32>
    %41 = arith.truncf %40 : vector<11x22x128xf32> to vector<11x22x128xbf16>
    %c0_15 = arith.constant 0 : index
    %c0_16 = arith.constant 0 : index
    %c0_17 = arith.constant 0 : index
    %c0_18 = arith.constant 0 : index
    %42 = vector.load %arg5[%c0_15, %c0_16, %c0_17, %c0_18] : memref<1x11x22x128xbf16, #tpu.memory_space<vmem>>, vector<1x11x22x128xbf16>
    %43 = vector.shape_cast %42 : vector<1x11x22x128xbf16> to vector<11x22x128xbf16>
    %44 = vector.shape_cast %41 : vector<11x22x128xbf16> to vector<1x11x22x128xbf16>
    tpu.vector_store %arg5[%c0_15, %c0_16, %c0_17, %c0_18], %44 {strides = array<i32>} : memref<1x11x22x128xbf16, #tpu.memory_space<vmem>>, vector<1x11x22x128xbf16>,
    return
  }
  func.func @transform_0(%arg0: i32, %arg1: i32) -> (i32, i32, i32, i32) {
    %c0_i32 = arith.constant 0 : i32
    %c0_i32_0 = arith.constant 0 : i32
    %c0_i32_1 = arith.constant 0 : i32
    %c0_i32_2 = arith.constant 0 : i32
    return %arg0, %c0_i32, %c0_i32_0, %c0_i32_1 : i32, i32, i32, i32
  }
  func.func @transform_1(%arg0: i32, %arg1: i32) -> (i32, i32, i32) {
    %c0_i32 = arith.constant 0 : i32
    %c0_i32_0 = arith.constant 0 : i32
    %c0_i32_1 = arith.constant 0 : i32
    %c0_i32_2 = arith.constant 0 : i32
    return %c0_i32, %c0_i32_0, %c0_i32_1 : i32, i32, i32
  }
  func.func @transform_2(%arg0: i32, %arg1: i32) -> (i32, i32) {
    %c0_i32 = arith.constant 0 : i32
    %c0_i32_0 = arith.constant 0 : i32
    %c0_i32_1 = arith.constant 0 : i32
    return %c0_i32, %c0_i32_0 : i32, i32
  }
  func.func @transform_3(%arg0: i32, %arg1: i32) -> (i32, i32, i32, i32) {
    %c0_i32 = arith.constant 0 : i32
    %c0_i32_0 = arith.constant 0 : i32
    %c0_i32_1 = arith.constant 0 : i32
    return %arg0, %arg1, %c0_i32, %c0_i32_0 : i32, i32, i32, i32
  }
}

</mosaic_0001>

<llo_original>
// kernel: tpu_custom_call.1
$region0: #{tpu_custom_call.1}
  #allocation0 [shape = 'u32[]', space=smem, size = 0x4, offset = 0x4, fixed_abs, tag = 'smem constant byte address 0x4 - core index']
  #allocation1 [shape = 'u32[72,128]{1,0:T(1,128)}', space=vmem, size = 0x9000, scoped, tag = 'internal scratch']
  %s0 = inlined_call_operand.hbm [shape: bf16[2,24,24,128], index: 0, kind: input, shape index: {}]
  %s1 = inlined_call_operand.hbm [shape: bf16[3,384,128], index: 1, kind: input, shape index: {}]
  %s2 = inlined_call_operand.vmem [shape: f32[1,128], index: 2, kind: input, shape index: {}]
  %s3 = inlined_call_operand.vmem [shape: bf16[2,22,22,128], index: 3, kind: output, shape index: {}]
  %s4 = sld [smem:[#allocation0]]
  $region53: #{tpu_custom_call.1} parent=0
    _
  %s6 = ssub.s32 1, %s4
  %s7 = scalar_select 0, %s6, %s4
  $region1: #{tpu_custom_call.1} parent=0
    #allocation2 [shape = 'u8[294912]{0}', space=vmem, size = 0x48000, scoped, tag = 'input window, operand 0']
    #allocation3 [shape = 's32[2]{0}', space=sflag, size = 0x8, scoped, tag = 'scoped memory for tpu_custom_call.1']
    #allocation4 [shape = 'u8[294912]{0}', space=vmem, size = 0x48000, scoped, tag = 'input window, operand 1, single buffered']
    #allocation5 [shape = 's32[1]{0}', space=sflag, size = 0x4, scoped, tag = 'scoped memory for tpu_custom_call.1']
    %8 = vsyncpa [#allocation3], 0
    %s9 = scalar_lea.sflag [#allocation3], 1
    %10 = vsyncpa %s9, 0
    %11 = vsyncpa [#allocation5], 0
    loop: start=0, step=1, limit=6
    $region2: #{tpu_custom_call.1} parent=1 // loop_pre_header
      _
    $region3: #{tpu_custom_call.1} parent=1 // loop_header
      %s13 = sphi 0, %s17
      %p14 = scmp.ge.s32.totalorder %s13, 6
      %s20 = sphi 0, %s32
      %s21 = sphi 0, %s28
      %s22 = sphi 0, %s20
      %s23 = sphi 0, %s21
      %s24 = sphi 0, %s22
      %s25 = sphi 0, %s23
      %s35 = sphi 0, %s37
      %s38 = sphi 0, %s35
      %s39 = sphi 0, %s38
      %s55 = sphi 0, %s39
      %s59 = sphi 0, %s59
      %s61 = sphi 0, %s59
      %s62 = sphi 0, %s61
      %s76 = sphi 0, %s62
      %s80 = sphi 0, %s80
      %s82 = sphi 0, %s80
      %s83 = sphi 0, %s82
      %s97 = sphi 0, %s83
      %s105 = sphi 0, %s107
      %s108 = sphi 0, %s105
      %s109 = sphi 0, %s108
      %s125 = sphi 0, %s109
    $region4: #{tpu_custom_call.1} parent=1 // loop_header_branch
      %16 = sbr.rel (%p14) target = $region8
    $region5: #{tpu_custom_call.1} parent=1 // loop_body
      %s18 = ssub.s32 %s13, 1
      %s19 = ssub.s32 %s13, 2
      %s26 = sadd.s32 1, %s21
      %p27 = scmp.ge.s32.totalorder %s26, 2
      %s28 = scalar_select %p27, 0, %s26
      %s29 = sadd.s32 1, %s20
      %s30 = scalar_select %p27, %s29, %s20
      %p31 = scmp.ge.s32.totalorder %s30, 2
      %s32 = scalar_select %p31, 0, %s30
      %s33 = ssub.s32 %s20, %s32
      %p34 = scmp.eq.s32.totalorder %s33, 0
      %s36 = sadd.s32 %s35, 1
      %s37 = scalar_select %p34, %s35, %s36
      %p40 = pneg %p34
      %p41 = scmp.eq.s32.totalorder %s13, 3
      %p42 = por %p40, %p41
      %p43 = scmp.ne.s32.totalorder %s35, %s38
      %p44 = scmp.eq.s32.totalorder %s13, 0
      %p45 = por %p43, %p44
      %p46 = scmp.ne.s32.totalorder %s35, %s38
      %p47 = scmp.eq.s32.totalorder %s18, 3
      %p48 = por %p46, %p47
      %p49 = scmp.ne.s32.totalorder %s38, %s39
      %p50 = scmp.eq.s32.totalorder %s18, 0
      %p51 = por %p49, %p50
      %p52 = scmp.ne.s32.totalorder %s38, %s39
      %p53 = scmp.eq.s32.totalorder %s19, 3
      %p54 = por %p52, %p53
      %p56 = scmp.ne.s32.totalorder %s39, %s55
      %p57 = scmp.eq.s32.totalorder %s19, 0
      %p58 = por %p56, %p57
      %s60 = sadd.s32 %s59, 1
      %p63 = scmp.eq.s32.totalorder %s13, 3
      %p64 = scmp.ne.s32.totalorder %s59, %s61
      %p65 = scmp.eq.s32.totalorder %s13, 0
      %p66 = por %p64, %p65
      %p67 = scmp.ne.s32.totalorder %s59, %s61
      %p68 = scmp.eq.s32.totalorder %s18, 3
      %p69 = por %p67, %p68
      %p70 = scmp.ne.s32.totalorder %s61, %s62
      %p71 = scmp.eq.s32.totalorder %s18, 0
      %p72 = por %p70, %p71
      %p73 = scmp.ne.s32.totalorder %s61, %s62
      %p74 = scmp.eq.s32.totalorder %s19, 3
      %p75 = por %p73, %p74
      %p77 = scmp.ne.s32.totalorder %s62, %s76
      %p78 = scmp.eq.s32.totalorder %s19, 0
      %p79 = por %p77, %p78
      %s81 = sadd.s32 %s80, 1
      %p84 = scmp.eq.s32.totalorder %s13, 3
      %p85 = scmp.ne.s32.totalorder %s80, %s82
      %p86 = scmp.eq.s32.totalorder %s13, 0
      %p87 = por %p85, %p86
      %p88 = scmp.ne.s32.totalorder %s80, %s82
      %p89 = scmp.eq.s32.totalorder %s18, 3
      %p90 = por %p88, %p89
      %p91 = scmp.ne.s32.totalorder %s82, %s83
      %p92 = scmp.eq.s32.totalorder %s18, 0
      %p93 = por %p91, %p92
      %p94 = scmp.ne.s32.totalorder %s82, %s83
      %p95 = scmp.eq.s32.totalorder %s19, 3
      %p96 = por %p94, %p95
      %p98 = scmp.ne.s32.totalorder %s83, %s97
      %p99 = scmp.eq.s32.totalorder %s19, 0
      %p100 = por %p98, %p99
      %s101 = ssub.s32 %s20, %s32
      %s102 = ssub.s32 %s21, %s28
      %s103 = sor.u32 %s101, %s102
      %p104 = scmp.eq.s32.totalorder %s103, 0
      %s106 = sadd.s32 %s105, 1
      %s107 = scalar_select %p104, %s105, %s106
      %p110 = pneg %p104
      %p111 = scmp.eq.s32.totalorder %s13, 3
      %p112 = por %p110, %p111
      %p113 = scmp.ne.s32.totalorder %s105, %s108
      %p114 = scmp.eq.s32.totalorder %s13, 0
      %p115 = por %p113, %p114
      %p116 = scmp.ne.s32.totalorder %s105, %s108
      %p117 = scmp.eq.s32.totalorder %s18, 3
      %p118 = por %p116, %p117
      %p119 = scmp.ne.s32.totalorder %s108, %s109
      %p120 = scmp.eq.s32.totalorder %s18, 0
      %p121 = por %p119, %p120
      %p122 = scmp.ne.s32.totalorder %s108, %s109
      %p123 = scmp.eq.s32.totalorder %s19, 3
      %p124 = por %p122, %p123
      %p126 = scmp.ne.s32.totalorder %s109, %s125
      %p127 = scmp.eq.s32.totalorder %s19, 0
      %p128 = por %p126, %p127
      %p129 = scmp.le.s32.totalorder 1, %s13
      %p130 = scmp.lt.s32.totalorder %s13, 5
      %p131 = pnand %p129, %p130
      %p132 = pneg %p131
      // Predicated region
      $region9: #{tpu_custom_call.1} parent=5 // pred_check
        _
      $region10: #{tpu_custom_call.1} parent=5 // pred_check_branch
        %134 = sbr.rel (%p131) target = $region12
      $region11: #{tpu_custom_call.1} parent=5 // pred_region
        %s135 = ssub.s32 %s13, 1
        // Predicated region
        $region13: #{tpu_custom_call.1} parent=11 // pred_check
          %p136 = pneg %p72
        $region14: #{tpu_custom_call.1} parent=11 // pred_check_branch
          %138 = sbr.rel (%p136) target = $region16
        $region15: #{tpu_custom_call.1} parent=11 // pred_region
          %140 = vsyncadd [#allocation5], 0
          %s141 = sshll.u32 %s1, 4
          %s142 = int_to_ptr.hbm [resolvable:$true] %s141
          %s143 = sshll.u32 [#allocation4], 4
          %s144 = int_to_ptr.vmem [resolvable:$true] %s143
          %149 = dma.hbm_to_vmem [thread:$0]  %s142, 9216, %s144, [#allocation5], 64, 64, 4
        $region16: #{tpu_custom_call.1} parent=11 // pred_fallthru
          _
        // Predicated region
        $region17: #{tpu_custom_call.1} parent=11 // pred_check
          %p150 = pneg %p93
        $region18: #{tpu_custom_call.1} parent=11 // pred_check_branch
          %152 = sbr.rel (%p150) target = $region20
        $region19: #{tpu_custom_call.1} parent=11 // pred_region
          _
        $region20: #{tpu_custom_call.1} parent=11 // pred_fallthru
          _
      $region12: #{tpu_custom_call.1} parent=5 // pred_fallthru
        _
      %p153 = scmp.lt.s32.totalorder %s13, 4
      // Predicated region
      $region21: #{tpu_custom_call.1} parent=5 // pred_check
        %p154 = pneg %p153
      $region22: #{tpu_custom_call.1} parent=5 // pred_check_branch
        %156 = sbr.rel (%p154) target = $region24
      $region23: #{tpu_custom_call.1} parent=5 // pred_region
        // Predicated region
        $region25: #{tpu_custom_call.1} parent=23 // pred_check
          %p157 = pneg %p45
        $region26: #{tpu_custom_call.1} parent=23 // pred_check_branch
          %159 = sbr.rel (%p157) target = $region28
        $region27: #{tpu_custom_call.1} parent=23 // pred_region
          %s160 = sand.u32 %s35, 1
          %s161 = scalar_lea.sflag [#allocation3], %s160
          %s162 = sand.u32 %s35, 1
          %s163 = smul.addr %s162, 288
          %s164 = scalar_lea.vmem [#allocation2], %s163
          %166 = vsyncadd %s161, 0
          %s167 = smul.addr %s20, 72
          %s168 = smul.addr %s167, 4
          %s169 = scalar_lea.hbm %s0, %s168
          %s170 = sshll.u32 %s169, 4
          %s171 = int_to_ptr.hbm [resolvable:$true] %s170
          %s172 = sshll.u32 %s164, 4
          %s173 = int_to_ptr.vmem [resolvable:$true] %s172
          %178 = dma.hbm_to_vmem [thread:$0]  %s171, 4608, %s173, %s161, 64, 64, 4
        $region28: #{tpu_custom_call.1} parent=23 // pred_fallthru
          _
      $region24: #{tpu_custom_call.1} parent=5 // pred_fallthru
        _
      %p179 = scmp.le.s32.totalorder 1, %s13
      %p180 = scmp.lt.s32.totalorder %s13, 5
      %p181 = pnand %p179, %p180
      %p182 = pneg %p181
      // Predicated region
      $region29: #{tpu_custom_call.1} parent=5 // pred_check
        _
      $region30: #{tpu_custom_call.1} parent=5 // pred_check_branch
        %184 = sbr.rel (%p181) target = $region32
      $region31: #{tpu_custom_call.1} parent=5 // pred_region
        %s185 = ssub.s32 %s13, 1
        %s186 = sand.u32 %s38, 1
        %s187 = scalar_lea.sflag [#allocation3], %s186
        %s188 = sand.u32 %s38, 1
        %s189 = smul.addr %s188, 288
        %s190 = scalar_lea.vmem [#allocation2], %s189
        // Predicated region
        $region33: #{tpu_custom_call.1} parent=31 // pred_check
          %p191 = pneg %p51
        $region34: #{tpu_custom_call.1} parent=31 // pred_check_branch
          %193 = sbr.rel (%p191) target = $region36
        $region35: #{tpu_custom_call.1} parent=31 // pred_region
          %195 = dma.done %s187, 4608
        $region36: #{tpu_custom_call.1} parent=31 // pred_fallthru
          _
        // Predicated region
        $region37: #{tpu_custom_call.1} parent=31 // pred_check
          %p196 = pneg %p72
        $region38: #{tpu_custom_call.1} parent=31 // pred_check_branch
          %198 = sbr.rel (%p196) target = $region40
        $region39: #{tpu_custom_call.1} parent=31 // pred_region
          %200 = dma.done [#allocation5], 9216
        $region40: #{tpu_custom_call.1} parent=31 // pred_fallthru
          _
        %s201 = sand.u32 %s38, 1
        %s202 = scalar_lea.sflag [#allocation3], %s201
        %s203 = sand.u32 %s38, 1
        %s204 = smul.addr %s203, 288
        %s205 = scalar_lea.vmem [#allocation2], %s204
        %p206 = pneg %p51
        %p207 = pneg %p48
        %p208 = pneg %p72
        %p209 = pneg %p69
        %p210 = pneg %p93
        %p211 = pneg %p90
        %p212 = pneg %p121
        %p213 = pneg %p118
        %s214 = smul.u32 11, %s23
        %p215 = scmp.lt.s32.totalorder %s22, 1
        %s216 = scalar_select %p215, %s22, 1
        %p217 = scmp.lt.s32.totalorder %s214, 21
        %s218 = scalar_select %p217, %s214, 21
        %s219 = smul.addr %s218, 3
        %s220 = smul.addr %s216, 66
        %s221 = sadd.s32 %s219, %s220
        %s222 = smul.addr %s221, 4
        %s223 = scalar_lea.vmem %s3, %s222
        %s224 = smul.u32 11, %s23
        %p225 = scmp.lt.s32.totalorder %s22, 1
        %s226 = scalar_select %p225, %s22, 1
        %p227 = scmp.lt.s32.totalorder %s224, 21
        %s228 = scalar_select %p227, %s224, 21
        %s229 = smul.addr %s228, 3
        %s230 = smul.addr %s226, 66
        %s231 = sadd.s32 %s229, %s230
        %s232 = smul.addr %s231, 4
        %s233 = scalar_lea.vmem %s3, %s232
        %s234 = smul.u32 11, %s23
        %s235 = smul.u32 %s23, 11
        %s236 = smul.u32 %s235, 3
        %s237 = smul.addr %s236, 4
        %s238 = scalar_lea.vmem %s190, %s237 [#allocation2]
        %v239 = vld [vmem:[%s238] sm:$0xf]
        %v240 = vld [vmem:[%s238 + $0x4] sm:$0xf]
        %v241 = vld [vmem:[%s238 + $0x8] sm:$0xf]
        %v242 = vld [vmem:[%s238 + $0xc] sm:$0xf]
        %v243 = vld [vmem:[%s238 + $0x10] sm:$0xf]
        %v244 = vld [vmem:[%s238 + $0x14] sm:$0xf]
        %v245 = vld [vmem:[%s238 + $0x18] sm:$0xf]
        %v246 = vld [vmem:[%s238 + $0x1c] sm:$0xf]
        %v247 = vld [vmem:[%s238 + $0x20] sm:$0xf]
        %v248 = vld [vmem:[%s238 + $0x24] sm:$0xf]
        %v249 = vld [vmem:[%s238 + $0x28] sm:$0xf]
        %v250 = vld [vmem:[%s238 + $0x2c] sm:$0xf]
        %v251 = vld [vmem:[%s238 + $0x30] sm:$0xf]
        %v252 = vld [vmem:[%s238 + $0x34] sm:$0xf]
        %v253 = vld [vmem:[%s238 + $0x38] sm:$0xf]
        %v254 = vld [vmem:[%s238 + $0x3c] sm:$0xf]
        %v255 = vld [vmem:[%s238 + $0x40] sm:$0xf]
        %v256 = vld [vmem:[%s238 + $0x44] sm:$0xf]
        %v257 = vld [vmem:[%s238 + $0x48] sm:$0xf]
        %v258 = vld [vmem:[%s238 + $0x4c] sm:$0xf]
        %v259 = vld [vmem:[%s238 + $0x50] sm:$0xf]
        %v260 = vld [vmem:[%s238 + $0x54] sm:$0xf]
        %v261 = vld [vmem:[%s238 + $0x58] sm:$0xf]
        %v262 = vld [vmem:[%s238 + $0x5c] sm:$0xf]
        %v263 = vld [vmem:[%s238 + $0x60] sm:$0xf]
        %v264 = vld [vmem:[%s238 + $0x64] sm:$0xf]
        %v265 = vld [vmem:[%s238 + $0x68] sm:$0xf]
        %v266 = vld [vmem:[%s238 + $0x6c] sm:$0xf]
        %v267 = vld [vmem:[%s238 + $0x70] sm:$0xf]
        %v268 = vld [vmem:[%s238 + $0x74] sm:$0xf]
        %v269 = vld [vmem:[%s238 + $0x78] sm:$0xf]
        %v270 = vld [vmem:[%s238 + $0x7c] sm:$0xf]
        %v271 = vld [vmem:[%s238 + $0x80] sm:$0xf]
        %v272 = vld [vmem:[%s238 + $0x84] sm:$0xf]
        %v273 = vld [vmem:[%s238 + $0x88] sm:$0xf]
        %v274 = vld [vmem:[%s238 + $0x8c] sm:$0xf]
        %v275 = vld [vmem:[%s238 + $0x90] sm:$0xf]
        %v276 = vld [vmem:[%s238 + $0x94] sm:$0xf]
        %v277 = vld [vmem:[%s238 + $0x98] sm:$0xf]
        %v311 = vunpack.c.l.b16 %v239
        %v312 = vunpack.c.l.b16 %v240
        %v313 = vunpack.c.l.b16 %v241
        %v314 = vunpack.c.l.b16 %v242
        %v315 = vunpack.c.l.b16 %v243
        %v316 = vunpack.c.l.b16 %v244
        %v317 = vunpack.c.l.b16 %v245
        %v318 = vunpack.c.l.b16 %v246
        %v319 = vunpack.c.l.b16 %v247
        %v320 = vunpack.c.l.b16 %v248
        %v321 = vunpack.c.l.b16 %v249
        %v322 = vunpack.c.l.b16 %v250
        %v323 = vunpack.c.l.b16 %v251
        %v324 = vunpack.c.l.b16 %v252
        %v325 = vunpack.c.l.b16 %v253
        %v326 = vunpack.c.l.b16 %v254
        %v327 = vunpack.c.l.b16 %v255
        %v328 = vunpack.c.l.b16 %v256
        %v329 = vunpack.c.l.b16 %v257
        %v330 = vunpack.c.l.b16 %v258
        %v331 = vunpack.c.l.b16 %v259
        %v332 = vunpack.c.l.b16 %v260
        %v333 = vunpack.c.l.b16 %v261
        %v334 = vunpack.c.l.b16 %v262
        %v335 = vunpack.c.l.b16 %v263
        %v336 = vunpack.c.l.b16 %v264
        %v337 = vunpack.c.l.b16 %v265
        %v338 = vunpack.c.l.b16 %v266
        %v339 = vunpack.c.l.b16 %v267
        %v340 = vunpack.c.l.b16 %v268
        %v341 = vunpack.c.l.b16 %v269
        %v342 = vunpack.c.l.b16 %v270
        %v343 = vunpack.c.l.b16 %v271
        %v344 = vpack.c.b16 %v312, %v311
        %v345 = vpack.c.b16 %v313, %v313
        %v346 = vpack.c.b16 %v315, %v314
        %v347 = vpack.c.b16 %v316, %v316
        %v348 = vpack.c.b16 %v318, %v317
        %v349 = vpack.c.b16 %v319, %v319
        %v350 = vpack.c.b16 %v321, %v320
        %v351 = vpack.c.b16 %v322, %v322
        %v352 = vpack.c.b16 %v324, %v323
        %v353 = vpack.c.b16 %v325, %v325
        %v354 = vpack.c.b16 %v327, %v326
        %v355 = vpack.c.b16 %v328, %v328
        %v356 = vpack.c.b16 %v330, %v329
        %v357 = vpack.c.b16 %v331, %v331
        %v358 = vpack.c.b16 %v333, %v332
        %v359 = vpack.c.b16 %v334, %v334
        %v360 = vpack.c.b16 %v336, %v335
        %v361 = vpack.c.b16 %v337, %v337
        %v362 = vpack.c.b16 %v339, %v338
        %v363 = vpack.c.b16 %v340, %v340
        %v364 = vpack.c.b16 %v342, %v341
        %v365 = vpack.c.b16 %v343, %v343
        %vm366 = vsmask.f32 7424
        %v368 = vshrl.u32 %v344, 16
        %v370 = vshll.u32 %v344, 16
        %v372 = vrot.slane %v370, 1
        %v373 = vor.u32 %v368, %v372
        %v375 = vshll.u32 %v345, 16
        %v377 = vrot.slane %v375, 1
        %v378 = vsel %vm366, %v373, %v377
        %v379 = vshrl.u32 %v345, 16
        %v381 = vor.u32 %v379, %v377
        %v383 = vshrl.u32 %v346, 16
        %v385 = vshll.u32 %v346, 16
        %v387 = vrot.slane %v385, 1
        %v388 = vor.u32 %v383, %v387
        %v390 = vshll.u32 %v347, 16
        %v392 = vrot.slane %v390, 1
        %v393 = vsel %vm366, %v388, %v392
        %v394 = vshrl.u32 %v347, 16
        %v396 = vor.u32 %v394, %v392
        %v398 = vshrl.u32 %v348, 16
        %v400 = vshll.u32 %v348, 16
        %v402 = vrot.slane %v400, 1
        %v403 = vor.u32 %v398, %v402
        %v405 = vshll.u32 %v349, 16
        %v407 = vrot.slane %v405, 1
        %v408 = vsel %vm366, %v403, %v407
        %v409 = vshrl.u32 %v349, 16
        %v411 = vor.u32 %v409, %v407
        %v413 = vshrl.u32 %v350, 16
        %v415 = vshll.u32 %v350, 16
        %v417 = vrot.slane %v415, 1
        %v418 = vor.u32 %v413, %v417
        %v420 = vshll.u32 %v351, 16
        %v422 = vrot.slane %v420, 1
        %v423 = vsel %vm366, %v418, %v422
        %v424 = vshrl.u32 %v351, 16
        %v426 = vor.u32 %v424, %v422
        %v428 = vshrl.u32 %v352, 16
        %v430 = vshll.u32 %v352, 16
        %v432 = vrot.slane %v430, 1
        %v433 = vor.u32 %v428, %v432
        %v435 = vshll.u32 %v353, 16
        %v437 = vrot.slane %v435, 1
        %v438 = vsel %vm366, %v433, %v437
        %v439 = vshrl.u32 %v353, 16
        %v441 = vor.u32 %v439, %v437
        %v443 = vshrl.u32 %v354, 16
        %v445 = vshll.u32 %v354, 16
        %v447 = vrot.slane %v445, 1
        %v448 = vor.u32 %v443, %v447
        %v450 = vshll.u32 %v355, 16
        %v452 = vrot.slane %v450, 1
        %v453 = vsel %vm366, %v448, %v452
        %v454 = vshrl.u32 %v355, 16
        %v456 = vor.u32 %v454, %v452
        %v458 = vshrl.u32 %v356, 16
        %v460 = vshll.u32 %v356, 16
        %v462 = vrot.slane %v460, 1
        %v463 = vor.u32 %v458, %v462
        %v465 = vshll.u32 %v357, 16
        %v467 = vrot.slane %v465, 1
        %v468 = vsel %vm366, %v463, %v467
        %v469 = vshrl.u32 %v357, 16
        %v471 = vor.u32 %v469, %v467
        %v473 = vshrl.u32 %v358, 16
        %v475 = vshll.u32 %v358, 16
        %v477 = vrot.slane %v475, 1
        %v478 = vor.u32 %v473, %v477
        %v480 = vshll.u32 %v359, 16
        %v482 = vrot.slane %v480, 1
        %v483 = vsel %vm366, %v478, %v482
        %v484 = vshrl.u32 %v359, 16
        %v486 = vor.u32 %v484, %v482
        %v488 = vshrl.u32 %v360, 16
        %v490 = vshll.u32 %v360, 16
        %v492 = vrot.slane %v490, 1
        %v493 = vor.u32 %v488, %v492
        %v495 = vshll.u32 %v361, 16
        %v497 = vrot.slane %v495, 1
        %v498 = vsel %vm366, %v493, %v497
        %v499 = vshrl.u32 %v361, 16
        %v501 = vor.u32 %v499, %v497
        %v503 = vshrl.u32 %v362, 16
        %v505 = vshll.u32 %v362, 16
        %v507 = vrot.slane %v505, 1
        %v508 = vor.u32 %v503, %v507
        %v510 = vshll.u32 %v363, 16
        %v512 = vrot.slane %v510, 1
        %v513 = vsel %vm366, %v508, %v512
        %v514 = vshrl.u32 %v363, 16
        %v516 = vor.u32 %v514, %v512
        %v518 = vshrl.u32 %v364, 16
        %v520 = vshll.u32 %v364, 16
        %v522 = vrot.slane %v520, 1
        %v523 = vor.u32 %v518, %v522
        %v525 = vshll.u32 %v365, 16
        %v527 = vrot.slane %v525, 1
        %v528 = vsel %vm366, %v523, %v527
        %v529 = vshrl.u32 %v365, 16
        %v531 = vor.u32 %v529, %v527
        %vm532 = vcmask 1046528
        %v533 = vrot.slane %v344, 1
        %v534 = vrot.slane %v345, 1
        %v535 = vsel %vm532, %v533, %v534
        %v536 = vrot.slane %v346, 1
        %v537 = vrot.slane %v347, 1
        %v538 = vsel %vm532, %v536, %v537
        %v539 = vrot.slane %v348, 1
        %v540 = vrot.slane %v349, 1
        %v541 = vsel %vm532, %v539, %v540
        %v542 = vrot.slane %v350, 1
        %v543 = vrot.slane %v351, 1
        %v544 = vsel %vm532, %v542, %v543
        %v545 = vrot.slane %v352, 1
        %v546 = vrot.slane %v353, 1
        %v547 = vsel %vm532, %v545, %v546
        %v548 = vrot.slane %v354, 1
        %v549 = vrot.slane %v355, 1
        %v550 = vsel %vm532, %v548, %v549
        %v551 = vrot.slane %v356, 1
        %v552 = vrot.slane %v357, 1
        %v553 = vsel %vm532, %v551, %v552
        %v554 = vrot.slane %v358, 1
        %v555 = vrot.slane %v359, 1
        %v556 = vsel %vm532, %v554, %v555
        %v557 = vrot.slane %v360, 1
        %v558 = vrot.slane %v361, 1
        %v559 = vsel %vm532, %v557, %v558
        %v560 = vrot.slane %v362, 1
        %v561 = vrot.slane %v363, 1
        %v562 = vsel %vm532, %v560, %v561
        %v563 = vrot.slane %v364, 1
        %v564 = vrot.slane %v365, 1
        %v565 = vsel %vm532, %v563, %v564
        %v566 = vrot.slane %v378, 7
        %v567 = vrot.slane %v535, 6
        %v568 = vrot.slane %v381, 7
        %v569 = vrot.slane %v534, 6
        %v570 = vrot.slane %v393, 7
        %v571 = vrot.slane %v538, 6
        %v572 = vrot.slane %v396, 7
        %v573 = vrot.slane %v537, 6
        %v574 = vrot.slane %v408, 7
        %v575 = vrot.slane %v541, 6
        %v576 = vrot.slane %v411, 7
        %v577 = vrot.slane %v540, 6
        %v578 = vrot.slane %v423, 7
        %v579 = vrot.slane %v544, 6
        %v580 = vrot.slane %v426, 7
        %v581 = vrot.slane %v543, 6
        %v582 = vrot.slane %v438, 7
        %v583 = vrot.slane %v547, 6
        %v584 = vrot.slane %v441, 7
        %v585 = vrot.slane %v546, 6
        %v586 = vrot.slane %v453, 7
        %v587 = vrot.slane %v550, 6
        %v588 = vrot.slane %v456, 7
        %v589 = vrot.slane %v549, 6
        %v590 = vrot.slane %v468, 7
        %v591 = vrot.slane %v553, 6
        %v592 = vrot.slane %v471, 7
        %v593 = vrot.slane %v552, 6
        %v594 = vrot.slane %v483, 7
        %v595 = vrot.slane %v556, 6
        %v596 = vrot.slane %v486, 7
        %v597 = vrot.slane %v555, 6
        %v598 = vrot.slane %v498, 7
        %v599 = vrot.slane %v559, 6
        %v600 = vrot.slane %v501, 7
        %v601 = vrot.slane %v558, 6
        %v602 = vrot.slane %v513, 7
        %v603 = vrot.slane %v562, 6
        %v604 = vrot.slane %v516, 7
        %v605 = vrot.slane %v561, 6
        %v606 = vrot.slane %v528, 7
        %v607 = vrot.slane %v565, 6
        %v608 = vrot.slane %v531, 7
        %v609 = vrot.slane %v564, 6
        %vm610 = vcmask 1040384
        %v612 = vsel %vm610, %v344, %v566
        %vm613 = vcmask 1041408
        %v615 = vsel %vm613, %v612, %v567
        %vm616 = vcmask 1041409
        %v617 = vsel %vm616, %v344, %v566
        %vm618 = vcmask 1042433
        %v619 = vsel %vm618, %v617, %v567
        %v621 = vrot.slane %v619, 1
        %vm622 = vcmask 1042434
        %v623 = vsel %vm622, %v344, %v566
        %vm624 = vcmask 1043458
        %v625 = vsel %vm624, %v623, %v567
        %v627 = vrot.slane %v625, 2
        %vm628 = vcmask 1043459
        %v629 = vsel %vm628, %v344, %v566
        %vm630 = vcmask 1044483
        %v631 = vsel %vm630, %v629, %v567
        %v633 = vrot.slane %v631, 3
        %vm634 = vcmask 1044484
        %v635 = vsel %vm634, %v344, %v566
        %vm636 = vcmask 1045508
        %v637 = vsel %vm636, %v635, %v567
        %v639 = vrot.slane %v637, 4
        %vm640 = vcmask 1045509
        %v641 = vsel %vm640, %v344, %v566
        %vm642 = vcmask 1046533
        %v643 = vsel %vm642, %v641, %v567
        %v645 = vrot.slane %v643, 5
        %vm646 = vcmask 1046534
        %v647 = vsel %vm646, %v344, %v566
        %vm648 = vcmask 1045504
        %v649 = vsel %vm648, %v567, %v647
        %v651 = vrot.slane %v649, 6
        %vm652 = vcmask 1046528
        %v653 = vsel %vm652, %v566, %v344
        %vm654 = vcmask 1046529
        %v655 = vsel %vm654, %v567, %v653
        %v657 = vrot.slane %v655, 7
        %v659 = vsel %vm610, %v345, %v568
        %v661 = vsel %vm613, %v659, %v569
        %v662 = vsel %vm616, %v345, %v568
        %v663 = vsel %vm618, %v662, %v569
        %v665 = vrot.slane %v663, 1
        %v666 = vsel %vm622, %v345, %v568
        %v667 = vsel %vm624, %v666, %v569
        %v669 = vrot.slane %v667, 2
        %v671 = vsel %vm610, %v346, %v570
        %v673 = vsel %vm613, %v671, %v571
        %v674 = vsel %vm616, %v346, %v570
        %v675 = vsel %vm618, %v674, %v571
        %v677 = vrot.slane %v675, 1
        %v678 = vsel %vm622, %v346, %v570
        %v679 = vsel %vm624, %v678, %v571
        %v681 = vrot.slane %v679, 2
        %v682 = vsel %vm628, %v346, %v570
        %v683 = vsel %vm630, %v682, %v571
        %v685 = vrot.slane %v683, 3
        %v686 = vsel %vm634, %v346, %v570
        %v687 = vsel %vm636, %v686, %v571
        %v689 = vrot.slane %v687, 4
        %v690 = vsel %vm640, %v346, %v570
        %v691 = vsel %vm642, %v690, %v571
        %v693 = vrot.slane %v691, 5
        %v694 = vsel %vm646, %v346, %v570
        %v695 = vsel %vm648, %v571, %v694
        %v697 = vrot.slane %v695, 6
        %v698 = vsel %vm652, %v570, %v346
        %v699 = vsel %vm654, %v571, %v698
        %v701 = vrot.slane %v699, 7
        %v703 = vsel %vm610, %v347, %v572
        %v705 = vsel %vm613, %v703, %v573
        %v706 = vsel %vm616, %v347, %v572
        %v707 = vsel %vm618, %v706, %v573
        %v709 = vrot.slane %v707, 1
        %v710 = vsel %vm622, %v347, %v572
        %v711 = vsel %vm624, %v710, %v573
        %v713 = vrot.slane %v711, 2
        %v715 = vsel %vm610, %v348, %v574
        %v717 = vsel %vm613, %v715, %v575
        %v718 = vsel %vm616, %v348, %v574
        %v719 = vsel %vm618, %v718, %v575
        %v721 = vrot.slane %v719, 1
        %v722 = vsel %vm622, %v348, %v574
        %v723 = vsel %vm624, %v722, %v575
        %v725 = vrot.slane %v723, 2
        %v726 = vsel %vm628, %v348, %v574
        %v727 = vsel %vm630, %v726, %v575
        %v729 = vrot.slane %v727, 3
        %v730 = vsel %vm634, %v348, %v574
        %v731 = vsel %vm636, %v730, %v575
        %v733 = vrot.slane %v731, 4
        %v734 = vsel %vm640, %v348, %v574
        %v735 = vsel %vm642, %v734, %v575
        %v737 = vrot.slane %v735, 5
        %v738 = vsel %vm646, %v348, %v574
        %v739 = vsel %vm648, %v575, %v738
        %v741 = vrot.slane %v739, 6
        %v742 = vsel %vm652, %v574, %v348
        %v743 = vsel %vm654, %v575, %v742
        %v745 = vrot.slane %v743, 7
        %v747 = vsel %vm610, %v349, %v576
        %v749 = vsel %vm613, %v747, %v577
        %v750 = vsel %vm616, %v349, %v576
        %v751 = vsel %vm618, %v750, %v577
        %v753 = vrot.slane %v751, 1
        %v754 = vsel %vm622, %v349, %v576
        %v755 = vsel %vm624, %v754, %v577
        %v757 = vrot.slane %v755, 2
        %v759 = vsel %vm610, %v350, %v578
        %v761 = vsel %vm613, %v759, %v579
        %v762 = vsel %vm616, %v350, %v578
        %v763 = vsel %vm618, %v762, %v579
        %v765 = vrot.slane %v763, 1
        %v766 = vsel %vm622, %v350, %v578
        %v767 = vsel %vm624, %v766, %v579
        %v769 = vrot.slane %v767, 2
        %v770 = vsel %vm628, %v350, %v578
        %v771 = vsel %vm630, %v770, %v579
        %v773 = vrot.slane %v771, 3
        %v774 = vsel %vm634, %v350, %v578
        %v775 = vsel %vm636, %v774, %v579
        %v777 = vrot.slane %v775, 4
        %v778 = vsel %vm640, %v350, %v578
        %v779 = vsel %vm642, %v778, %v579
        %v781 = vrot.slane %v779, 5
        %v782 = vsel %vm646, %v350, %v578
        %v783 = vsel %vm648, %v579, %v782
        %v785 = vrot.slane %v783, 6
        %v786 = vsel %vm652, %v578, %v350
        %v787 = vsel %vm654, %v579, %v786
        %v789 = vrot.slane %v787, 7
        %v791 = vsel %vm610, %v351, %v580
        %v793 = vsel %vm613, %v791, %v581
        %v794 = vsel %vm616, %v351, %v580
        %v795 = vsel %vm618, %v794, %v581
        %v797 = vrot.slane %v795, 1
        %v798 = vsel %vm622, %v351, %v580
        %v799 = vsel %vm624, %v798, %v581
        %v801 = vrot.slane %v799, 2
        %v803 = vsel %vm610, %v352, %v582
        %v805 = vsel %vm613, %v803, %v583
        %v806 = vsel %vm616, %v352, %v582
        %v807 = vsel %vm618, %v806, %v583
        %v809 = vrot.slane %v807, 1
        %v810 = vsel %vm622, %v352, %v582
        %v811 = vsel %vm624, %v810, %v583
        %v813 = vrot.slane %v811, 2
        %v814 = vsel %vm628, %v352, %v582
        %v815 = vsel %vm630, %v814, %v583
        %v817 = vrot.slane %v815, 3
        %v818 = vsel %vm634, %v352, %v582
        %v819 = vsel %vm636, %v818, %v583
        %v821 = vrot.slane %v819, 4
        %v822 = vsel %vm640, %v352, %v582
        %v823 = vsel %vm642, %v822, %v583
        %v825 = vrot.slane %v823, 5
        %v826 = vsel %vm646, %v352, %v582
        %v827 = vsel %vm648, %v583, %v826
        %v829 = vrot.slane %v827, 6
        %v830 = vsel %vm652, %v582, %v352
        %v831 = vsel %vm654, %v583, %v830
        %v833 = vrot.slane %v831, 7
        %v835 = vsel %vm610, %v353, %v584
        %v837 = vsel %vm613, %v835, %v585
        %v838 = vsel %vm616, %v353, %v584
        %v839 = vsel %vm618, %v838, %v585
        %v841 = vrot.slane %v839, 1
        %v842 = vsel %vm622, %v353, %v584
        %v843 = vsel %vm624, %v842, %v585
        %v845 = vrot.slane %v843, 2
        %v847 = vsel %vm610, %v354, %v586
        %v849 = vsel %vm613, %v847, %v587
        %v850 = vsel %vm616, %v354, %v586
        %v851 = vsel %vm618, %v850, %v587
        %v853 = vrot.slane %v851, 1
        %v854 = vsel %vm622, %v354, %v586
        %v855 = vsel %vm624, %v854, %v587
        %v857 = vrot.slane %v855, 2
        %v858 = vsel %vm628, %v354, %v586
        %v859 = vsel %vm630, %v858, %v587
        %v861 = vrot.slane %v859, 3
        %v862 = vsel %vm634, %v354, %v586
        %v863 = vsel %vm636, %v862, %v587
        %v865 = vrot.slane %v863, 4
        %v866 = vsel %vm640, %v354, %v586
        %v867 = vsel %vm642, %v866, %v587
        %v869 = vrot.slane %v867, 5
        %v870 = vsel %vm646, %v354, %v586
        %v871 = vsel %vm648, %v587, %v870
        %v873 = vrot.slane %v871, 6
        %v874 = vsel %vm652, %v586, %v354
        %v875 = vsel %vm654, %v587, %v874
        %v877 = vrot.slane %v875, 7
        %v879 = vsel %vm610, %v355, %v588
        %v881 = vsel %vm613, %v879, %v589
        %v882 = vsel %vm616, %v355, %v588
        %v883 = vsel %vm618, %v882, %v589
        %v885 = vrot.slane %v883, 1
        %v886 = vsel %vm622, %v355, %v588
        %v887 = vsel %vm624, %v886, %v589
        %v889 = vrot.slane %v887, 2
        %v891 = vsel %vm610, %v356, %v590
        %v893 = vsel %vm613, %v891, %v591
        %v894 = vsel %vm616, %v356, %v590
        %v895 = vsel %vm618, %v894, %v591
        %v897 = vrot.slane %v895, 1
        %v898 = vsel %vm622, %v356, %v590
        %v899 = vsel %vm624, %v898, %v591
        %v901 = vrot.slane %v899, 2
        %v902 = vsel %vm628, %v356, %v590
        %v903 = vsel %vm630, %v902, %v591
        %v905 = vrot.slane %v903, 3
        %v906 = vsel %vm634, %v356, %v590
        %v907 = vsel %vm636, %v906, %v591
        %v909 = vrot.slane %v907, 4
        %v910 = vsel %vm640, %v356, %v590
        %v911 = vsel %vm642, %v910, %v591
        %v913 = vrot.slane %v911, 5
        %v914 = vsel %vm646, %v356, %v590
        %v915 = vsel %vm648, %v591, %v914
        %v917 = vrot.slane %v915, 6
        %v918 = vsel %vm652, %v590, %v356
        %v919 = vsel %vm654, %v591, %v918
        %v921 = vrot.slane %v919, 7
        %v923 = vsel %vm610, %v357, %v592
        %v925 = vsel %vm613, %v923, %v593
        %v926 = vsel %vm616, %v357, %v592
        %v927 = vsel %vm618, %v926, %v593
        %v929 = vrot.slane %v927, 1
        %v930 = vsel %vm622, %v357, %v592
        %v931 = vsel %vm624, %v930, %v593
        %v933 = vrot.slane %v931, 2
        %v935 = vsel %vm610, %v358, %v594
        %v937 = vsel %vm613, %v935, %v595
        %v938 = vsel %vm616, %v358, %v594
        %v939 = vsel %vm618, %v938, %v595
        %v941 = vrot.slane %v939, 1
        %v942 = vsel %vm622, %v358, %v594
        %v943 = vsel %vm624, %v942, %v595
        %v945 = vrot.slane %v943, 2
        %v946 = vsel %vm628, %v358, %v594
        %v947 = vsel %vm630, %v946, %v595
        %v949 = vrot.slane %v947, 3
        %v950 = vsel %vm634, %v358, %v594
        %v951 = vsel %vm636, %v950, %v595
        %v953 = vrot.slane %v951, 4
        %v954 = vsel %vm640, %v358, %v594
        %v955 = vsel %vm642, %v954, %v595
        %v957 = vrot.slane %v955, 5
        %v958 = vsel %vm646, %v358, %v594
        %v959 = vsel %vm648, %v595, %v958
        %v961 = vrot.slane %v959, 6
        %v962 = vsel %vm652, %v594, %v358
        %v963 = vsel %vm654, %v595, %v962
        %v965 = vrot.slane %v963, 7
        %v967 = vsel %vm610, %v359, %v596
        %v969 = vsel %vm613, %v967, %v597
        %v970 = vsel %vm616, %v359, %v596
        %v971 = vsel %vm618, %v970, %v597
        %v973 = vrot.slane %v971, 1
        %v974 = vsel %vm622, %v359, %v596
        %v975 = vsel %vm624, %v974, %v597
        %v977 = vrot.slane %v975, 2
        %v979 = vsel %vm610, %v360, %v598
        %v981 = vsel %vm613, %v979, %v599
        %v982 = vsel %vm616, %v360, %v598
        %v983 = vsel %vm618, %v982, %v599
        %v985 = vrot.slane %v983, 1
        %v986 = vsel %vm622, %v360, %v598
        %v987 = vsel %vm624, %v986, %v599
        %v989 = vrot.slane %v987, 2
        %v990 = vsel %vm628, %v360, %v598
        %v991 = vsel %vm630, %v990, %v599
        %v993 = vrot.slane %v991, 3
        %v994 = vsel %vm634, %v360, %v598
        %v995 = vsel %vm636, %v994, %v599
        %v997 = vrot.slane %v995, 4
        %v998 = vsel %vm640, %v360, %v598
        %v999 = vsel %vm642, %v998, %v599
        %v1001 = vrot.slane %v999, 5
        %v1002 = vsel %vm646, %v360, %v598
        %v1003 = vsel %vm648, %v599, %v1002
        %v1005 = vrot.slane %v1003, 6
        %v1006 = vsel %vm652, %v598, %v360
        %v1007 = vsel %vm654, %v599, %v1006
        %v1009 = vrot.slane %v1007, 7
        %v1011 = vsel %vm610, %v361, %v600
        %v1013 = vsel %vm613, %v1011, %v601
        %v1014 = vsel %vm616, %v361, %v600
        %v1015 = vsel %vm618, %v1014, %v601
        %v1017 = vrot.slane %v1015, 1
        %v1018 = vsel %vm622, %v361, %v600
        %v1019 = vsel %vm624, %v1018, %v601
        %v1021 = vrot.slane %v1019, 2
        %v1023 = vsel %vm610, %v362, %v602
        %v1025 = vsel %vm613, %v1023, %v603
        %v1026 = vsel %vm616, %v362, %v602
        %v1027 = vsel %vm618, %v1026, %v603
        %v1029 = vrot.slane %v1027, 1
        %v1030 = vsel %vm622, %v362, %v602
        %v1031 = vsel %vm624, %v1030, %v603
        %v1033 = vrot.slane %v1031, 2
        %v1034 = vsel %vm628, %v362, %v602
        %v1035 = vsel %vm630, %v1034, %v603
        %v1037 = vrot.slane %v1035, 3
        %v1038 = vsel %vm634, %v362, %v602
        %v1039 = vsel %vm636, %v1038, %v603
        %v1041 = vrot.slane %v1039, 4
        %v1042 = vsel %vm640, %v362, %v602
        %v1043 = vsel %vm642, %v1042, %v603
        %v1045 = vrot.slane %v1043, 5
        %v1046 = vsel %vm646, %v362, %v602
        %v1047 = vsel %vm648, %v603, %v1046
        %v1049 = vrot.slane %v1047, 6
        %v1050 = vsel %vm652, %v602, %v362
        %v1051 = vsel %vm654, %v603, %v1050
        %v1053 = vrot.slane %v1051, 7
        %v1055 = vsel %vm610, %v363, %v604
        %v1057 = vsel %vm613, %v1055, %v605
        %v1058 = vsel %vm616, %v363, %v604
        %v1059 = vsel %vm618, %v1058, %v605
        %v1061 = vrot.slane %v1059, 1
        %v1062 = vsel %vm622, %v363, %v604
        %v1063 = vsel %vm624, %v1062, %v605
        %v1065 = vrot.slane %v1063, 2
        %v1067 = vsel %vm610, %v364, %v606
        %v1069 = vsel %vm613, %v1067, %v607
        %v1070 = vsel %vm616, %v364, %v606
        %v1071 = vsel %vm618, %v1070, %v607
        %v1073 = vrot.slane %v1071, 1
        %v1074 = vsel %vm622, %v364, %v606
        %v1075 = vsel %vm624, %v1074, %v607
        %v1077 = vrot.slane %v1075, 2
        %v1078 = vsel %vm628, %v364, %v606
        %v1079 = vsel %vm630, %v1078, %v607
        %v1081 = vrot.slane %v1079, 3
        %v1082 = vsel %vm634, %v364, %v606
        %v1083 = vsel %vm636, %v1082, %v607
        %v1085 = vrot.slane %v1083, 4
        %v1086 = vsel %vm640, %v364, %v606
        %v1087 = vsel %vm642, %v1086, %v607
        %v1089 = vrot.slane %v1087, 5
        %v1090 = vsel %vm646, %v364, %v606
        %v1091 = vsel %vm648, %v607, %v1090
        %v1093 = vrot.slane %v1091, 6
        %v1094 = vsel %vm652, %v606, %v364
        %v1095 = vsel %vm654, %v607, %v1094
        %v1097 = vrot.slane %v1095, 7
        %v1099 = vsel %vm610, %v365, %v608
        %v1101 = vsel %vm613, %v1099, %v609
        %v1102 = vsel %vm616, %v365, %v608
        %v1103 = vsel %vm618, %v1102, %v609
        %v1105 = vrot.slane %v1103, 1
        %v1106 = vsel %vm622, %v365, %v608
        %v1107 = vsel %vm624, %v1106, %v609
        %v1109 = vrot.slane %v1107, 2
        %v1110 = vld [vmem:[#allocation4] sm:$0xf]
        %v1111 = vld [vmem:[#allocation4 + $0x4] sm:$0xf]
        %v1112 = vld [vmem:[#allocation4 + $0x8] sm:$0xf]
        %v1113 = vld [vmem:[#allocation4 + $0xc] sm:$0xf]
        %v1114 = vld [vmem:[#allocation4 + $0x10] sm:$0xf]
        %v1115 = vld [vmem:[#allocation4 + $0x14] sm:$0xf]
        %v1116 = vld [vmem:[#allocation4 + $0x18] sm:$0xf]
        %v1117 = vld [vmem:[#allocation4 + $0x1c] sm:$0xf]
        %v1118 = vld [vmem:[#allocation4 + $0x20] sm:$0xf]
        %v1119 = vld [vmem:[#allocation4 + $0x24] sm:$0xf]
        %v1120 = vld [vmem:[#allocation4 + $0x28] sm:$0xf]
        %v1121 = vld [vmem:[#allocation4 + $0x2c] sm:$0xf]
        %v1122 = vld [vmem:[#allocation4 + $0x30] sm:$0xf]
        %v1123 = vld [vmem:[#allocation4 + $0x34] sm:$0xf]
        %v1124 = vld [vmem:[#allocation4 + $0x38] sm:$0xf]
        %v1125 = vld [vmem:[#allocation4 + $0x3c] sm:$0xf]
        %v1126 = vld [vmem:[#allocation4 + $0x40] sm:$0xf]
        %v1127 = vld [vmem:[#allocation4 + $0x44] sm:$0xf]
        %v1128 = vld [vmem:[#allocation4 + $0x48] sm:$0xf]
        %v1129 = vld [vmem:[#allocation4 + $0x4c] sm:$0xf]
        %v1130 = vld [vmem:[#allocation4 + $0x50] sm:$0xf]
        %v1131 = vld [vmem:[#allocation4 + $0x54] sm:$0xf]
        %v1132 = vld [vmem:[#allocation4 + $0x58] sm:$0xf]
        %v1133 = vld [vmem:[#allocation4 + $0x5c] sm:$0xf]
        %v1134 = vld [vmem:[#allocation4 + $0x60] sm:$0xf]
        %v1135 = vld [vmem:[#allocation4 + $0x64] sm:$0xf]
        %v1136 = vld [vmem:[#allocation4 + $0x68] sm:$0xf]
        %v1137 = vld [vmem:[#allocation4 + $0x6c] sm:$0xf]
        %v1138 = vld [vmem:[#allocation4 + $0x70] sm:$0xf]
        %v1139 = vld [vmem:[#allocation4 + $0x74] sm:$0xf]
        %v1140 = vld [vmem:[#allocation4 + $0x78] sm:$0xf]
        %v1141 = vld [vmem:[#allocation4 + $0x7c] sm:$0xf]
        %v1142 = vld [vmem:[#allocation4 + $0x80] sm:$0xf]
        %v1143 = vld [vmem:[#allocation4 + $0x84] sm:$0xf]
        %v1144 = vld [vmem:[#allocation4 + $0x88] sm:$0xf]
        %v1145 = vld [vmem:[#allocation4 + $0x8c] sm:$0xf]
        %v1146 = vld [vmem:[#allocation4 + $0x90] sm:$0xf]
        %v1147 = vld [vmem:[#allocation4 + $0x94] sm:$0xf]
        %v1148 = vld [vmem:[#allocation4 + $0x98] sm:$0xf]
        %v1149 = vld [vmem:[#allocation4 + $0x9c] sm:$0xf]
        %v1150 = vld [vmem:[#allocation4 + $0xa0] sm:$0xf]
        %v1151 = vld [vmem:[#allocation4 + $0xa4] sm:$0xf]
        %v1152 = vld [vmem:[#allocation4 + $0xa8] sm:$0xf]
        %v1153 = vld [vmem:[#allocation4 + $0xac] sm:$0xf]
        %v1154 = vld [vmem:[#allocation4 + $0xb0] sm:$0xf]
        %v1155 = vld [vmem:[#allocation4 + $0xb4] sm:$0xf]
        %v1156 = vld [vmem:[#allocation4 + $0xb8] sm:$0xf]
        %v1157 = vld [vmem:[#allocation4 + $0xbc] sm:$0xf]
        %v1161 = vunpack.c.l.b16 %v272
        %v1162 = vunpack.c.l.b16 %v273
        %v1163 = vunpack.c.l.b16 %v274
        %v1164 = vpack.c.b16 %v1162, %v1161
        %v1165 = vpack.c.b16 %v1163, %v1163
        %v1167 = vshrl.u32 %v1164, 16
        %v1169 = vshll.u32 %v1164, 16
        %v1171 = vrot.slane %v1169, 1
        %v1172 = vor.u32 %v1167, %v1171
        %v1174 = vshll.u32 %v1165, 16
        %v1176 = vrot.slane %v1174, 1
        %v1177 = vsel %vm366, %v1172, %v1176
        %v1178 = vshrl.u32 %v1165, 16
        %v1180 = vor.u32 %v1178, %v1176
        %v1181 = vrot.slane %v1164, 1
        %v1182 = vrot.slane %v1165, 1
        %v1183 = vsel %vm532, %v1181, %v1182
        %v1184 = vrot.slane %v1177, 7
        %v1185 = vrot.slane %v1183, 6
        %v1186 = vrot.slane %v1180, 7
        %v1187 = vrot.slane %v1182, 6
        %v1189 = vsel %vm610, %v1164, %v1184
        %v1191 = vsel %vm613, %v1189, %v1185
        %v1192 = vsel %vm616, %v1164, %v1184
        %v1193 = vsel %vm618, %v1192, %v1185
        %v1195 = vrot.slane %v1193, 1
        %v1196 = vsel %vm622, %v1164, %v1184
        %v1197 = vsel %vm624, %v1196, %v1185
        %v1199 = vrot.slane %v1197, 2
        %v1200 = vsel %vm628, %v1164, %v1184
        %v1201 = vsel %vm630, %v1200, %v1185
        %v1203 = vrot.slane %v1201, 3
        %v1204 = vsel %vm634, %v1164, %v1184
        %v1205 = vsel %vm636, %v1204, %v1185
        %v1207 = vrot.slane %v1205, 4
        %v1208 = vsel %vm640, %v1164, %v1184
        %v1209 = vsel %vm642, %v1208, %v1185
        %v1211 = vrot.slane %v1209, 5
        %v1212 = vsel %vm646, %v1164, %v1184
        %v1213 = vsel %vm648, %v1185, %v1212
        %v1215 = vrot.slane %v1213, 6
        %v1216 = vsel %vm652, %v1184, %v1164
        %v1217 = vsel %vm654, %v1185, %v1216
        %v1219 = vrot.slane %v1217, 7
        %v1221 = vsel %vm610, %v1165, %v1186
        %v1223 = vsel %vm613, %v1221, %v1187
        %v1224 = vsel %vm616, %v1165, %v1186
        %v1225 = vsel %vm618, %v1224, %v1187
        %v1227 = vrot.slane %v1225, 1
        %v1228 = vsel %vm622, %v1165, %v1186
        %v1229 = vsel %vm624, %v1228, %v1187
        %v1231 = vrot.slane %v1229, 2
        %s1232 = scalar_lea.vmem [#allocation4], 192
        %v1233 = vld [vmem:[%s1232] sm:$0xf]
        %v1234 = vld [vmem:[%s1232 + $0x4] sm:$0xf]
        %v1235 = vld [vmem:[%s1232 + $0x8] sm:$0xf]
        %v1236 = vld [vmem:[%s1232 + $0xc] sm:$0xf]
        %v1237 = vld [vmem:[%s1232 + $0x10] sm:$0xf]
        %v1238 = vld [vmem:[%s1232 + $0x14] sm:$0xf]
        %v1239 = vld [vmem:[%s1232 + $0x18] sm:$0xf]
        %v1240 = vld [vmem:[%s1232 + $0x1c] sm:$0xf]
        %v1241 = vld [vmem:[%s1232 + $0x20] sm:$0xf]
        %v1242 = vld [vmem:[%s1232 + $0x24] sm:$0xf]
        %v1243 = vld [vmem:[%s1232 + $0x28] sm:$0xf]
        %v1244 = vld [vmem:[%s1232 + $0x2c] sm:$0xf]
        %v1245 = vld [vmem:[%s1232 + $0x30] sm:$0xf]
        %v1246 = vld [vmem:[%s1232 + $0x34] sm:$0xf]
        %v1247 = vld [vmem:[%s1232 + $0x38] sm:$0xf]
        %v1248 = vld [vmem:[%s1232 + $0x3c] sm:$0xf]
        %v1249 = vld [vmem:[%s1232 + $0x40] sm:$0xf]
        %v1250 = vld [vmem:[%s1232 + $0x44] sm:$0xf]
        %v1251 = vld [vmem:[%s1232 + $0x48] sm:$0xf]
        %v1252 = vld [vmem:[%s1232 + $0x4c] sm:$0xf]
        %v1253 = vld [vmem:[%s1232 + $0x50] sm:$0xf]
        %v1254 = vld [vmem:[%s1232 + $0x54] sm:$0xf]
        %v1255 = vld [vmem:[%s1232 + $0x58] sm:$0xf]
        %v1256 = vld [vmem:[%s1232 + $0x5c] sm:$0xf]
        %v1257 = vld [vmem:[%s1232 + $0x60] sm:$0xf]
        %v1258 = vld [vmem:[%s1232 + $0x64] sm:$0xf]
        %v1259 = vld [vmem:[%s1232 + $0x68] sm:$0xf]
        %v1260 = vld [vmem:[%s1232 + $0x6c] sm:$0xf]
        %v1261 = vld [vmem:[%s1232 + $0x70] sm:$0xf]
        %v1262 = vld [vmem:[%s1232 + $0x74] sm:$0xf]
        %v1263 = vld [vmem:[%s1232 + $0x78] sm:$0xf]
        %v1264 = vld [vmem:[%s1232 + $0x7c] sm:$0xf]
        %v1265 = vld [vmem:[%s1232 + $0x80] sm:$0xf]
        %v1266 = vld [vmem:[%s1232 + $0x84] sm:$0xf]
        %v1267 = vld [vmem:[%s1232 + $0x88] sm:$0xf]
        %v1268 = vld [vmem:[%s1232 + $0x8c] sm:$0xf]
        %v1269 = vld [vmem:[%s1232 + $0x90] sm:$0xf]
        %v1270 = vld [vmem:[%s1232 + $0x94] sm:$0xf]
        %v1271 = vld [vmem:[%s1232 + $0x98] sm:$0xf]
        %v1272 = vld [vmem:[%s1232 + $0x9c] sm:$0xf]
        %v1273 = vld [vmem:[%s1232 + $0xa0] sm:$0xf]
        %v1274 = vld [vmem:[%s1232 + $0xa4] sm:$0xf]
        %v1275 = vld [vmem:[%s1232 + $0xa8] sm:$0xf]
        %v1276 = vld [vmem:[%s1232 + $0xac] sm:$0xf]
        %v1277 = vld [vmem:[%s1232 + $0xb0] sm:$0xf]
        %v1278 = vld [vmem:[%s1232 + $0xb4] sm:$0xf]
        %v1279 = vld [vmem:[%s1232 + $0xb8] sm:$0xf]
        %v1280 = vld [vmem:[%s1232 + $0xbc] sm:$0xf]
        %1281 = vst [vmem:[#allocation1] ss:$9 sm:$0xff] %v673
        %s1283 = scalar_lea.vmem [#allocation1], 1
        %1284 = vst [vmem:[%s1283] ss:$9 sm:$0xff] %v677
        %s1286 = scalar_lea.vmem [#allocation1], 2
        %1287 = vst [vmem:[%s1286] ss:$9 sm:$0xff] %v681
        %s1289 = scalar_lea.vmem [#allocation1], 3
        %1290 = vst [vmem:[%s1289] ss:$9 sm:$0xff] %v685
        %s1292 = scalar_lea.vmem [#allocation1], 4
        %1293 = vst [vmem:[%s1292] ss:$9 sm:$0xff] %v689
        %s1295 = scalar_lea.vmem [#allocation1], 5
        %1296 = vst [vmem:[%s1295] ss:$9 sm:$0xff] %v693
        %s1298 = scalar_lea.vmem [#allocation1], 6
        %1299 = vst [vmem:[%s1298] ss:$9 sm:$0xff] %v697
        %s1301 = scalar_lea.vmem [#allocation1], 7
        %1302 = vst [vmem:[%s1301] ss:$9 sm:$0xff] %v701
        %v1303 = vld [vmem:[#allocation1] sm:$0xff]
        %v1304 = vld [vmem:[#allocation1 + $0x9] sm:$0xff]
        %v1305 = vld [vmem:[#allocation1 + $0x12] sm:$0xff]
        %1306 = vst [vmem:[#allocation1] ss:$9 sm:$0xff] %v705
        %1308 = vst [vmem:[%s1283] ss:$9 sm:$0xff] %v709
        %1310 = vst [vmem:[%s1286] ss:$9 sm:$0xff] %v713
        %1311 = vst [vmem:[%s1289] ss:$9 sm:$0xff] %v717
        %1313 = vst [vmem:[%s1292] ss:$9 sm:$0xff] %v721
        %1315 = vst [vmem:[%s1295] ss:$9 sm:$0xff] %v725
        %1317 = vst [vmem:[%s1298] ss:$9 sm:$0xff] %v729
        %1319 = vst [vmem:[%s1301] ss:$9 sm:$0xff] %v733
        %v1320 = vld [vmem:[#allocation1] sm:$0xff]
        %v1321 = vld [vmem:[#allocation1 + $0x9] sm:$0xff]
        %v1322 = vld [vmem:[#allocation1 + $0x12] sm:$0xff]
        %1324 = vst [vmem:[#allocation1] ss:$9 sm:$0xff] %v737
        %1326 = vst [vmem:[%s1283] ss:$9 sm:$0xff] %v741
        %1328 = vst [vmem:[%s1286] ss:$9 sm:$0xff] %v745
        %1329 = vst [vmem:[%s1289] ss:$9 sm:$0xff] %v749
        %1331 = vst [vmem:[%s1292] ss:$9 sm:$0xff] %v753
        %1333 = vst [vmem:[%s1295] ss:$9 sm:$0xff] %v757
        %1334 = vst [vmem:[%s1298] ss:$9 sm:$0xff] %v761
        %1336 = vst [vmem:[%s1301] ss:$9 sm:$0xff] %v765
        %v1337 = vld [vmem:[#allocation1] sm:$0xff]
        %v1338 = vld [vmem:[#allocation1 + $0x9] sm:$0xff]
        %v1339 = vld [vmem:[#allocation1 + $0x12] sm:$0xff]
        %1341 = vst [vmem:[#allocation1] ss:$9 sm:$0xff] %v769
        %1343 = vst [vmem:[%s1283] ss:$9 sm:$0xff] %v773
        %1345 = vst [vmem:[%s1286] ss:$9 sm:$0xff] %v777
        %1347 = vst [vmem:[%s1289] ss:$9 sm:$0xff] %v781
        %1349 = vst [vmem:[%s1292] ss:$9 sm:$0xff] %v785
        %1351 = vst [vmem:[%s1295] ss:$9 sm:$0xff] %v789
        %1352 = vst [vmem:[%s1298] ss:$9 sm:$0xff] %v793
        %1354 = vst [vmem:[%s1301] ss:$9 sm:$0xff] %v797
        %v1355 = vld [vmem:[#allocation1] sm:$0xff]
        %v1356 = vld [vmem:[#allocation1 + $0x9] sm:$0xff]
        %v1357 = vld [vmem:[#allocation1 + $0x12] sm:$0xff]
        %1359 = vst [vmem:[#allocation1] ss:$9 sm:$0xff] %v801
        %1360 = vst [vmem:[%s1283] ss:$9 sm:$0xff] %v805
        %1362 = vst [vmem:[%s1286] ss:$9 sm:$0xff] %v809
        %1364 = vst [vmem:[%s1289] ss:$9 sm:$0xff] %v813
        %1366 = vst [vmem:[%s1292] ss:$9 sm:$0xff] %v817
        %1368 = vst [vmem:[%s1295] ss:$9 sm:$0xff] %v821
        %1370 = vst [vmem:[%s1298] ss:$9 sm:$0xff] %v825
        %1372 = vst [vmem:[%s1301] ss:$9 sm:$0xff] %v829
        %v1373 = vld [vmem:[#allocation1] sm:$0xff]
        %v1374 = vld [vmem:[#allocation1 + $0x9] sm:$0xff]
        %v1375 = vld [vmem:[#allocation1 + $0x12] sm:$0xff]
        %1377 = vst [vmem:[#allocation1] ss:$9 sm:$0xff] %v833
        %1378 = vst [vmem:[%s1283] ss:$9 sm:$0xff] %v837
        %1380 = vst [vmem:[%s1286] ss:$9 sm:$0xff] %v841
        %1382 = vst [vmem:[%s1289] ss:$9 sm:$0xff] %v845
        %1383 = vst [vmem:[%s1292] ss:$9 sm:$0xff] %v849
        %1385 = vst [vmem:[%s1295] ss:$9 sm:$0xff] %v853
        %1387 = vst [vmem:[%s1298] ss:$9 sm:$0xff] %v857
        %1389 = vst [vmem:[%s1301] ss:$9 sm:$0xff] %v861
        %v1390 = vld [vmem:[#allocation1] sm:$0xff]
        %v1391 = vld [vmem:[#allocation1 + $0x9] sm:$0xff]
        %v1392 = vld [vmem:[#allocation1 + $0x12] sm:$0xff]
        %1394 = vst [vmem:[#allocation1] ss:$9 sm:$0xff] %v865
        %1396 = vst [vmem:[%s1283] ss:$9 sm:$0xff] %v869
        %1398 = vst [vmem:[%s1286] ss:$9 sm:$0xff] %v873
        %1400 = vst [vmem:[%s1289] ss:$9 sm:$0xff] %v877
        %1401 = vst [vmem:[%s1292] ss:$9 sm:$0xff] %v881
        %1403 = vst [vmem:[%s1295] ss:$9 sm:$0xff] %v885
        %1405 = vst [vmem:[%s1298] ss:$9 sm:$0xff] %v889
        %1406 = vst [vmem:[%s1301] ss:$9 sm:$0xff] %v893
        %v1407 = vld [vmem:[#allocation1] sm:$0xff]
        %v1408 = vld [vmem:[#allocation1 + $0x9] sm:$0xff]
        %v1409 = vld [vmem:[#allocation1 + $0x12] sm:$0xff]
        %1411 = vst [vmem:[#allocation1] ss:$9 sm:$0xff] %v897
        %1413 = vst [vmem:[%s1283] ss:$9 sm:$0xff] %v901
        %1415 = vst [vmem:[%s1286] ss:$9 sm:$0xff] %v905
        %1417 = vst [vmem:[%s1289] ss:$9 sm:$0xff] %v909
        %1419 = vst [vmem:[%s1292] ss:$9 sm:$0xff] %v913
        %1421 = vst [vmem:[%s1295] ss:$9 sm:$0xff] %v917
        %1423 = vst [vmem:[%s1298] ss:$9 sm:$0xff] %v921
        %1424 = vst [vmem:[%s1301] ss:$9 sm:$0xff] %v925
        %v1425 = vld [vmem:[#allocation1] sm:$0xff]
        %v1426 = vld [vmem:[#allocation1 + $0x9] sm:$0xff]
        %v1427 = vld [vmem:[#allocation1 + $0x12] sm:$0xff]
        %1429 = vst [vmem:[#allocation1] ss:$9 sm:$0xff] %v929
        %1431 = vst [vmem:[%s1283] ss:$9 sm:$0xff] %v933
        %1432 = vst [vmem:[%s1286] ss:$9 sm:$0xff] %v937
        %1434 = vst [vmem:[%s1289] ss:$9 sm:$0xff] %v941
        %1436 = vst [vmem:[%s1292] ss:$9 sm:$0xff] %v945
        %1438 = vst [vmem:[%s1295] ss:$9 sm:$0xff] %v949
        %1440 = vst [vmem:[%s1298] ss:$9 sm:$0xff] %v953
        %1442 = vst [vmem:[%s1301] ss:$9 sm:$0xff] %v957
        %v1443 = vld [vmem:[#allocation1] sm:$0xff]
        %v1444 = vld [vmem:[#allocation1 + $0x9] sm:$0xff]
        %v1445 = vld [vmem:[#allocation1 + $0x12] sm:$0xff]
        %1447 = vst [vmem:[#allocation1] ss:$9 sm:$0xff] %v961
        %1449 = vst [vmem:[%s1283] ss:$9 sm:$0xff] %v965
        %1450 = vst [vmem:[%s1286] ss:$9 sm:$0xff] %v969
        %1452 = vst [vmem:[%s1289] ss:$9 sm:$0xff] %v973
        %1454 = vst [vmem:[%s1292] ss:$9 sm:$0xff] %v977
        %1455 = vst [vmem:[%s1295] ss:$9 sm:$0xff] %v981
        %1457 = vst [vmem:[%s1298] ss:$9 sm:$0xff] %v985
        %1459 = vst [vmem:[%s1301] ss:$9 sm:$0xff] %v989
        %v1460 = vld [vmem:[#allocation1] sm:$0xff]
        %v1461 = vld [vmem:[#allocation1 + $0x9] sm:$0xff]
        %v1462 = vld [vmem:[#allocation1 + $0x12] sm:$0xff]
        %1464 = vst [vmem:[#allocation1] ss:$9 sm:$0xff] %v993
        %1466 = vst [vmem:[%s1283] ss:$9 sm:$0xff] %v997
        %1468 = vst [vmem:[%s1286] ss:$9 sm:$0xff] %v1001
        %1470 = vst [vmem:[%s1289] ss:$9 sm:$0xff] %v1005
        %1472 = vst [vmem:[%s1292] ss:$9 sm:$0xff] %v1009
        %1473 = vst [vmem:[%s1295] ss:$9 sm:$0xff] %v1013
        %1475 = vst [vmem:[%s1298] ss:$9 sm:$0xff] %v1017
        %1477 = vst [vmem:[%s1301] ss:$9 sm:$0xff] %v1021
        %v1478 = vld [vmem:[#allocation1] sm:$0xff]
        %v1479 = vld [vmem:[#allocation1 + $0x9] sm:$0xff]
        %v1480 = vld [vmem:[#allocation1 + $0x12] sm:$0xff]
        %1481 = vst [vmem:[#allocation1] ss:$9 sm:$0xff] %v1025
        %1483 = vst [vmem:[%s1283] ss:$9 sm:$0xff] %v1029
        %1485 = vst [vmem:[%s1286] ss:$9 sm:$0xff] %v1033
        %1487 = vst [vmem:[%s1289] ss:$9 sm:$0xff] %v1037
        %1489 = vst [vmem:[%s1292] ss:$9 sm:$0xff] %v1041
        %1491 = vst [vmem:[%s1295] ss:$9 sm:$0xff] %v1045
        %1493 = vst [vmem:[%s1298] ss:$9 sm:$0xff] %v1049
        %1495 = vst [vmem:[%s1301] ss:$9 sm:$0xff] %v1053
        %v1496 = vld [vmem:[#allocation1] sm:$0xff]
        %v1497 = vld [vmem:[#allocation1 + $0x9] sm:$0xff]
        %v1498 = vld [vmem:[#allocation1 + $0x12] sm:$0xff]
        %1499 = vst [vmem:[#allocation1] ss:$9 sm:$0xff] %v1057
        %1501 = vst [vmem:[%s1283] ss:$9 sm:$0xff] %v1061
        %1503 = vst [vmem:[%s1286] ss:$9 sm:$0xff] %v1065
        %1504 = vst [vmem:[%s1289] ss:$9 sm:$0xff] %v1069
        %1506 = vst [vmem:[%s1292] ss:$9 sm:$0xff] %v1073
        %1508 = vst [vmem:[%s1295] ss:$9 sm:$0xff] %v1077
        %1510 = vst [vmem:[%s1298] ss:$9 sm:$0xff] %v1081
        %1512 = vst [vmem:[%s1301] ss:$9 sm:$0xff] %v1085
        %v1513 = vld [vmem:[#allocation1] sm:$0xff]
        %v1514 = vld [vmem:[#allocation1 + $0x9] sm:$0xff]
        %v1515 = vld [vmem:[#allocation1 + $0x12] sm:$0xff]
        %1517 = vst [vmem:[#allocation1] ss:$9 sm:$0xff] %v1089
        %1519 = vst [vmem:[%s1283] ss:$9 sm:$0xff] %v1093
        %1521 = vst [vmem:[%s1286] ss:$9 sm:$0xff] %v1097
        %1522 = vst [vmem:[%s1289] ss:$9 sm:$0xff] %v1101
        %1524 = vst [vmem:[%s1292] ss:$9 sm:$0xff] %v1105
        %1526 = vst [vmem:[%s1295] ss:$9 sm:$0xff] %v1109
        %1527 = vst [vmem:[%s1298] ss:$9 sm:$0xff] %v1191
        %1529 = vst [vmem:[%s1301] ss:$9 sm:$0xff] %v1195
        %v1530 = vld [vmem:[#allocation1] sm:$0xff]
        %v1531 = vld [vmem:[#allocation1 + $0x9] sm:$0xff]
        %v1532 = vld [vmem:[#allocation1 + $0x12] sm:$0xff]
        %1534 = vst [vmem:[#allocation1] ss:$9 sm:$0xff] %v1199
        %1536 = vst [vmem:[%s1283] ss:$9 sm:$0xff] %v1203
        %1538 = vst [vmem:[%s1286] ss:$9 sm:$0xff] %v1207
        %1540 = vst [vmem:[%s1289] ss:$9 sm:$0xff] %v1211
        %1542 = vst [vmem:[%s1292] ss:$9 sm:$0xff] %v1215
        %1544 = vst [vmem:[%s1295] ss:$9 sm:$0xff] %v1219
        %1545 = vst [vmem:[%s1298] ss:$9 sm:$0xff] %v1223
        %1547 = vst [vmem:[%s1301] ss:$9 sm:$0xff] %v1227
        %v1548 = vld [vmem:[#allocation1] sm:$0xff]
        %v1549 = vld [vmem:[#allocation1 + $0x9] sm:$0xff]
        %v1550 = vld [vmem:[#allocation1 + $0x12] sm:$0xff]
        %1552 = vst [vmem:[#allocation1] ss:$9 sm:$0xff] %v1231
        %v1553 = vld [vmem:[#allocation1] sm:$0xff]
        %v1554 = vld [vmem:[#allocation1 + $0x9] sm:$0xff]
        %v1555 = vld [vmem:[#allocation1 + $0x12] sm:$0xff]
        %v1652 = vunpack.c.l.b16 %v1233
        %v1653 = vunpack.c.l.b16 %v1234
        %v1654 = vunpack.c.l.b16 %v1235
        %v1655 = vunpack.c.l.b16 %v1236
        %v1656 = vunpack.c.l.b16 %v1237
        %v1657 = vunpack.c.l.b16 %v1238
        %v1658 = vunpack.c.l.b16 %v1239
        %v1659 = vunpack.c.l.b16 %v1240
        %v1660 = vunpack.c.l.b16 %v1241
        %v1661 = vunpack.c.l.b16 %v1242
        %v1662 = vunpack.c.l.b16 %v1243
        %v1663 = vunpack.c.l.b16 %v1244
        %v1664 = vunpack.c.l.b16 %v1245
        %v1665 = vunpack.c.l.b16 %v1246
        %v1666 = vunpack.c.l.b16 %v1247
        %v1667 = vunpack.c.l.b16 %v1248
        %v1668 = vunpack.c.l.b16 %v1249
        %v1669 = vunpack.c.l.b16 %v1250
        %v1670 = vunpack.c.l.b16 %v1251
        %v1671 = vunpack.c.l.b16 %v1252
        %v1672 = vunpack.c.l.b16 %v1253
        %v1673 = vunpack.c.l.b16 %v1254
        %v1674 = vunpack.c.l.b16 %v1255
        %v1675 = vunpack.c.l.b16 %v1256
        %v1676 = vunpack.c.l.b16 %v1257
        %v1677 = vunpack.c.l.b16 %v1258
        %v1678 = vunpack.c.l.b16 %v1259
        %v1679 = vunpack.c.l.b16 %v1260
        %v1680 = vunpack.c.l.b16 %v1261
        %v1681 = vunpack.c.l.b16 %v1262
        %v1682 = vunpack.c.l.b16 %v1263
        %v1683 = vunpack.c.l.b16 %v1264
        %v1684 = vunpack.c.l.b16 %v1265
        %v1685 = vunpack.c.l.b16 %v1266
        %v1686 = vunpack.c.l.b16 %v1267
        %v1687 = vunpack.c.l.b16 %v1268
        %v1688 = vunpack.c.l.b16 %v1269
        %v1689 = vunpack.c.l.b16 %v1270
        %v1690 = vunpack.c.l.b16 %v1271
        %v1691 = vunpack.c.l.b16 %v1272
        %v1692 = vunpack.c.l.b16 %v1273
        %v1693 = vunpack.c.l.b16 %v1274
        %v1694 = vunpack.c.l.b16 %v1275
        %v1695 = vunpack.c.l.b16 %v1276
        %v1696 = vunpack.c.l.b16 %v1277
        %v1697 = vunpack.c.l.b16 %v1278
        %v1698 = vunpack.c.l.b16 %v1279
        %v1699 = vunpack.c.l.b16 %v1280
        %v1700 = vpack.c.b16 %v1653, %v1652
        %v1701 = vpack.c.b16 %v1655, %v1654
        %v1702 = vpack.c.b16 %v1657, %v1656
        %v1703 = vpack.c.b16 %v1659, %v1658
        %v1704 = vpack.c.b16 %v1661, %v1660
        %v1705 = vpack.c.b16 %v1663, %v1662
        %v1706 = vpack.c.b16 %v1665, %v1664
        %v1707 = vpack.c.b16 %v1667, %v1666
        %v1708 = vpack.c.b16 %v1669, %v1668
        %v1709 = vpack.c.b16 %v1671, %v1670
        %v1710 = vpack.c.b16 %v1673, %v1672
        %v1711 = vpack.c.b16 %v1675, %v1674
        %v1712 = vpack.c.b16 %v1677, %v1676
        %v1713 = vpack.c.b16 %v1679, %v1678
        %v1714 = vpack.c.b16 %v1681, %v1680
        %v1715 = vpack.c.b16 %v1683, %v1682
        %v1716 = vpack.c.b16 %v1685, %v1684
        %v1717 = vpack.c.b16 %v1687, %v1686
        %v1718 = vpack.c.b16 %v1689, %v1688
        %v1719 = vpack.c.b16 %v1691, %v1690
        %v1720 = vpack.c.b16 %v1693, %v1692
        %v1721 = vpack.c.b16 %v1695, %v1694
        %v1722 = vpack.c.b16 %v1697, %v1696
        %v1723 = vpack.c.b16 %v1699, %v1698
        %1748 = vmatpush.bf16.msra.mxu0 %v1707
        %1749 = vmatpush.bf16.msra.mxu0 %v1706
        %1750 = vmatpush.bf16.msra.mxu0 %v1705
        %1751 = vmatpush.bf16.msra.mxu0 %v1704
        %1752 = vmatpush.bf16.msra.mxu0 %v1703
        %1753 = vmatpush.bf16.msra.mxu0 %v1702
        %1754 = vmatpush.bf16.msra.mxu0 %v1701
        %1755 = vmatpush.bf16.msra.mxu0 %v1700
        %1756 = vmatmul.bf16.gmra.mxu0 %v1303
        %v1757 = vpop.f32.mrf.mxu0
        %v1758 = vadd.f32 0.0, %v1757
        %v1759 = vpop.f32.mrf.mxu0
        %v1760 = vadd.f32 0.0, %v1759
        %1761 = vmatmul.bf16.gmra.mxu0 %v1320
        %v1762 = vpop.f32.mrf.mxu0
        %v1763 = vadd.f32 0.0, %v1762
        %v1764 = vpop.f32.mrf.mxu0
        %v1765 = vadd.f32 0.0, %v1764
        %1766 = vmatmul.bf16.gmra.mxu0 %v1337
        %v1767 = vpop.f32.mrf.mxu0
        %v1768 = vadd.f32 0.0, %v1767
        %v1769 = vpop.f32.mrf.mxu0
        %v1770 = vadd.f32 0.0, %v1769
        %1771 = vmatmul.bf16.gmra.mxu0 %v1355
        %v1772 = vpop.f32.mrf.mxu0
        %v1773 = vadd.f32 0.0, %v1772
        %v1774 = vpop.f32.mrf.mxu0
        %v1775 = vadd.f32 0.0, %v1774
        %1776 = vmatmul.bf16.gmra.mxu0 %v1373
        %v1777 = vpop.f32.mrf.mxu0
        %v1778 = vadd.f32 0.0, %v1777
        %v1779 = vpop.f32.mrf.mxu0
        %v1780 = vadd.f32 0.0, %v1779
        %1781 = vmatmul.bf16.gmra.mxu0 %v1390
        %v1782 = vpop.f32.mrf.mxu0
        %v1783 = vadd.f32 0.0, %v1782
        %v1784 = vpop.f32.mrf.mxu0
        %v1785 = vadd.f32 0.0, %v1784
        %1786 = vmatmul.bf16.gmra.mxu0 %v1407
        %v1787 = vpop.f32.mrf.mxu0
        %v1788 = vadd.f32 0.0, %v1787
        %v1789 = vpop.f32.mrf.mxu0
        %v1790 = vadd.f32 0.0, %v1789
        %1791 = vmatmul.bf16.gmra.mxu0 %v1425
        %v1792 = vpop.f32.mrf.mxu0
        %v1793 = vadd.f32 0.0, %v1792
        %v1794 = vpop.f32.mrf.mxu0
        %v1795 = vadd.f32 0.0, %v1794
        %1796 = vmatmul.bf16.gmra.mxu0 %v1443
        %v1797 = vpop.f32.mrf.mxu0
        %v1798 = vadd.f32 0.0, %v1797
        %v1799 = vpop.f32.mrf.mxu0
        %v1800 = vadd.f32 0.0, %v1799
        %1801 = vmatmul.bf16.gmra.mxu0 %v1460
        %v1802 = vpop.f32.mrf.mxu0
        %v1803 = vadd.f32 0.0, %v1802
        %v1804 = vpop.f32.mrf.mxu0
        %v1805 = vadd.f32 0.0, %v1804
        %1806 = vmatmul.bf16.gmra.mxu0 %v1478
        %v1807 = vpop.f32.mrf.mxu0
        %v1808 = vadd.f32 0.0, %v1807
        %v1809 = vpop.f32.mrf.mxu0
        %v1810 = vadd.f32 0.0, %v1809
        %1811 = vmatmul.bf16.gmra.mxu0 %v1496
        %v1812 = vpop.f32.mrf.mxu0
        %v1813 = vadd.f32 0.0, %v1812
        %v1814 = vpop.f32.mrf.mxu0
        %v1815 = vadd.f32 0.0, %v1814
        %1816 = vmatmul.bf16.gmra.mxu0 %v1513
        %v1817 = vpop.f32.mrf.mxu0
        %v1818 = vadd.f32 0.0, %v1817
        %v1819 = vpop.f32.mrf.mxu0
        %v1820 = vadd.f32 0.0, %v1819
        %1821 = vmatmul.bf16.gmra.mxu0 %v1530
        %v1822 = vpop.f32.mrf.mxu0
        %v1823 = vadd.f32 0.0, %v1822
        %v1824 = vpop.f32.mrf.mxu0
        %v1825 = vadd.f32 0.0, %v1824
        %1826 = vmatmul.bf16.gmra.mxu0 %v1548
        %v1827 = vpop.f32.mrf.mxu0
        %v1828 = vadd.f32 0.0, %v1827
        %v1829 = vpop.f32.mrf.mxu0
        %v1830 = vadd.f32 0.0, %v1829
        %1831 = vmatmul.bf16.gmra.mxu0 %v1553
        %v1832 = vpop.f32.mrf.mxu0
        %v1833 = vadd.f32 0.0, %v1832
        %v1834 = vpop.f32.mrf.mxu0
        %1835 = vdwg.mxu0
        %1836 = vmatpush.bf16.msra.mxu0 %v1715
        %1837 = vmatpush.bf16.msra.mxu0 %v1714
        %1838 = vmatpush.bf16.msra.mxu0 %v1713
        %1839 = vmatpush.bf16.msra.mxu0 %v1712
        %1840 = vmatpush.bf16.msra.mxu0 %v1711
        %1841 = vmatpush.bf16.msra.mxu0 %v1710
        %1842 = vmatpush.bf16.msra.mxu0 %v1709
        %1843 = vmatpush.bf16.msra.mxu0 %v1708
        %1844 = vmatmul.bf16.gmra.mxu0 %v1304
        %v1845 = vpop.f32.mrf.mxu0
        %v1846 = vadd.f32 %v1758, %v1845
        %v1847 = vpop.f32.mrf.mxu0
        %v1848 = vadd.f32 %v1760, %v1847
        %1849 = vmatmul.bf16.gmra.mxu0 %v1321
        %v1850 = vpop.f32.mrf.mxu0
        %v1851 = vadd.f32 %v1763, %v1850
        %v1852 = vpop.f32.mrf.mxu0
        %v1853 = vadd.f32 %v1765, %v1852
        %1854 = vmatmul.bf16.gmra.mxu0 %v1338
        %v1855 = vpop.f32.mrf.mxu0
        %v1856 = vadd.f32 %v1768, %v1855
        %v1857 = vpop.f32.mrf.mxu0
        %v1858 = vadd.f32 %v1770, %v1857
        %1859 = vmatmul.bf16.gmra.mxu0 %v1356
        %v1860 = vpop.f32.mrf.mxu0
        %v1861 = vadd.f32 %v1773, %v1860
        %v1862 = vpop.f32.mrf.mxu0
        %v1863 = vadd.f32 %v1775, %v1862
        %1864 = vmatmul.bf16.gmra.mxu0 %v1374
        %v1865 = vpop.f32.mrf.mxu0
        %v1866 = vadd.f32 %v1778, %v1865
        %v1867 = vpop.f32.mrf.mxu0
        %v1868 = vadd.f32 %v1780, %v1867
        %1869 = vmatmul.bf16.gmra.mxu0 %v1391
        %v1870 = vpop.f32.mrf.mxu0
        %v1871 = vadd.f32 %v1783, %v1870
        %v1872 = vpop.f32.mrf.mxu0
        %v1873 = vadd.f32 %v1785, %v1872
        %1874 = vmatmul.bf16.gmra.mxu0 %v1408
        %v1875 = vpop.f32.mrf.mxu0
        %v1876 = vadd.f32 %v1788, %v1875
        %v1877 = vpop.f32.mrf.mxu0
        %v1878 = vadd.f32 %v1790, %v1877
        %1879 = vmatmul.bf16.gmra.mxu0 %v1426
        %v1880 = vpop.f32.mrf.mxu0
        %v1881 = vadd.f32 %v1793, %v1880
        %v1882 = vpop.f32.mrf.mxu0
        %v1883 = vadd.f32 %v1795, %v1882
        %1884 = vmatmul.bf16.gmra.mxu0 %v1444
        %v1885 = vpop.f32.mrf.mxu0
        %v1886 = vadd.f32 %v1798, %v1885
        %v1887 = vpop.f32.mrf.mxu0
        %v1888 = vadd.f32 %v1800, %v1887
        %1889 = vmatmul.bf16.gmra.mxu0 %v1461
        %v1890 = vpop.f32.mrf.mxu0
        %v1891 = vadd.f32 %v1803, %v1890
        %v1892 = vpop.f32.mrf.mxu0
        %v1893 = vadd.f32 %v1805, %v1892
        %1894 = vmatmul.bf16.gmra.mxu0 %v1479
        %v1895 = vpop.f32.mrf.mxu0
        %v1896 = vadd.f32 %v1808, %v1895
        %v1897 = vpop.f32.mrf.mxu0
        %v1898 = vadd.f32 %v1810, %v1897
        %1899 = vmatmul.bf16.gmra.mxu0 %v1497
        %v1900 = vpop.f32.mrf.mxu0
        %v1901 = vadd.f32 %v1813, %v1900
        %v1902 = vpop.f32.mrf.mxu0
        %v1903 = vadd.f32 %v1815, %v1902
        %1904 = vmatmul.bf16.gmra.mxu0 %v1514
        %v1905 = vpop.f32.mrf.mxu0
        %v1906 = vadd.f32 %v1818, %v1905
        %v1907 = vpop.f32.mrf.mxu0
        %v1908 = vadd.f32 %v1820, %v1907
        %1909 = vmatmul.bf16.gmra.mxu0 %v1531
        %v1910 = vpop.f32.mrf.mxu0
        %v1911 = vadd.f32 %v1823, %v1910
        %v1912 = vpop.f32.mrf.mxu0
        %v1913 = vadd.f32 %v1825, %v1912
        %1914 = vmatmul.bf16.gmra.mxu0 %v1549
        %v1915 = vpop.f32.mrf.mxu0
        %v1916 = vadd.f32 %v1828, %v1915
        %v1917 = vpop.f32.mrf.mxu0
        %v1918 = vadd.f32 %v1830, %v1917
        %1919 = vmatmul.bf16.gmra.mxu0 %v1554
        %v1920 = vpop.f32.mrf.mxu0
        %v1921 = vadd.f32 %v1833, %v1920
        %v1922 = vpop.f32.mrf.mxu0
        %1923 = vdwg.mxu0
        %1924 = vmatpush.bf16.msra.mxu0 %v1723
        %1925 = vmatpush.bf16.msra.mxu0 %v1722
        %1926 = vmatpush.bf16.msra.mxu0 %v1721
        %1927 = vmatpush.bf16.msra.mxu0 %v1720
        %1928 = vmatpush.bf16.msra.mxu0 %v1719
        %1929 = vmatpush.bf16.msra.mxu0 %v1718
        %1930 = vmatpush.bf16.msra.mxu0 %v1717
        %1931 = vmatpush.bf16.msra.mxu0 %v1716
        %1932 = vmatmul.bf16.gmra.mxu0 %v1305
        %v1933 = vpop.f32.mrf.mxu0
        %v1934 = vadd.f32 %v1846, %v1933
        %v1935 = vpop.f32.mrf.mxu0
        %v1936 = vadd.f32 %v1848, %v1935
        %1937 = vmatmul.bf16.gmra.mxu0 %v1322
        %v1938 = vpop.f32.mrf.mxu0
        %v1939 = vadd.f32 %v1851, %v1938
        %v1940 = vpop.f32.mrf.mxu0
        %v1941 = vadd.f32 %v1853, %v1940
        %1942 = vmatmul.bf16.gmra.mxu0 %v1339
        %v1943 = vpop.f32.mrf.mxu0
        %v1944 = vadd.f32 %v1856, %v1943
        %v1945 = vpop.f32.mrf.mxu0
        %v1946 = vadd.f32 %v1858, %v1945
        %1947 = vmatmul.bf16.gmra.mxu0 %v1357
        %v1948 = vpop.f32.mrf.mxu0
        %v1949 = vadd.f32 %v1861, %v1948
        %v1950 = vpop.f32.mrf.mxu0
        %v1951 = vadd.f32 %v1863, %v1950
        %1952 = vmatmul.bf16.gmra.mxu0 %v1375
        %v1953 = vpop.f32.mrf.mxu0
        %v1954 = vadd.f32 %v1866, %v1953
        %v1955 = vpop.f32.mrf.mxu0
        %v1956 = vadd.f32 %v1868, %v1955
        %1957 = vmatmul.bf16.gmra.mxu0 %v1392
        %v1958 = vpop.f32.mrf.mxu0
        %v1959 = vadd.f32 %v1871, %v1958
        %v1960 = vpop.f32.mrf.mxu0
        %v1961 = vadd.f32 %v1873, %v1960
        %1962 = vmatmul.bf16.gmra.mxu0 %v1409
        %v1963 = vpop.f32.mrf.mxu0
        %v1964 = vadd.f32 %v1876, %v1963
        %v1965 = vpop.f32.mrf.mxu0
        %v1966 = vadd.f32 %v1878, %v1965
        %1967 = vmatmul.bf16.gmra.mxu0 %v1427
        %v1968 = vpop.f32.mrf.mxu0
        %v1969 = vadd.f32 %v1881, %v1968
        %v1970 = vpop.f32.mrf.mxu0
        %v1971 = vadd.f32 %v1883, %v1970
        %1972 = vmatmul.bf16.gmra.mxu0 %v1445
        %v1973 = vpop.f32.mrf.mxu0
        %v1974 = vadd.f32 %v1886, %v1973
        %v1975 = vpop.f32.mrf.mxu0
        %v1976 = vadd.f32 %v1888, %v1975
        %1977 = vmatmul.bf16.gmra.mxu0 %v1462
        %v1978 = vpop.f32.mrf.mxu0
        %v1979 = vadd.f32 %v1891, %v1978
        %v1980 = vpop.f32.mrf.mxu0
        %v1981 = vadd.f32 %v1893, %v1980
        %1982 = vmatmul.bf16.gmra.mxu0 %v1480
        %v1983 = vpop.f32.mrf.mxu0
        %v1984 = vadd.f32 %v1896, %v1983
        %v1985 = vpop.f32.mrf.mxu0
        %v1986 = vadd.f32 %v1898, %v1985
        %1987 = vmatmul.bf16.gmra.mxu0 %v1498
        %v1988 = vpop.f32.mrf.mxu0
        %v1989 = vadd.f32 %v1901, %v1988
        %v1990 = vpop.f32.mrf.mxu0
        %v1991 = vadd.f32 %v1903, %v1990
        %1992 = vmatmul.bf16.gmra.mxu0 %v1515
        %v1993 = vpop.f32.mrf.mxu0
        %v1994 = vadd.f32 %v1906, %v1993
        %v1995 = vpop.f32.mrf.mxu0
        %v1996 = vadd.f32 %v1908, %v1995
        %1997 = vmatmul.bf16.gmra.mxu0 %v1532
        %v1998 = vpop.f32.mrf.mxu0
        %v1999 = vadd.f32 %v1911, %v1998
        %v2000 = vpop.f32.mrf.mxu0
        %v2001 = vadd.f32 %v1913, %v2000
        %2002 = vmatmul.bf16.gmra.mxu0 %v1550
        %v2003 = vpop.f32.mrf.mxu0
        %v2004 = vadd.f32 %v1916, %v2003
        %v2005 = vpop.f32.mrf.mxu0
        %v2006 = vadd.f32 %v1918, %v2005
        %2007 = vmatmul.bf16.gmra.mxu0 %v1555
        %v2008 = vpop.f32.mrf.mxu0
        %v2009 = vadd.f32 %v1921, %v2008
        %v2010 = vpop.f32.mrf.mxu0
        %2011 = vdwg.mxu0
        %2012 = vst [vmem:[#allocation1] ss:$9 sm:$0xff] %v615
        %s2014 = scalar_lea.vmem [#allocation1], 1
        %2015 = vst [vmem:[%s2014] ss:$9 sm:$0xff] %v621
        %s2017 = scalar_lea.vmem [#allocation1], 2
        %2018 = vst [vmem:[%s2017] ss:$9 sm:$0xff] %v627
        %s2020 = scalar_lea.vmem [#allocation1], 3
        %2021 = vst [vmem:[%s2020] ss:$9 sm:$0xff] %v633
        %s2023 = scalar_lea.vmem [#allocation1], 4
        %2024 = vst [vmem:[%s2023] ss:$9 sm:$0xff] %v639
        %s2026 = scalar_lea.vmem [#allocation1], 5
        %2027 = vst [vmem:[%s2026] ss:$9 sm:$0xff] %v645
        %s2029 = scalar_lea.vmem [#allocation1], 6
        %2030 = vst [vmem:[%s2029] ss:$9 sm:$0xff] %v651
        %s2032 = scalar_lea.vmem [#allocation1], 7
        %2033 = vst [vmem:[%s2032] ss:$9 sm:$0xff] %v657
        %v2034 = vld [vmem:[#allocation1] sm:$0xff]
        %v2035 = vld [vmem:[#allocation1 + $0x9] sm:$0xff]
        %v2036 = vld [vmem:[#allocation1 + $0x12] sm:$0xff]
        %2037 = vst [vmem:[#allocation1] ss:$9 sm:$0xff] %v661
        %2039 = vst [vmem:[%s2014] ss:$9 sm:$0xff] %v665
        %2041 = vst [vmem:[%s2017] ss:$9 sm:$0xff] %v669
        %2042 = vst [vmem:[%s2020] ss:$9 sm:$0xff] %v673
        %2043 = vst [vmem:[%s2023] ss:$9 sm:$0xff] %v677
        %2044 = vst [vmem:[%s2026] ss:$9 sm:$0xff] %v681
        %2045 = vst [vmem:[%s2029] ss:$9 sm:$0xff] %v685
        %2046 = vst [vmem:[%s2032] ss:$9 sm:$0xff] %v689
        %v2047 = vld [vmem:[#allocation1] sm:$0xff]
        %v2048 = vld [vmem:[#allocation1 + $0x9] sm:$0xff]
        %v2049 = vld [vmem:[#allocation1 + $0x12] sm:$0xff]
        %2050 = vst [vmem:[#allocation1] ss:$9 sm:$0xff] %v693
        %2051 = vst [vmem:[%s2014] ss:$9 sm:$0xff] %v697
        %2052 = vst [vmem:[%s2017] ss:$9 sm:$0xff] %v701
        %2053 = vst [vmem:[%s2020] ss:$9 sm:$0xff] %v705
        %2054 = vst [vmem:[%s2023] ss:$9 sm:$0xff] %v709
        %2055 = vst [vmem:[%s2026] ss:$9 sm:$0xff] %v713
        %2056 = vst [vmem:[%s2029] ss:$9 sm:$0xff] %v717
        %2057 = vst [vmem:[%s2032] ss:$9 sm:$0xff] %v721
        %v2058 = vld [vmem:[#allocation1] sm:$0xff]
        %v2059 = vld [vmem:[#allocation1 + $0x9] sm:$0xff]
        %v2060 = vld [vmem:[#allocation1 + $0x12] sm:$0xff]
        %2061 = vst [vmem:[#allocation1] ss:$9 sm:$0xff] %v725
        %2062 = vst [vmem:[%s2014] ss:$9 sm:$0xff] %v729
        %2063 = vst [vmem:[%s2017] ss:$9 sm:$0xff] %v733
        %2064 = vst [vmem:[%s2020] ss:$9 sm:$0xff] %v737
        %2065 = vst [vmem:[%s2023] ss:$9 sm:$0xff] %v741
        %2066 = vst [vmem:[%s2026] ss:$9 sm:$0xff] %v745
        %2067 = vst [vmem:[%s2029] ss:$9 sm:$0xff] %v749
        %2068 = vst [vmem:[%s2032] ss:$9 sm:$0xff] %v753
        %v2069 = vld [vmem:[#allocation1] sm:$0xff]
        %v2070 = vld [vmem:[#allocation1 + $0x9] sm:$0xff]
        %v2071 = vld [vmem:[#allocation1 + $0x12] sm:$0xff]
        %2072 = vst [vmem:[#allocation1] ss:$9 sm:$0xff] %v757
        %2073 = vst [vmem:[%s2014] ss:$9 sm:$0xff] %v761
        %2074 = vst [vmem:[%s2017] ss:$9 sm:$0xff] %v765
        %2075 = vst [vmem:[%s2020] ss:$9 sm:$0xff] %v769
        %2076 = vst [vmem:[%s2023] ss:$9 sm:$0xff] %v773
        %2077 = vst [vmem:[%s2026] ss:$9 sm:$0xff] %v777
        %2078 = vst [vmem:[%s2029] ss:$9 sm:$0xff] %v781
        %2079 = vst [vmem:[%s2032] ss:$9 sm:$0xff] %v785
        %v2080 = vld [vmem:[#allocation1] sm:$0xff]
        %v2081 = vld [vmem:[#allocation1 + $0x9] sm:$0xff]
        %v2082 = vld [vmem:[#allocation1 + $0x12] sm:$0xff]
        %2083 = vst [vmem:[#allocation1] ss:$9 sm:$0xff] %v789
        %2084 = vst [vmem:[%s2014] ss:$9 sm:$0xff] %v793
        %2085 = vst [vmem:[%s2017] ss:$9 sm:$0xff] %v797
        %2086 = vst [vmem:[%s2020] ss:$9 sm:$0xff] %v801
        %2087 = vst [vmem:[%s2023] ss:$9 sm:$0xff] %v805
        %2088 = vst [vmem:[%s2026] ss:$9 sm:$0xff] %v809
        %2089 = vst [vmem:[%s2029] ss:$9 sm:$0xff] %v813
        %2090 = vst [vmem:[%s2032] ss:$9 sm:$0xff] %v817
        %v2091 = vld [vmem:[#allocation1] sm:$0xff]
        %v2092 = vld [vmem:[#allocation1 + $0x9] sm:$0xff]
        %v2093 = vld [vmem:[#allocation1 + $0x12] sm:$0xff]
        %2094 = vst [vmem:[#allocation1] ss:$9 sm:$0xff] %v821
        %2095 = vst [vmem:[%s2014] ss:$9 sm:$0xff] %v825
        %2096 = vst [vmem:[%s2017] ss:$9 sm:$0xff] %v829
        %2097 = vst [vmem:[%s2020] ss:$9 sm:$0xff] %v833
        %2098 = vst [vmem:[%s2023] ss:$9 sm:$0xff] %v837
        %2099 = vst [vmem:[%s2026] ss:$9 sm:$0xff] %v841
        %2100 = vst [vmem:[%s2029] ss:$9 sm:$0xff] %v845
        %2101 = vst [vmem:[%s2032] ss:$9 sm:$0xff] %v849
        %v2102 = vld [vmem:[#allocation1] sm:$0xff]
        %v2103 = vld [vmem:[#allocation1 + $0x9] sm:$0xff]
        %v2104 = vld [vmem:[#allocation1 + $0x12] sm:$0xff]
        %2105 = vst [vmem:[#allocation1] ss:$9 sm:$0xff] %v853
        %2106 = vst [vmem:[%s2014] ss:$9 sm:$0xff] %v857
        %2107 = vst [vmem:[%s2017] ss:$9 sm:$0xff] %v861
        %2108 = vst [vmem:[%s2020] ss:$9 sm:$0xff] %v865
        %2109 = vst [vmem:[%s2023] ss:$9 sm:$0xff] %v869
        %2110 = vst [vmem:[%s2026] ss:$9 sm:$0xff] %v873
        %2111 = vst [vmem:[%s2029] ss:$9 sm:$0xff] %v877
        %2112 = vst [vmem:[%s2032] ss:$9 sm:$0xff] %v881
        %v2113 = vld [vmem:[#allocation1] sm:$0xff]
        %v2114 = vld [vmem:[#allocation1 + $0x9] sm:$0xff]
        %v2115 = vld [vmem:[#allocation1 + $0x12] sm:$0xff]
        %2116 = vst [vmem:[#allocation1] ss:$9 sm:$0xff] %v885
        %2117 = vst [vmem:[%s2014] ss:$9 sm:$0xff] %v889
        %2118 = vst [vmem:[%s2017] ss:$9 sm:$0xff] %v893
        %2119 = vst [vmem:[%s2020] ss:$9 sm:$0xff] %v897
        %2120 = vst [vmem:[%s2023] ss:$9 sm:$0xff] %v901
        %2121 = vst [vmem:[%s2026] ss:$9 sm:$0xff] %v905
        %2122 = vst [vmem:[%s2029] ss:$9 sm:$0xff] %v909
        %2123 = vst [vmem:[%s2032] ss:$9 sm:$0xff] %v913
        %v2124 = vld [vmem:[#allocation1] sm:$0xff]
        %v2125 = vld [vmem:[#allocation1 + $0x9] sm:$0xff]
        %v2126 = vld [vmem:[#allocation1 + $0x12] sm:$0xff]
        %2127 = vst [vmem:[#allocation1] ss:$9 sm:$0xff] %v917
        %2128 = vst [vmem:[%s2014] ss:$9 sm:$0xff] %v921
        %2129 = vst [vmem:[%s2017] ss:$9 sm:$0xff] %v925
        %2130 = vst [vmem:[%s2020] ss:$9 sm:$0xff] %v929
        %2131 = vst [vmem:[%s2023] ss:$9 sm:$0xff] %v933
        %2132 = vst [vmem:[%s2026] ss:$9 sm:$0xff] %v937
        %2133 = vst [vmem:[%s2029] ss:$9 sm:$0xff] %v941
        %2134 = vst [vmem:[%s2032] ss:$9 sm:$0xff] %v945
        %v2135 = vld [vmem:[#allocation1] sm:$0xff]
        %v2136 = vld [vmem:[#allocation1 + $0x9] sm:$0xff]
        %v2137 = vld [vmem:[#allocation1 + $0x12] sm:$0xff]
        %2138 = vst [vmem:[#allocation1] ss:$9 sm:$0xff] %v949
        %2139 = vst [vmem:[%s2014] ss:$9 sm:$0xff] %v953
        %2140 = vst [vmem:[%s2017] ss:$9 sm:$0xff] %v957
        %2141 = vst [vmem:[%s2020] ss:$9 sm:$0xff] %v961
        %2142 = vst [vmem:[%s2023] ss:$9 sm:$0xff] %v965
        %2143 = vst [vmem:[%s2026] ss:$9 sm:$0xff] %v969
        %2144 = vst [vmem:[%s2029] ss:$9 sm:$0xff] %v973
        %2145 = vst [vmem:[%s2032] ss:$9 sm:$0xff] %v977
        %v2146 = vld [vmem:[#allocation1] sm:$0xff]
        %v2147 = vld [vmem:[#allocation1 + $0x9] sm:$0xff]
        %v2148 = vld [vmem:[#allocation1 + $0x12] sm:$0xff]
        %2149 = vst [vmem:[#allocation1] ss:$9 sm:$0xff] %v981
        %2150 = vst [vmem:[%s2014] ss:$9 sm:$0xff] %v985
        %2151 = vst [vmem:[%s2017] ss:$9 sm:$0xff] %v989
        %2152 = vst [vmem:[%s2020] ss:$9 sm:$0xff] %v993
        %2153 = vst [vmem:[%s2023] ss:$9 sm:$0xff] %v997
        %2154 = vst [vmem:[%s2026] ss:$9 sm:$0xff] %v1001
        %2155 = vst [vmem:[%s2029] ss:$9 sm:$0xff] %v1005
        %2156 = vst [vmem:[%s2032] ss:$9 sm:$0xff] %v1009
        %v2157 = vld [vmem:[#allocation1] sm:$0xff]
        %v2158 = vld [vmem:[#allocation1 + $0x9] sm:$0xff]
        %v2159 = vld [vmem:[#allocation1 + $0x12] sm:$0xff]
        %2160 = vst [vmem:[#allocation1] ss:$9 sm:$0xff] %v1013
        %2161 = vst [vmem:[%s2014] ss:$9 sm:$0xff] %v1017
        %2162 = vst [vmem:[%s2017] ss:$9 sm:$0xff] %v1021
        %2163 = vst [vmem:[%s2020] ss:$9 sm:$0xff] %v1025
        %2164 = vst [vmem:[%s2023] ss:$9 sm:$0xff] %v1029
        %2165 = vst [vmem:[%s2026] ss:$9 sm:$0xff] %v1033
        %2166 = vst [vmem:[%s2029] ss:$9 sm:$0xff] %v1037
        %2167 = vst [vmem:[%s2032] ss:$9 sm:$0xff] %v1041
        %v2168 = vld [vmem:[#allocation1] sm:$0xff]
        %v2169 = vld [vmem:[#allocation1 + $0x9] sm:$0xff]
        %v2170 = vld [vmem:[#allocation1 + $0x12] sm:$0xff]
        %2171 = vst [vmem:[#allocation1] ss:$9 sm:$0xff] %v1045
        %2172 = vst [vmem:[%s2014] ss:$9 sm:$0xff] %v1049
        %2173 = vst [vmem:[%s2017] ss:$9 sm:$0xff] %v1053
        %2174 = vst [vmem:[%s2020] ss:$9 sm:$0xff] %v1057
        %2175 = vst [vmem:[%s2023] ss:$9 sm:$0xff] %v1061
        %2176 = vst [vmem:[%s2026] ss:$9 sm:$0xff] %v1065
        %2177 = vst [vmem:[%s2029] ss:$9 sm:$0xff] %v1069
        %2178 = vst [vmem:[%s2032] ss:$9 sm:$0xff] %v1073
        %v2179 = vld [vmem:[#allocation1] sm:$0xff]
        %v2180 = vld [vmem:[#allocation1 + $0x9] sm:$0xff]
        %v2181 = vld [vmem:[#allocation1 + $0x12] sm:$0xff]
        %2182 = vst [vmem:[#allocation1] ss:$9 sm:$0xff] %v1077
        %2183 = vst [vmem:[%s2014] ss:$9 sm:$0xff] %v1081
        %2184 = vst [vmem:[%s2017] ss:$9 sm:$0xff] %v1085
        %2185 = vst [vmem:[%s2020] ss:$9 sm:$0xff] %v1089
        %2186 = vst [vmem:[%s2023] ss:$9 sm:$0xff] %v1093
        %2187 = vst [vmem:[%s2026] ss:$9 sm:$0xff] %v1097
        %2188 = vst [vmem:[%s2029] ss:$9 sm:$0xff] %v1101
        %2189 = vst [vmem:[%s2032] ss:$9 sm:$0xff] %v1105
        %v2190 = vld [vmem:[#allocation1] sm:$0xff]
        %v2191 = vld [vmem:[#allocation1 + $0x9] sm:$0xff]
        %v2192 = vld [vmem:[#allocation1 + $0x12] sm:$0xff]
        %2193 = vst [vmem:[#allocation1] ss:$9 sm:$0xff] %v1109
        %v2194 = vld [vmem:[#allocation1] sm:$0xff]
        %v2195 = vld [vmem:[#allocation1 + $0x9] sm:$0xff]
        %v2196 = vld [vmem:[#allocation1 + $0x12] sm:$0xff]
        %v2293 = vunpack.c.l.b16 %v1110
        %v2294 = vunpack.c.l.b16 %v1111
        %v2295 = vunpack.c.l.b16 %v1112
        %v2296 = vunpack.c.l.b16 %v1113
        %v2297 = vunpack.c.l.b16 %v1114
        %v2298 = vunpack.c.l.b16 %v1115
        %v2299 = vunpack.c.l.b16 %v1116
        %v2300 = vunpack.c.l.b16 %v1117
        %v2301 = vunpack.c.l.b16 %v1118
        %v2302 = vunpack.c.l.b16 %v1119
        %v2303 = vunpack.c.l.b16 %v1120
        %v2304 = vunpack.c.l.b16 %v1121
        %v2305 = vunpack.c.l.b16 %v1122
        %v2306 = vunpack.c.l.b16 %v1123
        %v2307 = vunpack.c.l.b16 %v1124
        %v2308 = vunpack.c.l.b16 %v1125
        %v2309 = vunpack.c.l.b16 %v1126
        %v2310 = vunpack.c.l.b16 %v1127
        %v2311 = vunpack.c.l.b16 %v1128
        %v2312 = vunpack.c.l.b16 %v1129
        %v2313 = vunpack.c.l.b16 %v1130
        %v2314 = vunpack.c.l.b16 %v1131
        %v2315 = vunpack.c.l.b16 %v1132
        %v2316 = vunpack.c.l.b16 %v1133
        %v2317 = vunpack.c.l.b16 %v1134
        %v2318 = vunpack.c.l.b16 %v1135
        %v2319 = vunpack.c.l.b16 %v1136
        %v2320 = vunpack.c.l.b16 %v1137
        %v2321 = vunpack.c.l.b16 %v1138
        %v2322 = vunpack.c.l.b16 %v1139
        %v2323 = vunpack.c.l.b16 %v1140
        %v2324 = vunpack.c.l.b16 %v1141
        %v2325 = vunpack.c.l.b16 %v1142
        %v2326 = vunpack.c.l.b16 %v1143
        %v2327 = vunpack.c.l.b16 %v1144
        %v2328 = vunpack.c.l.b16 %v1145
        %v2329 = vunpack.c.l.b16 %v1146
        %v2330 = vunpack.c.l.b16 %v1147
        %v2331 = vunpack.c.l.b16 %v1148
        %v2332 = vunpack.c.l.b16 %v1149
        %v2333 = vunpack.c.l.b16 %v1150
        %v2334 = vunpack.c.l.b16 %v1151
        %v2335 = vunpack.c.l.b16 %v1152
        %v2336 = vunpack.c.l.b16 %v1153
        %v2337 = vunpack.c.l.b16 %v1154
        %v2338 = vunpack.c.l.b16 %v1155
        %v2339 = vunpack.c.l.b16 %v1156
        %v2340 = vunpack.c.l.b16 %v1157
        %v2341 = vpack.c.b16 %v2294, %v2293
        %v2342 = vpack.c.b16 %v2296, %v2295
        %v2343 = vpack.c.b16 %v2298, %v2297
        %v2344 = vpack.c.b16 %v2300, %v2299
        %v2345 = vpack.c.b16 %v2302, %v2301
        %v2346 = vpack.c.b16 %v2304, %v2303
        %v2347 = vpack.c.b16 %v2306, %v2305
        %v2348 = vpack.c.b16 %v2308, %v2307
        %v2349 = vpack.c.b16 %v2310, %v2309
        %v2350 = vpack.c.b16 %v2312, %v2311
        %v2351 = vpack.c.b16 %v2314, %v2313
        %v2352 = vpack.c.b16 %v2316, %v2315
        %v2353 = vpack.c.b16 %v2318, %v2317
        %v2354 = vpack.c.b16 %v2320, %v2319
        %v2355 = vpack.c.b16 %v2322, %v2321
        %v2356 = vpack.c.b16 %v2324, %v2323
        %v2357 = vpack.c.b16 %v2326, %v2325
        %v2358 = vpack.c.b16 %v2328, %v2327
        %v2359 = vpack.c.b16 %v2330, %v2329
        %v2360 = vpack.c.b16 %v2332, %v2331
        %v2361 = vpack.c.b16 %v2334, %v2333
        %v2362 = vpack.c.b16 %v2336, %v2335
        %v2363 = vpack.c.b16 %v2338, %v2337
        %v2364 = vpack.c.b16 %v2340, %v2339
        %2389 = vmatpush.bf16.msra.mxu0 %v2348
        %2390 = vmatpush.bf16.msra.mxu0 %v2347
        %2391 = vmatpush.bf16.msra.mxu0 %v2346
        %2392 = vmatpush.bf16.msra.mxu0 %v2345
        %2393 = vmatpush.bf16.msra.mxu0 %v2344
        %2394 = vmatpush.bf16.msra.mxu0 %v2343
        %2395 = vmatpush.bf16.msra.mxu0 %v2342
        %2396 = vmatpush.bf16.msra.mxu0 %v2341
        %2397 = vmatmul.bf16.gmra.mxu0 %v2034
        %v2398 = vpop.f32.mrf.mxu0
        %v2399 = vadd.f32 %v1934, %v2398
        %v2400 = vpop.f32.mrf.mxu0
        %v2401 = vadd.f32 %v1936, %v2400
        %2402 = vmatmul.bf16.gmra.mxu0 %v2047
        %v2403 = vpop.f32.mrf.mxu0
        %v2404 = vadd.f32 %v1939, %v2403
        %v2405 = vpop.f32.mrf.mxu0
        %v2406 = vadd.f32 %v1941, %v2405
        %2407 = vmatmul.bf16.gmra.mxu0 %v2058
        %v2408 = vpop.f32.mrf.mxu0
        %v2409 = vadd.f32 %v1944, %v2408
        %v2410 = vpop.f32.mrf.mxu0
        %v2411 = vadd.f32 %v1946, %v2410
        %2412 = vmatmul.bf16.gmra.mxu0 %v2069
        %v2413 = vpop.f32.mrf.mxu0
        %v2414 = vadd.f32 %v1949, %v2413
        %v2415 = vpop.f32.mrf.mxu0
        %v2416 = vadd.f32 %v1951, %v2415
        %2417 = vmatmul.bf16.gmra.mxu0 %v2080
        %v2418 = vpop.f32.mrf.mxu0
        %v2419 = vadd.f32 %v1954, %v2418
        %v2420 = vpop.f32.mrf.mxu0
        %v2421 = vadd.f32 %v1956, %v2420
        %2422 = vmatmul.bf16.gmra.mxu0 %v2091
        %v2423 = vpop.f32.mrf.mxu0
        %v2424 = vadd.f32 %v1959, %v2423
        %v2425 = vpop.f32.mrf.mxu0
        %v2426 = vadd.f32 %v1961, %v2425
        %2427 = vmatmul.bf16.gmra.mxu0 %v2102
        %v2428 = vpop.f32.mrf.mxu0
        %v2429 = vadd.f32 %v1964, %v2428
        %v2430 = vpop.f32.mrf.mxu0
        %v2431 = vadd.f32 %v1966, %v2430
        %2432 = vmatmul.bf16.gmra.mxu0 %v2113
        %v2433 = vpop.f32.mrf.mxu0
        %v2434 = vadd.f32 %v1969, %v2433
        %v2435 = vpop.f32.mrf.mxu0
        %v2436 = vadd.f32 %v1971, %v2435
        %2437 = vmatmul.bf16.gmra.mxu0 %v2124
        %v2438 = vpop.f32.mrf.mxu0
        %v2439 = vadd.f32 %v1974, %v2438
        %v2440 = vpop.f32.mrf.mxu0
        %v2441 = vadd.f32 %v1976, %v2440
        %2442 = vmatmul.bf16.gmra.mxu0 %v2135
        %v2443 = vpop.f32.mrf.mxu0
        %v2444 = vadd.f32 %v1979, %v2443
        %v2445 = vpop.f32.mrf.mxu0
        %v2446 = vadd.f32 %v1981, %v2445
        %2447 = vmatmul.bf16.gmra.mxu0 %v2146
        %v2448 = vpop.f32.mrf.mxu0
        %v2449 = vadd.f32 %v1984, %v2448
        %v2450 = vpop.f32.mrf.mxu0
        %v2451 = vadd.f32 %v1986, %v2450
        %2452 = vmatmul.bf16.gmra.mxu0 %v2157
        %v2453 = vpop.f32.mrf.mxu0
        %v2454 = vadd.f32 %v1989, %v2453
        %v2455 = vpop.f32.mrf.mxu0
        %v2456 = vadd.f32 %v1991, %v2455
        %2457 = vmatmul.bf16.gmra.mxu0 %v2168
        %v2458 = vpop.f32.mrf.mxu0
        %v2459 = vadd.f32 %v1994, %v2458
        %v2460 = vpop.f32.mrf.mxu0
        %v2461 = vadd.f32 %v1996, %v2460
        %2462 = vmatmul.bf16.gmra.mxu0 %v2179
        %v2463 = vpop.f32.mrf.mxu0
        %v2464 = vadd.f32 %v1999, %v2463
        %v2465 = vpop.f32.mrf.mxu0
        %v2466 = vadd.f32 %v2001, %v2465
        %2467 = vmatmul.bf16.gmra.mxu0 %v2190
        %v2468 = vpop.f32.mrf.mxu0
        %v2469 = vadd.f32 %v2004, %v2468
        %v2470 = vpop.f32.mrf.mxu0
        %v2471 = vadd.f32 %v2006, %v2470
        %2472 = vmatmul.bf16.gmra.mxu0 %v2194
        %v2473 = vpop.f32.mrf.mxu0
        %v2474 = vadd.f32 %v2009, %v2473
        %v2475 = vpop.f32.mrf.mxu0
        %2476 = vdwg.mxu0
        %2477 = vmatpush.bf16.msra.mxu0 %v2356
        %2478 = vmatpush.bf16.msra.mxu0 %v2355
        %2479 = vmatpush.bf16.msra.mxu0 %v2354
        %2480 = vmatpush.bf16.msra.mxu0 %v2353
        %2481 = vmatpush.bf16.msra.mxu0 %v2352
        %2482 = vmatpush.bf16.msra.mxu0 %v2351
        %2483 = vmatpush.bf16.msra.mxu0 %v2350
        %2484 = vmatpush.bf16.msra.mxu0 %v2349
        %2485 = vmatmul.bf16.gmra.mxu0 %v2035
        %v2486 = vpop.f32.mrf.mxu0
        %v2487 = vadd.f32 %v2399, %v2486
        %v2488 = vpop.f32.mrf.mxu0
        %v2489 = vadd.f32 %v2401, %v2488
        %2490 = vmatmul.bf16.gmra.mxu0 %v2048
        %v2491 = vpop.f32.mrf.mxu0
        %v2492 = vadd.f32 %v2404, %v2491
        %v2493 = vpop.f32.mrf.mxu0
        %v2494 = vadd.f32 %v2406, %v2493
        %2495 = vmatmul.bf16.gmra.mxu0 %v2059
        %v2496 = vpop.f32.mrf.mxu0
        %v2497 = vadd.f32 %v2409, %v2496
        %v2498 = vpop.f32.mrf.mxu0
        %v2499 = vadd.f32 %v2411, %v2498
        %2500 = vmatmul.bf16.gmra.mxu0 %v2070
        %v2501 = vpop.f32.mrf.mxu0
        %v2502 = vadd.f32 %v2414, %v2501
        %v2503 = vpop.f32.mrf.mxu0
        %v2504 = vadd.f32 %v2416, %v2503
        %2505 = vmatmul.bf16.gmra.mxu0 %v2081
        %v2506 = vpop.f32.mrf.mxu0
        %v2507 = vadd.f32 %v2419, %v2506
        %v2508 = vpop.f32.mrf.mxu0
        %v2509 = vadd.f32 %v2421, %v2508
        %2510 = vmatmul.bf16.gmra.mxu0 %v2092
        %v2511 = vpop.f32.mrf.mxu0
        %v2512 = vadd.f32 %v2424, %v2511
        %v2513 = vpop.f32.mrf.mxu0
        %v2514 = vadd.f32 %v2426, %v2513
        %2515 = vmatmul.bf16.gmra.mxu0 %v2103
        %v2516 = vpop.f32.mrf.mxu0
        %v2517 = vadd.f32 %v2429, %v2516
        %v2518 = vpop.f32.mrf.mxu0
        %v2519 = vadd.f32 %v2431, %v2518
        %2520 = vmatmul.bf16.gmra.mxu0 %v2114
        %v2521 = vpop.f32.mrf.mxu0
        %v2522 = vadd.f32 %v2434, %v2521
        %v2523 = vpop.f32.mrf.mxu0
        %v2524 = vadd.f32 %v2436, %v2523
        %2525 = vmatmul.bf16.gmra.mxu0 %v2125
        %v2526 = vpop.f32.mrf.mxu0
        %v2527 = vadd.f32 %v2439, %v2526
        %v2528 = vpop.f32.mrf.mxu0
        %v2529 = vadd.f32 %v2441, %v2528
        %2530 = vmatmul.bf16.gmra.mxu0 %v2136
        %v2531 = vpop.f32.mrf.mxu0
        %v2532 = vadd.f32 %v2444, %v2531
        %v2533 = vpop.f32.mrf.mxu0
        %v2534 = vadd.f32 %v2446, %v2533
        %2535 = vmatmul.bf16.gmra.mxu0 %v2147
        %v2536 = vpop.f32.mrf.mxu0
        %v2537 = vadd.f32 %v2449, %v2536
        %v2538 = vpop.f32.mrf.mxu0
        %v2539 = vadd.f32 %v2451, %v2538
        %2540 = vmatmul.bf16.gmra.mxu0 %v2158
        %v2541 = vpop.f32.mrf.mxu0
        %v2542 = vadd.f32 %v2454, %v2541
        %v2543 = vpop.f32.mrf.mxu0
        %v2544 = vadd.f32 %v2456, %v2543
        %2545 = vmatmul.bf16.gmra.mxu0 %v2169
        %v2546 = vpop.f32.mrf.mxu0
        %v2547 = vadd.f32 %v2459, %v2546
        %v2548 = vpop.f32.mrf.mxu0
        %v2549 = vadd.f32 %v2461, %v2548
        %2550 = vmatmul.bf16.gmra.mxu0 %v2180
        %v2551 = vpop.f32.mrf.mxu0
        %v2552 = vadd.f32 %v2464, %v2551
        %v2553 = vpop.f32.mrf.mxu0
        %v2554 = vadd.f32 %v2466, %v2553
        %2555 = vmatmul.bf16.gmra.mxu0 %v2191
        %v2556 = vpop.f32.mrf.mxu0
        %v2557 = vadd.f32 %v2469, %v2556
        %v2558 = vpop.f32.mrf.mxu0
        %v2559 = vadd.f32 %v2471, %v2558
        %2560 = vmatmul.bf16.gmra.mxu0 %v2195
        %v2561 = vpop.f32.mrf.mxu0
        %v2562 = vadd.f32 %v2474, %v2561
        %v2563 = vpop.f32.mrf.mxu0
        %2564 = vdwg.mxu0
        %2565 = vmatpush.bf16.msra.mxu0 %v2364
        %2566 = vmatpush.bf16.msra.mxu0 %v2363
        %2567 = vmatpush.bf16.msra.mxu0 %v2362
        %2568 = vmatpush.bf16.msra.mxu0 %v2361
        %2569 = vmatpush.bf16.msra.mxu0 %v2360
        %2570 = vmatpush.bf16.msra.mxu0 %v2359
        %2571 = vmatpush.bf16.msra.mxu0 %v2358
        %2572 = vmatpush.bf16.msra.mxu0 %v2357
        %2573 = vmatmul.bf16.gmra.mxu0 %v2036
        %v2574 = vpop.f32.mrf.mxu0
        %v2575 = vadd.f32 %v2487, %v2574
        %v2576 = vpop.f32.mrf.mxu0
        %v2577 = vadd.f32 %v2489, %v2576
        %2578 = vmatmul.bf16.gmra.mxu0 %v2049
        %v2579 = vpop.f32.mrf.mxu0
        %v2580 = vadd.f32 %v2492, %v2579
        %v2581 = vpop.f32.mrf.mxu0
        %v2582 = vadd.f32 %v2494, %v2581
        %2583 = vmatmul.bf16.gmra.mxu0 %v2060
        %v2584 = vpop.f32.mrf.mxu0
        %v2585 = vadd.f32 %v2497, %v2584
        %v2586 = vpop.f32.mrf.mxu0
        %v2587 = vadd.f32 %v2499, %v2586
        %2588 = vmatmul.bf16.gmra.mxu0 %v2071
        %v2589 = vpop.f32.mrf.mxu0
        %v2590 = vadd.f32 %v2502, %v2589
        %v2591 = vpop.f32.mrf.mxu0
        %v2592 = vadd.f32 %v2504, %v2591
        %2593 = vmatmul.bf16.gmra.mxu0 %v2082
        %v2594 = vpop.f32.mrf.mxu0
        %v2595 = vadd.f32 %v2507, %v2594
        %v2596 = vpop.f32.mrf.mxu0
        %v2597 = vadd.f32 %v2509, %v2596
        %2598 = vmatmul.bf16.gmra.mxu0 %v2093
        %v2599 = vpop.f32.mrf.mxu0
        %v2600 = vadd.f32 %v2512, %v2599
        %v2601 = vpop.f32.mrf.mxu0
        %v2602 = vadd.f32 %v2514, %v2601
        %2603 = vmatmul.bf16.gmra.mxu0 %v2104
        %v2604 = vpop.f32.mrf.mxu0
        %v2605 = vadd.f32 %v2517, %v2604
        %v2606 = vpop.f32.mrf.mxu0
        %v2607 = vadd.f32 %v2519, %v2606
        %2608 = vmatmul.bf16.gmra.mxu0 %v2115
        %v2609 = vpop.f32.mrf.mxu0
        %v2610 = vadd.f32 %v2522, %v2609
        %v2611 = vpop.f32.mrf.mxu0
        %v2612 = vadd.f32 %v2524, %v2611
        %2613 = vmatmul.bf16.gmra.mxu0 %v2126
        %v2614 = vpop.f32.mrf.mxu0
        %v2615 = vadd.f32 %v2527, %v2614
        %v2616 = vpop.f32.mrf.mxu0
        %v2617 = vadd.f32 %v2529, %v2616
        %2618 = vmatmul.bf16.gmra.mxu0 %v2137
        %v2619 = vpop.f32.mrf.mxu0
        %v2620 = vadd.f32 %v2532, %v2619
        %v2621 = vpop.f32.mrf.mxu0
        %v2622 = vadd.f32 %v2534, %v2621
        %2623 = vmatmul.bf16.gmra.mxu0 %v2148
        %v2624 = vpop.f32.mrf.mxu0
        %v2625 = vadd.f32 %v2537, %v2624
        %v2626 = vpop.f32.mrf.mxu0
        %v2627 = vadd.f32 %v2539, %v2626
        %2628 = vmatmul.bf16.gmra.mxu0 %v2159
        %v2629 = vpop.f32.mrf.mxu0
        %v2630 = vadd.f32 %v2542, %v2629
        %v2631 = vpop.f32.mrf.mxu0
        %v2632 = vadd.f32 %v2544, %v2631
        %2633 = vmatmul.bf16.gmra.mxu0 %v2170
        %v2634 = vpop.f32.mrf.mxu0
        %v2635 = vadd.f32 %v2547, %v2634
        %v2636 = vpop.f32.mrf.mxu0
        %v2637 = vadd.f32 %v2549, %v2636
        %2638 = vmatmul.bf16.gmra.mxu0 %v2181
        %v2639 = vpop.f32.mrf.mxu0
        %v2640 = vadd.f32 %v2552, %v2639
        %v2641 = vpop.f32.mrf.mxu0
        %v2642 = vadd.f32 %v2554, %v2641
        %2643 = vmatmul.bf16.gmra.mxu0 %v2192
        %v2644 = vpop.f32.mrf.mxu0
        %v2645 = vadd.f32 %v2557, %v2644
        %v2646 = vpop.f32.mrf.mxu0
        %v2647 = vadd.f32 %v2559, %v2646
        %2648 = vmatmul.bf16.gmra.mxu0 %v2196
        %v2649 = vpop.f32.mrf.mxu0
        %v2650 = vadd.f32 %v2562, %v2649
        %v2651 = vpop.f32.mrf.mxu0
        %2652 = vdwg.mxu0
        %v2656 = vunpack.c.l.b16 %v275
        %v2657 = vunpack.c.l.b16 %v276
        %v2658 = vunpack.c.l.b16 %v277
        %v2659 = vpack.c.b16 %v2657, %v2656
        %v2660 = vpack.c.b16 %v2658, %v2658
        %v2662 = vshrl.u32 %v2659, 16
        %v2664 = vshll.u32 %v2659, 16
        %v2666 = vrot.slane %v2664, 1
        %v2667 = vor.u32 %v2662, %v2666
        %v2669 = vshll.u32 %v2660, 16
        %v2671 = vrot.slane %v2669, 1
        %v2672 = vsel %vm366, %v2667, %v2671
        %v2673 = vshrl.u32 %v2660, 16
        %v2675 = vor.u32 %v2673, %v2671
        %v2676 = vrot.slane %v2659, 1
        %v2677 = vrot.slane %v2660, 1
        %v2678 = vsel %vm532, %v2676, %v2677
        %v2679 = vrot.slane %v2672, 7
        %v2680 = vrot.slane %v2678, 6
        %v2681 = vrot.slane %v2675, 7
        %v2682 = vrot.slane %v2677, 6
        %v2684 = vsel %vm610, %v2659, %v2679
        %v2686 = vsel %vm613, %v2684, %v2680
        %v2687 = vsel %vm616, %v2659, %v2679
        %v2688 = vsel %vm618, %v2687, %v2680
        %v2690 = vrot.slane %v2688, 1
        %v2691 = vsel %vm622, %v2659, %v2679
        %v2692 = vsel %vm624, %v2691, %v2680
        %v2694 = vrot.slane %v2692, 2
        %v2695 = vsel %vm628, %v2659, %v2679
        %v2696 = vsel %vm630, %v2695, %v2680
        %v2698 = vrot.slane %v2696, 3
        %v2699 = vsel %vm634, %v2659, %v2679
        %v2700 = vsel %vm636, %v2699, %v2680
        %v2702 = vrot.slane %v2700, 4
        %v2703 = vsel %vm640, %v2659, %v2679
        %v2704 = vsel %vm642, %v2703, %v2680
        %v2706 = vrot.slane %v2704, 5
        %v2707 = vsel %vm646, %v2659, %v2679
        %v2708 = vsel %vm648, %v2680, %v2707
        %v2710 = vrot.slane %v2708, 6
        %v2711 = vsel %vm652, %v2679, %v2659
        %v2712 = vsel %vm654, %v2680, %v2711
        %v2714 = vrot.slane %v2712, 7
        %v2716 = vsel %vm610, %v2660, %v2681
        %v2718 = vsel %vm613, %v2716, %v2682
        %v2719 = vsel %vm616, %v2660, %v2681
        %v2720 = vsel %vm618, %v2719, %v2682
        %v2722 = vrot.slane %v2720, 1
        %v2723 = vsel %vm622, %v2660, %v2681
        %v2724 = vsel %vm624, %v2723, %v2682
        %v2726 = vrot.slane %v2724, 2
        %s2727 = scalar_lea.vmem [#allocation4], 384
        %v2728 = vld [vmem:[%s2727] sm:$0xf]
        %v2729 = vld [vmem:[%s2727 + $0x4] sm:$0xf]
        %v2730 = vld [vmem:[%s2727 + $0x8] sm:$0xf]
        %v2731 = vld [vmem:[%s2727 + $0xc] sm:$0xf]
        %v2732 = vld [vmem:[%s2727 + $0x10] sm:$0xf]
        %v2733 = vld [vmem:[%s2727 + $0x14] sm:$0xf]
        %v2734 = vld [vmem:[%s2727 + $0x18] sm:$0xf]
        %v2735 = vld [vmem:[%s2727 + $0x1c] sm:$0xf]
        %v2736 = vld [vmem:[%s2727 + $0x20] sm:$0xf]
        %v2737 = vld [vmem:[%s2727 + $0x24] sm:$0xf]
        %v2738 = vld [vmem:[%s2727 + $0x28] sm:$0xf]
        %v2739 = vld [vmem:[%s2727 + $0x2c] sm:$0xf]
        %v2740 = vld [vmem:[%s2727 + $0x30] sm:$0xf]
        %v2741 = vld [vmem:[%s2727 + $0x34] sm:$0xf]
        %v2742 = vld [vmem:[%s2727 + $0x38] sm:$0xf]
        %v2743 = vld [vmem:[%s2727 + $0x3c] sm:$0xf]
        %v2744 = vld [vmem:[%s2727 + $0x40] sm:$0xf]
        %v2745 = vld [vmem:[%s2727 + $0x44] sm:$0xf]
        %v2746 = vld [vmem:[%s2727 + $0x48] sm:$0xf]
        %v2747 = vld [vmem:[%s2727 + $0x4c] sm:$0xf]
        %v2748 = vld [vmem:[%s2727 + $0x50] sm:$0xf]
        %v2749 = vld [vmem:[%s2727 + $0x54] sm:$0xf]
        %v2750 = vld [vmem:[%s2727 + $0x58] sm:$0xf]
        %v2751 = vld [vmem:[%s2727 + $0x5c] sm:$0xf]
        %v2752 = vld [vmem:[%s2727 + $0x60] sm:$0xf]
        %v2753 = vld [vmem:[%s2727 + $0x64] sm:$0xf]
        %v2754 = vld [vmem:[%s2727 + $0x68] sm:$0xf]
        %v2755 = vld [vmem:[%s2727 + $0x6c] sm:$0xf]
        %v2756 = vld [vmem:[%s2727 + $0x70] sm:$0xf]
        %v2757 = vld [vmem:[%s2727 + $0x74] sm:$0xf]
        %v2758 = vld [vmem:[%s2727 + $0x78] sm:$0xf]
        %v2759 = vld [vmem:[%s2727 + $0x7c] sm:$0xf]
        %v2760 = vld [vmem:[%s2727 + $0x80] sm:$0xf]
        %v2761 = vld [vmem:[%s2727 + $0x84] sm:$0xf]
        %v2762 = vld [vmem:[%s2727 + $0x88] sm:$0xf]
        %v2763 = vld [vmem:[%s2727 + $0x8c] sm:$0xf]
        %v2764 = vld [vmem:[%s2727 + $0x90] sm:$0xf]
        %v2765 = vld [vmem:[%s2727 + $0x94] sm:$0xf]
        %v2766 = vld [vmem:[%s2727 + $0x98] sm:$0xf]
        %v2767 = vld [vmem:[%s2727 + $0x9c] sm:$0xf]
        %v2768 = vld [vmem:[%s2727 + $0xa0] sm:$0xf]
        %v2769 = vld [vmem:[%s2727 + $0xa4] sm:$0xf]
        %v2770 = vld [vmem:[%s2727 + $0xa8] sm:$0xf]
        %v2771 = vld [vmem:[%s2727 + $0xac] sm:$0xf]
        %v2772 = vld [vmem:[%s2727 + $0xb0] sm:$0xf]
        %v2773 = vld [vmem:[%s2727 + $0xb4] sm:$0xf]
        %v2774 = vld [vmem:[%s2727 + $0xb8] sm:$0xf]
        %v2775 = vld [vmem:[%s2727 + $0xbc] sm:$0xf]
        %2776 = vst [vmem:[#allocation1] ss:$9 sm:$0xff] %v717
        %s2777 = scalar_lea.vmem [#allocation1], 1
        %2778 = vst [vmem:[%s2777] ss:$9 sm:$0xff] %v721
        %s2779 = scalar_lea.vmem [#allocation1], 2
        %2780 = vst [vmem:[%s2779] ss:$9 sm:$0xff] %v725
        %s2781 = scalar_lea.vmem [#allocation1], 3
        %2782 = vst [vmem:[%s2781] ss:$9 sm:$0xff] %v729
        %s2783 = scalar_lea.vmem [#allocation1], 4
        %2784 = vst [vmem:[%s2783] ss:$9 sm:$0xff] %v733
        %s2785 = scalar_lea.vmem [#allocation1], 5
        %2786 = vst [vmem:[%s2785] ss:$9 sm:$0xff] %v737
        %s2787 = scalar_lea.vmem [#allocation1], 6
        %2788 = vst [vmem:[%s2787] ss:$9 sm:$0xff] %v741
        %s2789 = scalar_lea.vmem [#allocation1], 7
        %2790 = vst [vmem:[%s2789] ss:$9 sm:$0xff] %v745
        %v2791 = vld [vmem:[#allocation1] sm:$0xff]
        %v2792 = vld [vmem:[#allocation1 + $0x9] sm:$0xff]
        %v2793 = vld [vmem:[#allocation1 + $0x12] sm:$0xff]
        %2794 = vst [vmem:[#allocation1] ss:$9 sm:$0xff] %v749
        %2795 = vst [vmem:[%s2777] ss:$9 sm:$0xff] %v753
        %2796 = vst [vmem:[%s2779] ss:$9 sm:$0xff] %v757
        %2797 = vst [vmem:[%s2781] ss:$9 sm:$0xff] %v761
        %2798 = vst [vmem:[%s2783] ss:$9 sm:$0xff] %v765
        %2799 = vst [vmem:[%s2785] ss:$9 sm:$0xff] %v769
        %2800 = vst [vmem:[%s2787] ss:$9 sm:$0xff] %v773
        %2801 = vst [vmem:[%s2789] ss:$9 sm:$0xff] %v777
        %v2802 = vld [vmem:[#allocation1] sm:$0xff]
        %v2803 = vld [vmem:[#allocation1 + $0x9] sm:$0xff]
        %v2804 = vld [vmem:[#allocation1 + $0x12] sm:$0xff]
        %2805 = vst [vmem:[#allocation1] ss:$9 sm:$0xff] %v781
        %2806 = vst [vmem:[%s2777] ss:$9 sm:$0xff] %v785
        %2807 = vst [vmem:[%s2779] ss:$9 sm:$0xff] %v789
        %2808 = vst [vmem:[%s2781] ss:$9 sm:$0xff] %v793
        %2809 = vst [vmem:[%s2783] ss:$9 sm:$0xff] %v797
        %2810 = vst [vmem:[%s2785] ss:$9 sm:$0xff] %v801
        %2811 = vst [vmem:[%s2787] ss:$9 sm:$0xff] %v805
        %2812 = vst [vmem:[%s2789] ss:$9 sm:$0xff] %v809
        %v2813 = vld [vmem:[#allocation1] sm:$0xff]
        %v2814 = vld [vmem:[#allocation1 + $0x9] sm:$0xff]
        %v2815 = vld [vmem:[#allocation1 + $0x12] sm:$0xff]
        %2816 = vst [vmem:[#allocation1] ss:$9 sm:$0xff] %v813
        %2817 = vst [vmem:[%s2777] ss:$9 sm:$0xff] %v817
        %2818 = vst [vmem:[%s2779] ss:$9 sm:$0xff] %v821
        %2819 = vst [vmem:[%s2781] ss:$9 sm:$0xff] %v825
        %2820 = vst [vmem:[%s2783] ss:$9 sm:$0xff] %v829
        %2821 = vst [vmem:[%s2785] ss:$9 sm:$0xff] %v833
        %2822 = vst [vmem:[%s2787] ss:$9 sm:$0xff] %v837
        %2823 = vst [vmem:[%s2789] ss:$9 sm:$0xff] %v841
        %v2824 = vld [vmem:[#allocation1] sm:$0xff]
        %v2825 = vld [vmem:[#allocation1 + $0x9] sm:$0xff]
        %v2826 = vld [vmem:[#allocation1 + $0x12] sm:$0xff]
        %2827 = vst [vmem:[#allocation1] ss:$9 sm:$0xff] %v845
        %2828 = vst [vmem:[%s2777] ss:$9 sm:$0xff] %v849
        %2829 = vst [vmem:[%s2779] ss:$9 sm:$0xff] %v853
        %2830 = vst [vmem:[%s2781] ss:$9 sm:$0xff] %v857
        %2831 = vst [vmem:[%s2783] ss:$9 sm:$0xff] %v861
        %2832 = vst [vmem:[%s2785] ss:$9 sm:$0xff] %v865
        %2833 = vst [vmem:[%s2787] ss:$9 sm:$0xff] %v869
        %2834 = vst [vmem:[%s2789] ss:$9 sm:$0xff] %v873
        %v2835 = vld [vmem:[#allocation1] sm:$0xff]
        %v2836 = vld [vmem:[#allocation1 + $0x9] sm:$0xff]
        %v2837 = vld [vmem:[#allocation1 + $0x12] sm:$0xff]
        %2838 = vst [vmem:[#allocation1] ss:$9 sm:$0xff] %v877
        %2839 = vst [vmem:[%s2777] ss:$9 sm:$0xff] %v881
        %2840 = vst [vmem:[%s2779] ss:$9 sm:$0xff] %v885
        %2841 = vst [vmem:[%s2781] ss:$9 sm:$0xff] %v889
        %2842 = vst [vmem:[%s2783] ss:$9 sm:$0xff] %v893
        %2843 = vst [vmem:[%s2785] ss:$9 sm:$0xff] %v897
        %2844 = vst [vmem:[%s2787] ss:$9 sm:$0xff] %v901
        %2845 = vst [vmem:[%s2789] ss:$9 sm:$0xff] %v905
        %v2846 = vld [vmem:[#allocation1] sm:$0xff]
        %v2847 = vld [vmem:[#allocation1 + $0x9] sm:$0xff]
        %v2848 = vld [vmem:[#allocation1 + $0x12] sm:$0xff]
        %2849 = vst [vmem:[#allocation1] ss:$9 sm:$0xff] %v909
        %2850 = vst [vmem:[%s2777] ss:$9 sm:$0xff] %v913
        %2851 = vst [vmem:[%s2779] ss:$9 sm:$0xff] %v917
        %2852 = vst [vmem:[%s2781] ss:$9 sm:$0xff] %v921
        %2853 = vst [vmem:[%s2783] ss:$9 sm:$0xff] %v925
        %2854 = vst [vmem:[%s2785] ss:$9 sm:$0xff] %v929
        %2855 = vst [vmem:[%s2787] ss:$9 sm:$0xff] %v933
        %2856 = vst [vmem:[%s2789] ss:$9 sm:$0xff] %v937
        %v2857 = vld [vmem:[#allocation1] sm:$0xff]
        %v2858 = vld [vmem:[#allocation1 + $0x9] sm:$0xff]
        %v2859 = vld [vmem:[#allocation1 + $0x12] sm:$0xff]
        %2860 = vst [vmem:[#allocation1] ss:$9 sm:$0xff] %v941
        %2861 = vst [vmem:[%s2777] ss:$9 sm:$0xff] %v945
        %2862 = vst [vmem:[%s2779] ss:$9 sm:$0xff] %v949
        %2863 = vst [vmem:[%s2781] ss:$9 sm:$0xff] %v953
        %2864 = vst [vmem:[%s2783] ss:$9 sm:$0xff] %v957
        %2865 = vst [vmem:[%s2785] ss:$9 sm:$0xff] %v961
        %2866 = vst [vmem:[%s2787] ss:$9 sm:$0xff] %v965
        %2867 = vst [vmem:[%s2789] ss:$9 sm:$0xff] %v969
        %v2868 = vld [vmem:[#allocation1] sm:$0xff]
        %v2869 = vld [vmem:[#allocation1 + $0x9] sm:$0xff]
        %v2870 = vld [vmem:[#allocation1 + $0x12] sm:$0xff]
        %2871 = vst [vmem:[#allocation1] ss:$9 sm:$0xff] %v973
        %2872 = vst [vmem:[%s2777] ss:$9 sm:$0xff] %v977
        %2873 = vst [vmem:[%s2779] ss:$9 sm:$0xff] %v981
        %2874 = vst [vmem:[%s2781] ss:$9 sm:$0xff] %v985
        %2875 = vst [vmem:[%s2783] ss:$9 sm:$0xff] %v989
        %2876 = vst [vmem:[%s2785] ss:$9 sm:$0xff] %v993
        %2877 = vst [vmem:[%s2787] ss:$9 sm:$0xff] %v997
        %2878 = vst [vmem:[%s2789] ss:$9 sm:$0xff] %v1001
        %v2879 = vld [vmem:[#allocation1] sm:$0xff]
        %v2880 = vld [vmem:[#allocation1 + $0x9] sm:$0xff]
        %v2881 = vld [vmem:[#allocation1 + $0x12] sm:$0xff]
        %2882 = vst [vmem:[#allocation1] ss:$9 sm:$0xff] %v1005
        %2883 = vst [vmem:[%s2777] ss:$9 sm:$0xff] %v1009
        %2884 = vst [vmem:[%s2779] ss:$9 sm:$0xff] %v1013
        %2885 = vst [vmem:[%s2781] ss:$9 sm:$0xff] %v1017
        %2886 = vst [vmem:[%s2783] ss:$9 sm:$0xff] %v1021
        %2887 = vst [vmem:[%s2785] ss:$9 sm:$0xff] %v1025
        %2888 = vst [vmem:[%s2787] ss:$9 sm:$0xff] %v1029
        %2889 = vst [vmem:[%s2789] ss:$9 sm:$0xff] %v1033
        %v2890 = vld [vmem:[#allocation1] sm:$0xff]
        %v2891 = vld [vmem:[#allocation1 + $0x9] sm:$0xff]
        %v2892 = vld [vmem:[#allocation1 + $0x12] sm:$0xff]
        %2893 = vst [vmem:[#allocation1] ss:$9 sm:$0xff] %v1037
        %2894 = vst [vmem:[%s2777] ss:$9 sm:$0xff] %v1041
        %2895 = vst [vmem:[%s2779] ss:$9 sm:$0xff] %v1045
        %2896 = vst [vmem:[%s2781] ss:$9 sm:$0xff] %v1049
        %2897 = vst [vmem:[%s2783] ss:$9 sm:$0xff] %v1053
        %2898 = vst [vmem:[%s2785] ss:$9 sm:$0xff] %v1057
        %2899 = vst [vmem:[%s2787] ss:$9 sm:$0xff] %v1061
        %2900 = vst [vmem:[%s2789] ss:$9 sm:$0xff] %v1065
        %v2901 = vld [vmem:[#allocation1] sm:$0xff]
        %v2902 = vld [vmem:[#allocation1 + $0x9] sm:$0xff]
        %v2903 = vld [vmem:[#allocation1 + $0x12] sm:$0xff]
        %2904 = vst [vmem:[#allocation1] ss:$9 sm:$0xff] %v1069
        %2905 = vst [vmem:[%s2777] ss:$9 sm:$0xff] %v1073
        %2906 = vst [vmem:[%s2779] ss:$9 sm:$0xff] %v1077
        %2907 = vst [vmem:[%s2781] ss:$9 sm:$0xff] %v1081
        %2908 = vst [vmem:[%s2783] ss:$9 sm:$0xff] %v1085
        %2909 = vst [vmem:[%s2785] ss:$9 sm:$0xff] %v1089
        %2910 = vst [vmem:[%s2787] ss:$9 sm:$0xff] %v1093
        %2911 = vst [vmem:[%s2789] ss:$9 sm:$0xff] %v1097
        %v2912 = vld [vmem:[#allocation1] sm:$0xff]
        %v2913 = vld [vmem:[#allocation1 + $0x9] sm:$0xff]
        %v2914 = vld [vmem:[#allocation1 + $0x12] sm:$0xff]
        %2915 = vst [vmem:[#allocation1] ss:$9 sm:$0xff] %v1101
        %2916 = vst [vmem:[%s2777] ss:$9 sm:$0xff] %v1105
        %2917 = vst [vmem:[%s2779] ss:$9 sm:$0xff] %v1109
        %2918 = vst [vmem:[%s2781] ss:$9 sm:$0xff] %v1191
        %2919 = vst [vmem:[%s2783] ss:$9 sm:$0xff] %v1195
        %2920 = vst [vmem:[%s2785] ss:$9 sm:$0xff] %v1199
        %2921 = vst [vmem:[%s2787] ss:$9 sm:$0xff] %v1203
        %2922 = vst [vmem:[%s2789] ss:$9 sm:$0xff] %v1207
        %v2923 = vld [vmem:[#allocation1] sm:$0xff]
        %v2924 = vld [vmem:[#allocation1 + $0x9] sm:$0xff]
        %v2925 = vld [vmem:[#allocation1 + $0x12] sm:$0xff]
        %2926 = vst [vmem:[#allocation1] ss:$9 sm:$0xff] %v1211
        %2927 = vst [vmem:[%s2777] ss:$9 sm:$0xff] %v1215
        %2928 = vst [vmem:[%s2779] ss:$9 sm:$0xff] %v1219
        %2929 = vst [vmem:[%s2781] ss:$9 sm:$0xff] %v1223
        %2930 = vst [vmem:[%s2783] ss:$9 sm:$0xff] %v1227
        %2931 = vst [vmem:[%s2785] ss:$9 sm:$0xff] %v1231
        %2932 = vst [vmem:[%s2787] ss:$9 sm:$0xff] %v2686
        %2934 = vst [vmem:[%s2789] ss:$9 sm:$0xff] %v2690
        %v2935 = vld [vmem:[#allocation1] sm:$0xff]
        %v2936 = vld [vmem:[#allocation1 + $0x9] sm:$0xff]
        %v2937 = vld [vmem:[#allocation1 + $0x12] sm:$0xff]
        %2939 = vst [vmem:[#allocation1] ss:$9 sm:$0xff] %v2694
        %2941 = vst [vmem:[%s2777] ss:$9 sm:$0xff] %v2698
        %2943 = vst [vmem:[%s2779] ss:$9 sm:$0xff] %v2702
        %2945 = vst [vmem:[%s2781] ss:$9 sm:$0xff] %v2706
        %2947 = vst [vmem:[%s2783] ss:$9 sm:$0xff] %v2710
        %2949 = vst [vmem:[%s2785] ss:$9 sm:$0xff] %v2714
        %2950 = vst [vmem:[%s2787] ss:$9 sm:$0xff] %v2718
        %2952 = vst [vmem:[%s2789] ss:$9 sm:$0xff] %v2722
        %v2953 = vld [vmem:[#allocation1] sm:$0xff]
        %v2954 = vld [vmem:[#allocation1 + $0x9] sm:$0xff]
        %v2955 = vld [vmem:[#allocation1 + $0x12] sm:$0xff]
        %2957 = vst [vmem:[#allocation1] ss:$9 sm:$0xff] %v2726
        %v2958 = vld [vmem:[#allocation1] sm:$0xff]
        %v2959 = vld [vmem:[#allocation1 + $0x9] sm:$0xff]
        %v2960 = vld [vmem:[#allocation1 + $0x12] sm:$0xff]
        %v3057 = vunpack.c.l.b16 %v2728
        %v3058 = vunpack.c.l.b16 %v2729
        %v3059 = vunpack.c.l.b16 %v2730
        %v3060 = vunpack.c.l.b16 %v2731
        %v3061 = vunpack.c.l.b16 %v2732
        %v3062 = vunpack.c.l.b16 %v2733
        %v3063 = vunpack.c.l.b16 %v2734
        %v3064 = vunpack.c.l.b16 %v2735
        %v3065 = vunpack.c.l.b16 %v2736
        %v3066 = vunpack.c.l.b16 %v2737
        %v3067 = vunpack.c.l.b16 %v2738
        %v3068 = vunpack.c.l.b16 %v2739
        %v3069 = vunpack.c.l.b16 %v2740
        %v3070 = vunpack.c.l.b16 %v2741
        %v3071 = vunpack.c.l.b16 %v2742
        %v3072 = vunpack.c.l.b16 %v2743
        %v3073 = vunpack.c.l.b16 %v2744
        %v3074 = vunpack.c.l.b16 %v2745
        %v3075 = vunpack.c.l.b16 %v2746
        %v3076 = vunpack.c.l.b16 %v2747
        %v3077 = vunpack.c.l.b16 %v2748
        %v3078 = vunpack.c.l.b16 %v2749
        %v3079 = vunpack.c.l.b16 %v2750
        %v3080 = vunpack.c.l.b16 %v2751
        %v3081 = vunpack.c.l.b16 %v2752
        %v3082 = vunpack.c.l.b16 %v2753
        %v3083 = vunpack.c.l.b16 %v2754
        %v3084 = vunpack.c.l.b16 %v2755
        %v3085 = vunpack.c.l.b16 %v2756
        %v3086 = vunpack.c.l.b16 %v2757
        %v3087 = vunpack.c.l.b16 %v2758
        %v3088 = vunpack.c.l.b16 %v2759
        %v3089 = vunpack.c.l.b16 %v2760
        %v3090 = vunpack.c.l.b16 %v2761
        %v3091 = vunpack.c.l.b16 %v2762
        %v3092 = vunpack.c.l.b16 %v2763
        %v3093 = vunpack.c.l.b16 %v2764
        %v3094 = vunpack.c.l.b16 %v2765
        %v3095 = vunpack.c.l.b16 %v2766
        %v3096 = vunpack.c.l.b16 %v2767
        %v3097 = vunpack.c.l.b16 %v2768
        %v3098 = vunpack.c.l.b16 %v2769
        %v3099 = vunpack.c.l.b16 %v2770
        %v3100 = vunpack.c.l.b16 %v2771
        %v3101 = vunpack.c.l.b16 %v2772
        %v3102 = vunpack.c.l.b16 %v2773
        %v3103 = vunpack.c.l.b16 %v2774
        %v3104 = vunpack.c.l.b16 %v2775
        %v3105 = vpack.c.b16 %v3058, %v3057
        %v3106 = vpack.c.b16 %v3060, %v3059
        %v3107 = vpack.c.b16 %v3062, %v3061
        %v3108 = vpack.c.b16 %v3064, %v3063
        %v3109 = vpack.c.b16 %v3066, %v3065
        %v3110 = vpack.c.b16 %v3068, %v3067
        %v3111 = vpack.c.b16 %v3070, %v3069
        %v3112 = vpack.c.b16 %v3072, %v3071
        %v3113 = vpack.c.b16 %v3074, %v3073
        %v3114 = vpack.c.b16 %v3076, %v3075
        %v3115 = vpack.c.b16 %v3078, %v3077
        %v3116 = vpack.c.b16 %v3080, %v3079
        %v3117 = vpack.c.b16 %v3082, %v3081
        %v3118 = vpack.c.b16 %v3084, %v3083
        %v3119 = vpack.c.b16 %v3086, %v3085
        %v3120 = vpack.c.b16 %v3088, %v3087
        %v3121 = vpack.c.b16 %v3090, %v3089
        %v3122 = vpack.c.b16 %v3092, %v3091
        %v3123 = vpack.c.b16 %v3094, %v3093
        %v3124 = vpack.c.b16 %v3096, %v3095
        %v3125 = vpack.c.b16 %v3098, %v3097
        %v3126 = vpack.c.b16 %v3100, %v3099
        %v3127 = vpack.c.b16 %v3102, %v3101
        %v3128 = vpack.c.b16 %v3104, %v3103
        %3153 = vmatpush.bf16.msra.mxu0 %v3112
        %3154 = vmatpush.bf16.msra.mxu0 %v3111
        %3155 = vmatpush.bf16.msra.mxu0 %v3110
        %3156 = vmatpush.bf16.msra.mxu0 %v3109
        %3157 = vmatpush.bf16.msra.mxu0 %v3108
        %3158 = vmatpush.bf16.msra.mxu0 %v3107
        %3159 = vmatpush.bf16.msra.mxu0 %v3106
        %3160 = vmatpush.bf16.msra.mxu0 %v3105
        %3161 = vmatmul.bf16.gmra.mxu0 %v2791
        %v3162 = vpop.f32.mrf.mxu0
        %v3163 = vadd.f32 0.0, %v3162
        %v3164 = vpop.f32.mrf.mxu0
        %v3165 = vadd.f32 0.0, %v3164
        %3166 = vmatmul.bf16.gmra.mxu0 %v2802
        %v3167 = vpop.f32.mrf.mxu0
        %v3168 = vadd.f32 0.0, %v3167
        %v3169 = vpop.f32.mrf.mxu0
        %v3170 = vadd.f32 0.0, %v3169
        %3171 = vmatmul.bf16.gmra.mxu0 %v2813
        %v3172 = vpop.f32.mrf.mxu0
        %v3173 = vadd.f32 0.0, %v3172
        %v3174 = vpop.f32.mrf.mxu0
        %v3175 = vadd.f32 0.0, %v3174
        %3176 = vmatmul.bf16.gmra.mxu0 %v2824
        %v3177 = vpop.f32.mrf.mxu0
        %v3178 = vadd.f32 0.0, %v3177
        %v3179 = vpop.f32.mrf.mxu0
        %v3180 = vadd.f32 0.0, %v3179
        %3181 = vmatmul.bf16.gmra.mxu0 %v2835
        %v3182 = vpop.f32.mrf.mxu0
        %v3183 = vadd.f32 0.0, %v3182
        %v3184 = vpop.f32.mrf.mxu0
        %v3185 = vadd.f32 0.0, %v3184
        %3186 = vmatmul.bf16.gmra.mxu0 %v2846
        %v3187 = vpop.f32.mrf.mxu0
        %v3188 = vadd.f32 0.0, %v3187
        %v3189 = vpop.f32.mrf.mxu0
        %v3190 = vadd.f32 0.0, %v3189
        %3191 = vmatmul.bf16.gmra.mxu0 %v2857
        %v3192 = vpop.f32.mrf.mxu0
        %v3193 = vadd.f32 0.0, %v3192
        %v3194 = vpop.f32.mrf.mxu0
        %v3195 = vadd.f32 0.0, %v3194
        %3196 = vmatmul.bf16.gmra.mxu0 %v2868
        %v3197 = vpop.f32.mrf.mxu0
        %v3198 = vadd.f32 0.0, %v3197
        %v3199 = vpop.f32.mrf.mxu0
        %v3200 = vadd.f32 0.0, %v3199
        %3201 = vmatmul.bf16.gmra.mxu0 %v2879
        %v3202 = vpop.f32.mrf.mxu0
        %v3203 = vadd.f32 0.0, %v3202
        %v3204 = vpop.f32.mrf.mxu0
        %v3205 = vadd.f32 0.0, %v3204
        %3206 = vmatmul.bf16.gmra.mxu0 %v2890
        %v3207 = vpop.f32.mrf.mxu0
        %v3208 = vadd.f32 0.0, %v3207
        %v3209 = vpop.f32.mrf.mxu0
        %v3210 = vadd.f32 0.0, %v3209
        %3211 = vmatmul.bf16.gmra.mxu0 %v2901
        %v3212 = vpop.f32.mrf.mxu0
        %v3213 = vadd.f32 0.0, %v3212
        %v3214 = vpop.f32.mrf.mxu0
        %v3215 = vadd.f32 0.0, %v3214
        %3216 = vmatmul.bf16.gmra.mxu0 %v2912
        %v3217 = vpop.f32.mrf.mxu0
        %v3218 = vadd.f32 0.0, %v3217
        %v3219 = vpop.f32.mrf.mxu0
        %v3220 = vadd.f32 0.0, %v3219
        %3221 = vmatmul.bf16.gmra.mxu0 %v2923
        %v3222 = vpop.f32.mrf.mxu0
        %v3223 = vadd.f32 0.0, %v3222
        %v3224 = vpop.f32.mrf.mxu0
        %v3225 = vadd.f32 0.0, %v3224
        %3226 = vmatmul.bf16.gmra.mxu0 %v2935
        %v3227 = vpop.f32.mrf.mxu0
        %v3228 = vadd.f32 0.0, %v3227
        %v3229 = vpop.f32.mrf.mxu0
        %v3230 = vadd.f32 0.0, %v3229
        %3231 = vmatmul.bf16.gmra.mxu0 %v2953
        %v3232 = vpop.f32.mrf.mxu0
        %v3233 = vadd.f32 0.0, %v3232
        %v3234 = vpop.f32.mrf.mxu0
        %v3235 = vadd.f32 0.0, %v3234
        %3236 = vmatmul.bf16.gmra.mxu0 %v2958
        %v3237 = vpop.f32.mrf.mxu0
        %v3238 = vadd.f32 0.0, %v3237
        %v3239 = vpop.f32.mrf.mxu0
        %3240 = vdwg.mxu0
        %3241 = vmatpush.bf16.msra.mxu0 %v3120
        %3242 = vmatpush.bf16.msra.mxu0 %v3119
        %3243 = vmatpush.bf16.msra.mxu0 %v3118
        %3244 = vmatpush.bf16.msra.mxu0 %v3117
        %3245 = vmatpush.bf16.msra.mxu0 %v3116
        %3246 = vmatpush.bf16.msra.mxu0 %v3115
        %3247 = vmatpush.bf16.msra.mxu0 %v3114
        %3248 = vmatpush.bf16.msra.mxu0 %v3113
        %3249 = vmatmul.bf16.gmra.mxu0 %v2792
        %v3250 = vpop.f32.mrf.mxu0
        %v3251 = vadd.f32 %v3163, %v3250
        %v3252 = vpop.f32.mrf.mxu0
        %v3253 = vadd.f32 %v3165, %v3252
        %3254 = vmatmul.bf16.gmra.mxu0 %v2803
        %v3255 = vpop.f32.mrf.mxu0
        %v3256 = vadd.f32 %v3168, %v3255
        %v3257 = vpop.f32.mrf.mxu0
        %v3258 = vadd.f32 %v3170, %v3257
        %3259 = vmatmul.bf16.gmra.mxu0 %v2814
        %v3260 = vpop.f32.mrf.mxu0
        %v3261 = vadd.f32 %v3173, %v3260
        %v3262 = vpop.f32.mrf.mxu0
        %v3263 = vadd.f32 %v3175, %v3262
        %3264 = vmatmul.bf16.gmra.mxu0 %v2825
        %v3265 = vpop.f32.mrf.mxu0
        %v3266 = vadd.f32 %v3178, %v3265
        %v3267 = vpop.f32.mrf.mxu0
        %v3268 = vadd.f32 %v3180, %v3267
        %3269 = vmatmul.bf16.gmra.mxu0 %v2836
        %v3270 = vpop.f32.mrf.mxu0
        %v3271 = vadd.f32 %v3183, %v3270
        %v3272 = vpop.f32.mrf.mxu0
        %v3273 = vadd.f32 %v3185, %v3272
        %3274 = vmatmul.bf16.gmra.mxu0 %v2847
        %v3275 = vpop.f32.mrf.mxu0
        %v3276 = vadd.f32 %v3188, %v3275
        %v3277 = vpop.f32.mrf.mxu0
        %v3278 = vadd.f32 %v3190, %v3277
        %3279 = vmatmul.bf16.gmra.mxu0 %v2858
        %v3280 = vpop.f32.mrf.mxu0
        %v3281 = vadd.f32 %v3193, %v3280
        %v3282 = vpop.f32.mrf.mxu0
        %v3283 = vadd.f32 %v3195, %v3282
        %3284 = vmatmul.bf16.gmra.mxu0 %v2869
        %v3285 = vpop.f32.mrf.mxu0
        %v3286 = vadd.f32 %v3198, %v3285
        %v3287 = vpop.f32.mrf.mxu0
        %v3288 = vadd.f32 %v3200, %v3287
        %3289 = vmatmul.bf16.gmra.mxu0 %v2880
        %v3290 = vpop.f32.mrf.mxu0
        %v3291 = vadd.f32 %v3203, %v3290
        %v3292 = vpop.f32.mrf.mxu0
        %v3293 = vadd.f32 %v3205, %v3292
        %3294 = vmatmul.bf16.gmra.mxu0 %v2891
        %v3295 = vpop.f32.mrf.mxu0
        %v3296 = vadd.f32 %v3208, %v3295
        %v3297 = vpop.f32.mrf.mxu0
        %v3298 = vadd.f32 %v3210, %v3297
        %3299 = vmatmul.bf16.gmra.mxu0 %v2902
        %v3300 = vpop.f32.mrf.mxu0
        %v3301 = vadd.f32 %v3213, %v3300
        %v3302 = vpop.f32.mrf.mxu0
        %v3303 = vadd.f32 %v3215, %v3302
        %3304 = vmatmul.bf16.gmra.mxu0 %v2913
        %v3305 = vpop.f32.mrf.mxu0
        %v3306 = vadd.f32 %v3218, %v3305
        %v3307 = vpop.f32.mrf.mxu0
        %v3308 = vadd.f32 %v3220, %v3307
        %3309 = vmatmul.bf16.gmra.mxu0 %v2924
        %v3310 = vpop.f32.mrf.mxu0
        %v3311 = vadd.f32 %v3223, %v3310
        %v3312 = vpop.f32.mrf.mxu0
        %v3313 = vadd.f32 %v3225, %v3312
        %3314 = vmatmul.bf16.gmra.mxu0 %v2936
        %v3315 = vpop.f32.mrf.mxu0
        %v3316 = vadd.f32 %v3228, %v3315
        %v3317 = vpop.f32.mrf.mxu0
        %v3318 = vadd.f32 %v3230, %v3317
        %3319 = vmatmul.bf16.gmra.mxu0 %v2954
        %v3320 = vpop.f32.mrf.mxu0
        %v3321 = vadd.f32 %v3233, %v3320
        %v3322 = vpop.f32.mrf.mxu0
        %v3323 = vadd.f32 %v3235, %v3322
        %3324 = vmatmul.bf16.gmra.mxu0 %v2959
        %v3325 = vpop.f32.mrf.mxu0
        %v3326 = vadd.f32 %v3238, %v3325
        %v3327 = vpop.f32.mrf.mxu0
        %3328 = vdwg.mxu0
        %3329 = vmatpush.bf16.msra.mxu0 %v3128
        %3330 = vmatpush.bf16.msra.mxu0 %v3127
        %3331 = vmatpush.bf16.msra.mxu0 %v3126
        %3332 = vmatpush.bf16.msra.mxu0 %v3125
        %3333 = vmatpush.bf16.msra.mxu0 %v3124
        %3334 = vmatpush.bf16.msra.mxu0 %v3123
        %3335 = vmatpush.bf16.msra.mxu0 %v3122
        %3336 = vmatpush.bf16.msra.mxu0 %v3121
        %3337 = vmatmul.bf16.gmra.mxu0 %v2793
        %v3338 = vpop.f32.mrf.mxu0
        %v3339 = vadd.f32 %v3251, %v3338
        %v3340 = vpop.f32.mrf.mxu0
        %v3341 = vadd.f32 %v3253, %v3340
        %3342 = vmatmul.bf16.gmra.mxu0 %v2804
        %v3343 = vpop.f32.mrf.mxu0
        %v3344 = vadd.f32 %v3256, %v3343
        %v3345 = vpop.f32.mrf.mxu0
        %v3346 = vadd.f32 %v3258, %v3345
        %3347 = vmatmul.bf16.gmra.mxu0 %v2815
        %v3348 = vpop.f32.mrf.mxu0
        %v3349 = vadd.f32 %v3261, %v3348
        %v3350 = vpop.f32.mrf.mxu0
        %v3351 = vadd.f32 %v3263, %v3350
        %3352 = vmatmul.bf16.gmra.mxu0 %v2826
        %v3353 = vpop.f32.mrf.mxu0
        %v3354 = vadd.f32 %v3266, %v3353
        %v3355 = vpop.f32.mrf.mxu0
        %v3356 = vadd.f32 %v3268, %v3355
        %3357 = vmatmul.bf16.gmra.mxu0 %v2837
        %v3358 = vpop.f32.mrf.mxu0
        %v3359 = vadd.f32 %v3271, %v3358
        %v3360 = vpop.f32.mrf.mxu0
        %v3361 = vadd.f32 %v3273, %v3360
        %3362 = vmatmul.bf16.gmra.mxu0 %v2848
        %v3363 = vpop.f32.mrf.mxu0
        %v3364 = vadd.f32 %v3276, %v3363
        %v3365 = vpop.f32.mrf.mxu0
        %v3366 = vadd.f32 %v3278, %v3365
        %3367 = vmatmul.bf16.gmra.mxu0 %v2859
        %v3368 = vpop.f32.mrf.mxu0
        %v3369 = vadd.f32 %v3281, %v3368
        %v3370 = vpop.f32.mrf.mxu0
        %v3371 = vadd.f32 %v3283, %v3370
        %3372 = vmatmul.bf16.gmra.mxu0 %v2870
        %v3373 = vpop.f32.mrf.mxu0
        %v3374 = vadd.f32 %v3286, %v3373
        %v3375 = vpop.f32.mrf.mxu0
        %v3376 = vadd.f32 %v3288, %v3375
        %3377 = vmatmul.bf16.gmra.mxu0 %v2881
        %v3378 = vpop.f32.mrf.mxu0
        %v3379 = vadd.f32 %v3291, %v3378
        %v3380 = vpop.f32.mrf.mxu0
        %v3381 = vadd.f32 %v3293, %v3380
        %3382 = vmatmul.bf16.gmra.mxu0 %v2892
        %v3383 = vpop.f32.mrf.mxu0
        %v3384 = vadd.f32 %v3296, %v3383
        %v3385 = vpop.f32.mrf.mxu0
        %v3386 = vadd.f32 %v3298, %v3385
        %3387 = vmatmul.bf16.gmra.mxu0 %v2903
        %v3388 = vpop.f32.mrf.mxu0
        %v3389 = vadd.f32 %v3301, %v3388
        %v3390 = vpop.f32.mrf.mxu0
        %v3391 = vadd.f32 %v3303, %v3390
        %3392 = vmatmul.bf16.gmra.mxu0 %v2914
        %v3393 = vpop.f32.mrf.mxu0
        %v3394 = vadd.f32 %v3306, %v3393
        %v3395 = vpop.f32.mrf.mxu0
        %v3396 = vadd.f32 %v3308, %v3395
        %3397 = vmatmul.bf16.gmra.mxu0 %v2925
        %v3398 = vpop.f32.mrf.mxu0
        %v3399 = vadd.f32 %v3311, %v3398
        %v3400 = vpop.f32.mrf.mxu0
        %v3401 = vadd.f32 %v3313, %v3400
        %3402 = vmatmul.bf16.gmra.mxu0 %v2937
        %v3403 = vpop.f32.mrf.mxu0
        %v3404 = vadd.f32 %v3316, %v3403
        %v3405 = vpop.f32.mrf.mxu0
        %v3406 = vadd.f32 %v3318, %v3405
        %3407 = vmatmul.bf16.gmra.mxu0 %v2955
        %v3408 = vpop.f32.mrf.mxu0
        %v3409 = vadd.f32 %v3321, %v3408
        %v3410 = vpop.f32.mrf.mxu0
        %v3411 = vadd.f32 %v3323, %v3410
        %3412 = vmatmul.bf16.gmra.mxu0 %v2960
        %v3413 = vpop.f32.mrf.mxu0
        %v3414 = vadd.f32 %v3326, %v3413
        %v3415 = vpop.f32.mrf.mxu0
        %3416 = vdwg.mxu0
        %v3417 = vadd.f32 %v2575, %v3339
        %v3418 = vadd.f32 %v2577, %v3341
        %v3419 = vadd.f32 %v2580, %v3344
        %v3420 = vadd.f32 %v2582, %v3346
        %v3421 = vadd.f32 %v2585, %v3349
        %v3422 = vadd.f32 %v2587, %v3351
        %v3423 = vadd.f32 %v2590, %v3354
        %v3424 = vadd.f32 %v2592, %v3356
        %v3425 = vadd.f32 %v2595, %v3359
        %v3426 = vadd.f32 %v2597, %v3361
        %v3427 = vadd.f32 %v2600, %v3364
        %v3428 = vadd.f32 %v2602, %v3366
        %v3429 = vadd.f32 %v2605, %v3369
        %v3430 = vadd.f32 %v2607, %v3371
        %v3431 = vadd.f32 %v2610, %v3374
        %v3432 = vadd.f32 %v2612, %v3376
        %v3433 = vadd.f32 %v2615, %v3379
        %v3434 = vadd.f32 %v2617, %v3381
        %v3435 = vadd.f32 %v2620, %v3384
        %v3436 = vadd.f32 %v2622, %v3386
        %v3437 = vadd.f32 %v2625, %v3389
        %v3438 = vadd.f32 %v2627, %v3391
        %v3439 = vadd.f32 %v2630, %v3394
        %v3440 = vadd.f32 %v2632, %v3396
        %v3441 = vadd.f32 %v2635, %v3399
        %v3442 = vadd.f32 %v2637, %v3401
        %v3443 = vadd.f32 %v2640, %v3404
        %v3444 = vadd.f32 %v2642, %v3406
        %v3445 = vadd.f32 %v2645, %v3409
        %v3446 = vadd.f32 %v2647, %v3411
        %v3447 = vadd.f32 %v2650, %v3414
        %v3448 = vld [vmem:[%s2] sm:$0x1]
        %v3450 = vperm.slane %v3448, 0
        %v3452 = vadd.f32 %v3417, %v3450
        %v3453 = vadd.f32 %v3418, %v3450
        %v3454 = vadd.f32 %v3419, %v3450
        %v3455 = vadd.f32 %v3420, %v3450
        %v3456 = vadd.f32 %v3421, %v3450
        %v3457 = vadd.f32 %v3422, %v3450
        %v3458 = vadd.f32 %v3423, %v3450
        %v3459 = vadd.f32 %v3424, %v3450
        %v3460 = vadd.f32 %v3425, %v3450
        %v3461 = vadd.f32 %v3426, %v3450
        %v3462 = vadd.f32 %v3427, %v3450
        %v3463 = vadd.f32 %v3428, %v3450
        %v3464 = vadd.f32 %v3429, %v3450
        %v3465 = vadd.f32 %v3430, %v3450
        %v3466 = vadd.f32 %v3431, %v3450
        %v3467 = vadd.f32 %v3432, %v3450
        %v3468 = vadd.f32 %v3433, %v3450
        %v3469 = vadd.f32 %v3434, %v3450
        %v3470 = vadd.f32 %v3435, %v3450
        %v3471 = vadd.f32 %v3436, %v3450
        %v3472 = vadd.f32 %v3437, %v3450
        %v3473 = vadd.f32 %v3438, %v3450
        %v3474 = vadd.f32 %v3439, %v3450
        %v3475 = vadd.f32 %v3440, %v3450
        %v3476 = vadd.f32 %v3441, %v3450
        %v3477 = vadd.f32 %v3442, %v3450
        %v3478 = vadd.f32 %v3443, %v3450
        %v3479 = vadd.f32 %v3444, %v3450
        %v3480 = vadd.f32 %v3445, %v3450
        %v3481 = vadd.f32 %v3446, %v3450
        %v3482 = vadd.f32 %v3447, %v3450
        %v3483 = vmax.f32 %v3452, 0.0
        %v3484 = vmax.f32 %v3453, 0.0
        %v3485 = vmax.f32 %v3454, 0.0
        %v3486 = vmax.f32 %v3455, 0.0
        %v3487 = vmax.f32 %v3456, 0.0
        %v3488 = vmax.f32 %v3457, 0.0
        %v3489 = vmax.f32 %v3458, 0.0
        %v3490 = vmax.f32 %v3459, 0.0
        %v3491 = vmax.f32 %v3460, 0.0
        %v3492 = vmax.f32 %v3461, 0.0
        %v3493 = vmax.f32 %v3462, 0.0
        %v3494 = vmax.f32 %v3463, 0.0
        %v3495 = vmax.f32 %v3464, 0.0
        %v3496 = vmax.f32 %v3465, 0.0
        %v3497 = vmax.f32 %v3466, 0.0
        %v3498 = vmax.f32 %v3467, 0.0
        %v3499 = vmax.f32 %v3468, 0.0
        %v3500 = vmax.f32 %v3469, 0.0
        %v3501 = vmax.f32 %v3470, 0.0
        %v3502 = vmax.f32 %v3471, 0.0
        %v3503 = vmax.f32 %v3472, 0.0
        %v3504 = vmax.f32 %v3473, 0.0
        %v3505 = vmax.f32 %v3474, 0.0
        %v3506 = vmax.f32 %v3475, 0.0
        %v3507 = vmax.f32 %v3476, 0.0
        %v3508 = vmax.f32 %v3477, 0.0
        %v3509 = vmax.f32 %v3478, 0.0
        %v3510 = vmax.f32 %v3479, 0.0
        %v3511 = vmax.f32 %v3480, 0.0
        %v3512 = vmax.f32 %v3481, 0.0
        %v3513 = vmax.f32 %v3482, 0.0
        %v3545 = vrot.slane %v3483, 2
        %v3546 = vrot.slane %v3483, 4
        %v3547 = vrot.slane %v3483, 6
        %v3548 = vrot.slane %v3484, 2
        %v3549 = vrot.slane %v3484, 4
        %v3550 = vrot.slane %v3484, 6
        %v3551 = vrot.slane %v3485, 2
        %v3552 = vrot.slane %v3485, 4
        %v3553 = vrot.slane %v3485, 6
        %v3554 = vrot.slane %v3486, 2
        %v3555 = vrot.slane %v3486, 4
        %v3556 = vrot.slane %v3486, 6
        %v3557 = vrot.slane %v3487, 2
        %v3558 = vrot.slane %v3487, 4
        %v3559 = vrot.slane %v3487, 6
        %v3560 = vrot.slane %v3488, 2
        %v3561 = vrot.slane %v3488, 4
        %v3562 = vrot.slane %v3488, 6
        %v3563 = vrot.slane %v3489, 2
        %v3564 = vrot.slane %v3489, 4
        %v3565 = vrot.slane %v3489, 6
        %v3566 = vrot.slane %v3490, 2
        %v3567 = vrot.slane %v3490, 4
        %v3568 = vrot.slane %v3490, 6
        %v3569 = vrot.slane %v3491, 2
        %v3570 = vrot.slane %v3491, 4
        %v3571 = vrot.slane %v3491, 6
        %v3572 = vrot.slane %v3492, 2
        %v3573 = vrot.slane %v3492, 4
        %v3574 = vrot.slane %v3492, 6
        %v3575 = vrot.slane %v3493, 2
        %v3576 = vrot.slane %v3493, 4
        %v3577 = vrot.slane %v3493, 6
        %v3578 = vrot.slane %v3494, 2
        %v3579 = vrot.slane %v3494, 4
        %v3580 = vrot.slane %v3494, 6
        %v3581 = vrot.slane %v3495, 2
        %v3582 = vrot.slane %v3495, 4
        %v3583 = vrot.slane %v3495, 6
        %v3584 = vrot.slane %v3496, 2
        %v3585 = vrot.slane %v3496, 4
        %v3586 = vrot.slane %v3496, 6
        %v3587 = vrot.slane %v3497, 2
        %v3588 = vrot.slane %v3497, 4
        %v3589 = vrot.slane %v3497, 6
        %v3590 = vrot.slane %v3498, 2
        %v3591 = vrot.slane %v3498, 4
        %v3592 = vrot.slane %v3498, 6
        %v3593 = vrot.slane %v3499, 2
        %v3594 = vrot.slane %v3499, 4
        %v3595 = vrot.slane %v3499, 6
        %v3596 = vrot.slane %v3500, 2
        %v3597 = vrot.slane %v3500, 4
        %v3598 = vrot.slane %v3500, 6
        %v3599 = vrot.slane %v3501, 2
        %v3600 = vrot.slane %v3501, 4
        %v3601 = vrot.slane %v3501, 6
        %v3602 = vrot.slane %v3502, 2
        %v3603 = vrot.slane %v3502, 4
        %v3604 = vrot.slane %v3502, 6
        %v3605 = vrot.slane %v3503, 2
        %v3606 = vrot.slane %v3503, 4
        %v3607 = vrot.slane %v3503, 6
        %v3608 = vrot.slane %v3504, 2
        %v3609 = vrot.slane %v3504, 4
        %v3610 = vrot.slane %v3504, 6
        %v3611 = vrot.slane %v3505, 2
        %v3612 = vrot.slane %v3505, 4
        %v3613 = vrot.slane %v3505, 6
        %v3614 = vrot.slane %v3506, 2
        %v3615 = vrot.slane %v3506, 4
        %v3616 = vrot.slane %v3506, 6
        %v3617 = vrot.slane %v3507, 2
        %v3618 = vrot.slane %v3507, 4
        %v3619 = vrot.slane %v3507, 6
        %v3620 = vrot.slane %v3508, 2
        %v3621 = vrot.slane %v3508, 4
        %v3622 = vrot.slane %v3508, 6
        %v3623 = vrot.slane %v3509, 2
        %v3624 = vrot.slane %v3509, 4
        %v3625 = vrot.slane %v3509, 6
        %v3626 = vrot.slane %v3510, 2
        %v3627 = vrot.slane %v3510, 4
        %v3628 = vrot.slane %v3510, 6
        %v3629 = vrot.slane %v3511, 2
        %v3630 = vrot.slane %v3511, 4
        %v3631 = vrot.slane %v3511, 6
        %v3632 = vrot.slane %v3512, 2
        %v3633 = vrot.slane %v3512, 4
        %v3634 = vrot.slane %v3512, 6
        %3635 = vst [vmem:[#allocation1] ss:$4 sm:$0xff] %v3483
        %s3636 = scalar_lea.vmem [#allocation1], 1
        %3637 = vst [vmem:[%s3636] ss:$4 sm:$0xff] %v3545
        %s3638 = scalar_lea.vmem [#allocation1], 2
        %3639 = vst [vmem:[%s3638] ss:$4 sm:$0xff] %v3546
        %s3640 = scalar_lea.vmem [#allocation1], 3
        %3641 = vst [vmem:[%s3640] ss:$4 sm:$0xff] %v3547
        %s3642 = scalar_lea.vmem [#allocation1], 32
        %3643 = vst [vmem:[%s3642] ss:$4 sm:$0xff] %v3484
        %s3644 = scalar_lea.vmem [#allocation1], 33
        %3645 = vst [vmem:[%s3644] ss:$4 sm:$0xff] %v3548
        %s3646 = scalar_lea.vmem [#allocation1], 34
        %3647 = vst [vmem:[%s3646] ss:$4 sm:$0xff] %v3549
        %s3648 = scalar_lea.vmem [#allocation1], 35
        %3649 = vst [vmem:[%s3648] ss:$4 sm:$0xff] %v3550
        %v3650 = vld.sshfl [vmem:[#allocation1] sm:$0xff pattern:$0x73625140]
        %v3651 = vld.sshfl [vmem:[#allocation1 + $0x20] sm:$0xff pattern:$0x73625140]
        %3652 = vst [vmem:[#allocation1] ss:$4 sm:$0xff] %v3485
        %3653 = vst [vmem:[%s3636] ss:$4 sm:$0xff] %v3551
        %3654 = vst [vmem:[%s3638] ss:$4 sm:$0xff] %v3552
        %v3655 = vld.sshfl [vmem:[#allocation1] sm:$0xff pattern:$0x73625140]
        %3656 = vst [vmem:[%s3642] ss:$4 sm:$0xff] %v3553
        %3657 = vst [vmem:[%s3644] ss:$4 sm:$0xff] %v3486
        %3658 = vst [vmem:[%s3646] ss:$4 sm:$0xff] %v3554
        %3659 = vst [vmem:[%s3648] ss:$4 sm:$0xff] %v3555
        %v3660 = vld.sshfl [vmem:[#allocation1 + $0x20] sm:$0xff pattern:$0x73625140]
        %3661 = vst [vmem:[#allocation1] ss:$4 sm:$0xff] %v3556
        %3662 = vst [vmem:[%s3636] ss:$4 sm:$0xff] %v3487
        %3663 = vst [vmem:[%s3638] ss:$4 sm:$0xff] %v3557
        %3664 = vst [vmem:[%s3640] ss:$4 sm:$0xff] %v3558
        %3665 = vst [vmem:[%s3642] ss:$4 sm:$0xff] %v3559
        %3666 = vst [vmem:[%s3644] ss:$4 sm:$0xff] %v3488
        %3667 = vst [vmem:[%s3646] ss:$4 sm:$0xff] %v3560
        %v3668 = vld.sshfl [vmem:[#allocation1] sm:$0xff pattern:$0x73625140]
        %v3669 = vld.sshfl [vmem:[#allocation1 + $0x20] sm:$0xff pattern:$0x73625140]
        %3670 = vst [vmem:[#allocation1] ss:$4 sm:$0xff] %v3561
        %3671 = vst [vmem:[%s3636] ss:$4 sm:$0xff] %v3562
        %3672 = vst [vmem:[%s3638] ss:$4 sm:$0xff] %v3489
        %3673 = vst [vmem:[%s3640] ss:$4 sm:$0xff] %v3563
        %3674 = vst [vmem:[%s3642] ss:$4 sm:$0xff] %v3564
        %3675 = vst [vmem:[%s3644] ss:$4 sm:$0xff] %v3565
        %3676 = vst [vmem:[%s3646] ss:$4 sm:$0xff] %v3490
        %3677 = vst [vmem:[%s3648] ss:$4 sm:$0xff] %v3566
        %v3678 = vld.sshfl [vmem:[#allocation1] sm:$0xff pattern:$0x73625140]
        %v3679 = vld.sshfl [vmem:[#allocation1 + $0x20] sm:$0xff pattern:$0x73625140]
        %3680 = vst [vmem:[#allocation1] ss:$4 sm:$0xff] %v3567
        %3681 = vst [vmem:[%s3636] ss:$4 sm:$0xff] %v3568
        %3682 = vst [vmem:[%s3638] ss:$4 sm:$0xff] %v3491
        %v3683 = vld.sshfl [vmem:[#allocation1] sm:$0xff pattern:$0x73625140]
        %3684 = vst [vmem:[%s3642] ss:$4 sm:$0xff] %v3569
        %3685 = vst [vmem:[%s3644] ss:$4 sm:$0xff] %v3570
        %3686 = vst [vmem:[%s3646] ss:$4 sm:$0xff] %v3571
        %3687 = vst [vmem:[%s3648] ss:$4 sm:$0xff] %v3492
        %v3688 = vld.sshfl [vmem:[#allocation1 + $0x20] sm:$0xff pattern:$0x73625140]
        %3689 = vst [vmem:[#allocation1] ss:$4 sm:$0xff] %v3572
        %3690 = vst [vmem:[%s3636] ss:$4 sm:$0xff] %v3573
        %3691 = vst [vmem:[%s3638] ss:$4 sm:$0xff] %v3574
        %3692 = vst [vmem:[%s3640] ss:$4 sm:$0xff] %v3493
        %3693 = vst [vmem:[%s3642] ss:$4 sm:$0xff] %v3575
        %3694 = vst [vmem:[%s3644] ss:$4 sm:$0xff] %v3576
        %3695 = vst [vmem:[%s3646] ss:$4 sm:$0xff] %v3577
        %v3696 = vld.sshfl [vmem:[#allocation1] sm:$0xff pattern:$0x73625140]
        %v3697 = vld.sshfl [vmem:[#allocation1 + $0x20] sm:$0xff pattern:$0x73625140]
        %3698 = vst [vmem:[#allocation1] ss:$4 sm:$0xff] %v3494
        %3699 = vst [vmem:[%s3636] ss:$4 sm:$0xff] %v3578
        %3700 = vst [vmem:[%s3638] ss:$4 sm:$0xff] %v3579
        %3701 = vst [vmem:[%s3640] ss:$4 sm:$0xff] %v3580
        %3702 = vst [vmem:[%s3642] ss:$4 sm:$0xff] %v3495
        %3703 = vst [vmem:[%s3644] ss:$4 sm:$0xff] %v3581
        %3704 = vst [vmem:[%s3646] ss:$4 sm:$0xff] %v3582
        %3705 = vst [vmem:[%s3648] ss:$4 sm:$0xff] %v3583
        %v3706 = vld.sshfl [vmem:[#allocation1] sm:$0xff pattern:$0x73625140]
        %v3707 = vld.sshfl [vmem:[#allocation1 + $0x20] sm:$0xff pattern:$0x73625140]
        %3708 = vst [vmem:[#allocation1] ss:$4 sm:$0xff] %v3496
        %3709 = vst [vmem:[%s3636] ss:$4 sm:$0xff] %v3584
        %3710 = vst [vmem:[%s3638] ss:$4 sm:$0xff] %v3585
        %v3711 = vld.sshfl [vmem:[#allocation1] sm:$0xff pattern:$0x73625140]
        %3712 = vst [vmem:[%s3642] ss:$4 sm:$0xff] %v3586
        %3713 = vst [vmem:[%s3644] ss:$4 sm:$0xff] %v3497
        %3714 = vst [vmem:[%s3646] ss:$4 sm:$0xff] %v3587
        %3715 = vst [vmem:[%s3648] ss:$4 sm:$0xff] %v3588
        %v3716 = vld.sshfl [vmem:[#allocation1 + $0x20] sm:$0xff pattern:$0x73625140]
        %3717 = vst [vmem:[#allocation1] ss:$4 sm:$0xff] %v3589
        %3718 = vst [vmem:[%s3636] ss:$4 sm:$0xff] %v3498
        %3719 = vst [vmem:[%s3638] ss:$4 sm:$0xff] %v3590
        %3720 = vst [vmem:[%s3640] ss:$4 sm:$0xff] %v3591
        %3721 = vst [vmem:[%s3642] ss:$4 sm:$0xff] %v3592
        %3722 = vst [vmem:[%s3644] ss:$4 sm:$0xff] %v3499
        %3723 = vst [vmem:[%s3646] ss:$4 sm:$0xff] %v3593
        %v3724 = vld.sshfl [vmem:[#allocation1] sm:$0xff pattern:$0x73625140]
        %v3725 = vld.sshfl [vmem:[#allocation1 + $0x20] sm:$0xff pattern:$0x73625140]
        %3726 = vst [vmem:[#allocation1] ss:$4 sm:$0xff] %v3594
        %3727 = vst [vmem:[%s3636] ss:$4 sm:$0xff] %v3595
        %3728 = vst [vmem:[%s3638] ss:$4 sm:$0xff] %v3500
        %3729 = vst [vmem:[%s3640] ss:$4 sm:$0xff] %v3596
        %3730 = vst [vmem:[%s3642] ss:$4 sm:$0xff] %v3597
        %3731 = vst [vmem:[%s3644] ss:$4 sm:$0xff] %v3598
        %3732 = vst [vmem:[%s3646] ss:$4 sm:$0xff] %v3501
        %3733 = vst [vmem:[%s3648] ss:$4 sm:$0xff] %v3599
        %v3734 = vld.sshfl [vmem:[#allocation1] sm:$0xff pattern:$0x73625140]
        %v3735 = vld.sshfl [vmem:[#allocation1 + $0x20] sm:$0xff pattern:$0x73625140]
        %3736 = vst [vmem:[#allocation1] ss:$4 sm:$0xff] %v3600
        %3737 = vst [vmem:[%s3636] ss:$4 sm:$0xff] %v3601
        %3738 = vst [vmem:[%s3638] ss:$4 sm:$0xff] %v3502
        %v3739 = vld.sshfl [vmem:[#allocation1] sm:$0xff pattern:$0x73625140]
        %3740 = vst [vmem:[%s3642] ss:$4 sm:$0xff] %v3602
        %3741 = vst [vmem:[%s3644] ss:$4 sm:$0xff] %v3603
        %3742 = vst [vmem:[%s3646] ss:$4 sm:$0xff] %v3604
        %3743 = vst [vmem:[%s3648] ss:$4 sm:$0xff] %v3503
        %v3744 = vld.sshfl [vmem:[#allocation1 + $0x20] sm:$0xff pattern:$0x73625140]
        %3745 = vst [vmem:[#allocation1] ss:$4 sm:$0xff] %v3605
        %3746 = vst [vmem:[%s3636] ss:$4 sm:$0xff] %v3606
        %3747 = vst [vmem:[%s3638] ss:$4 sm:$0xff] %v3607
        %3748 = vst [vmem:[%s3640] ss:$4 sm:$0xff] %v3504
        %3749 = vst [vmem:[%s3642] ss:$4 sm:$0xff] %v3608
        %3750 = vst [vmem:[%s3644] ss:$4 sm:$0xff] %v3609
        %3751 = vst [vmem:[%s3646] ss:$4 sm:$0xff] %v3610
        %v3752 = vld.sshfl [vmem:[#allocation1] sm:$0xff pattern:$0x73625140]
        %v3753 = vld.sshfl [vmem:[#allocation1 + $0x20] sm:$0xff pattern:$0x73625140]
        %3754 = vst [vmem:[#allocation1] ss:$4 sm:$0xff] %v3505
        %3755 = vst [vmem:[%s3636] ss:$4 sm:$0xff] %v3611
        %3756 = vst [vmem:[%s3638] ss:$4 sm:$0xff] %v3612
        %3757 = vst [vmem:[%s3640] ss:$4 sm:$0xff] %v3613
        %3758 = vst [vmem:[%s3642] ss:$4 sm:$0xff] %v3506
        %3759 = vst [vmem:[%s3644] ss:$4 sm:$0xff] %v3614
        %3760 = vst [vmem:[%s3646] ss:$4 sm:$0xff] %v3615
        %3761 = vst [vmem:[%s3648] ss:$4 sm:$0xff] %v3616
        %v3762 = vld.sshfl [vmem:[#allocation1] sm:$0xff pattern:$0x73625140]
        %v3763 = vld.sshfl [vmem:[#allocation1 + $0x20] sm:$0xff pattern:$0x73625140]
        %3764 = vst [vmem:[#allocation1] ss:$4 sm:$0xff] %v3507
        %3765 = vst [vmem:[%s3636] ss:$4 sm:$0xff] %v3617
        %3766 = vst [vmem:[%s3638] ss:$4 sm:$0xff] %v3618
        %v3767 = vld.sshfl [vmem:[#allocation1] sm:$0xff pattern:$0x73625140]
        %3768 = vst [vmem:[%s3642] ss:$4 sm:$0xff] %v3619
        %3769 = vst [vmem:[%s3644] ss:$4 sm:$0xff] %v3508
        %3770 = vst [vmem:[%s3646] ss:$4 sm:$0xff] %v3620
        %3771 = vst [vmem:[%s3648] ss:$4 sm:$0xff] %v3621
        %v3772 = vld.sshfl [vmem:[#allocation1 + $0x20] sm:$0xff pattern:$0x73625140]
        %3773 = vst [vmem:[#allocation1] ss:$4 sm:$0xff] %v3622
        %3774 = vst [vmem:[%s3636] ss:$4 sm:$0xff] %v3509
        %3775 = vst [vmem:[%s3638] ss:$4 sm:$0xff] %v3623
        %3776 = vst [vmem:[%s3640] ss:$4 sm:$0xff] %v3624
        %3777 = vst [vmem:[%s3642] ss:$4 sm:$0xff] %v3625
        %3778 = vst [vmem:[%s3644] ss:$4 sm:$0xff] %v3510
        %3779 = vst [vmem:[%s3646] ss:$4 sm:$0xff] %v3626
        %v3780 = vld.sshfl [vmem:[#allocation1] sm:$0xff pattern:$0x73625140]
        %v3781 = vld.sshfl [vmem:[#allocation1 + $0x20] sm:$0xff pattern:$0x73625140]
        %3782 = vst [vmem:[#allocation1] ss:$4 sm:$0xff] %v3627
        %3783 = vst [vmem:[%s3636] ss:$4 sm:$0xff] %v3628
        %3784 = vst [vmem:[%s3638] ss:$4 sm:$0xff] %v3511
        %3785 = vst [vmem:[%s3640] ss:$4 sm:$0xff] %v3629
        %3786 = vst [vmem:[%s3642] ss:$4 sm:$0xff] %v3630
        %3787 = vst [vmem:[%s3644] ss:$4 sm:$0xff] %v3631
        %3788 = vst [vmem:[%s3646] ss:$4 sm:$0xff] %v3512
        %3789 = vst [vmem:[%s3648] ss:$4 sm:$0xff] %v3632
        %v3790 = vld.sshfl [vmem:[#allocation1] sm:$0xff pattern:$0x73625140]
        %v3791 = vld.sshfl [vmem:[#allocation1 + $0x20] sm:$0xff pattern:$0x73625140]
        %3792 = vst [vmem:[#allocation1] ss:$4 sm:$0xff] %v3633
        %3793 = vst [vmem:[%s3636] ss:$4 sm:$0xff] %v3634
        %3794 = vst [vmem:[%s3638] ss:$4 sm:$0xff] %v3513
        %v3795 = vld.sshfl [vmem:[#allocation1] sm:$0xff pattern:$0x73625140]
        %v3829 = vpack.c.bf16 %v3650, %v3650
        %v3830 = vpack.c.bf16 %v3651, %v3651
        %v3831 = vpack.c.bf16 %v3655, %v3655
        %v3832 = vpack.c.bf16 %v3660, %v3660
        %v3833 = vpack.c.bf16 %v3668, %v3668
        %v3834 = vpack.c.bf16 %v3669, %v3669
        %v3835 = vpack.c.bf16 %v3678, %v3678
        %v3836 = vpack.c.bf16 %v3679, %v3679
        %v3837 = vpack.c.bf16 %v3683, %v3683
        %v3838 = vpack.c.bf16 %v3688, %v3688
        %v3839 = vpack.c.bf16 %v3696, %v3696
        %v3840 = vpack.c.bf16 %v3697, %v3697
        %v3841 = vpack.c.bf16 %v3706, %v3706
        %v3842 = vpack.c.bf16 %v3707, %v3707
        %v3843 = vpack.c.bf16 %v3711, %v3711
        %v3844 = vpack.c.bf16 %v3716, %v3716
        %v3845 = vpack.c.bf16 %v3724, %v3724
        %v3846 = vpack.c.bf16 %v3725, %v3725
        %v3847 = vpack.c.bf16 %v3734, %v3734
        %v3848 = vpack.c.bf16 %v3735, %v3735
        %v3849 = vpack.c.bf16 %v3739, %v3739
        %v3850 = vpack.c.bf16 %v3744, %v3744
        %v3851 = vpack.c.bf16 %v3752, %v3752
        %v3852 = vpack.c.bf16 %v3753, %v3753
        %v3853 = vpack.c.bf16 %v3762, %v3762
        %v3854 = vpack.c.bf16 %v3763, %v3763
        %v3855 = vpack.c.bf16 %v3767, %v3767
        %v3856 = vpack.c.bf16 %v3772, %v3772
        %v3857 = vpack.c.bf16 %v3780, %v3780
        %v3858 = vpack.c.bf16 %v3781, %v3781
        %v3859 = vpack.c.bf16 %v3790, %v3790
        %v3860 = vpack.c.bf16 %v3791, %v3791
        %v3861 = vpack.c.bf16 %v3795, %v3795
        %3862 = vst [vmem:[%s233] sm:$0xf] %v3829
        %3863 = vst [vmem:[%s233 + $0x4] sm:$0xf] %v3830
        %3864 = vst [vmem:[%s233 + $0x8] sm:$0x7] %v3831
        %3865 = vst [vmem:[%s233 + $0xc] sm:$0xf] %v3832
        %3866 = vst [vmem:[%s233 + $0x10] sm:$0xf] %v3833
        %3867 = vst [vmem:[%s233 + $0x14] sm:$0x7] %v3834
        %3868 = vst [vmem:[%s233 + $0x18] sm:$0xf] %v3835
        %3869 = vst [vmem:[%s233 + $0x1c] sm:$0xf] %v3836
        %3870 = vst [vmem:[%s233 + $0x20] sm:$0x7] %v3837
        %3871 = vst [vmem:[%s233 + $0x24] sm:$0xf] %v3838
        %3872 = vst [vmem:[%s233 + $0x28] sm:$0xf] %v3839
        %3873 = vst [vmem:[%s233 + $0x2c] sm:$0x7] %v3840
        %3874 = vst [vmem:[%s233 + $0x30] sm:$0xf] %v3841
        %3875 = vst [vmem:[%s233 + $0x34] sm:$0xf] %v3842
        %3876 = vst [vmem:[%s233 + $0x38] sm:$0x7] %v3843
        %3877 = vst [vmem:[%s233 + $0x3c] sm:$0xf] %v3844
        %3878 = vst [vmem:[%s233 + $0x40] sm:$0xf] %v3845
        %3879 = vst [vmem:[%s233 + $0x44] sm:$0x7] %v3846
        %3880 = vst [vmem:[%s233 + $0x48] sm:$0xf] %v3847
        %3881 = vst [vmem:[%s233 + $0x4c] sm:$0xf] %v3848
        %3882 = vst [vmem:[%s233 + $0x50] sm:$0x7] %v3849
        %3883 = vst [vmem:[%s233 + $0x54] sm:$0xf] %v3850
        %3884 = vst [vmem:[%s233 + $0x58] sm:$0xf] %v3851
        %3885 = vst [vmem:[%s233 + $0x5c] sm:$0x7] %v3852
        %3886 = vst [vmem:[%s233 + $0x60] sm:$0xf] %v3853
        %3887 = vst [vmem:[%s233 + $0x64] sm:$0xf] %v3854
        %3888 = vst [vmem:[%s233 + $0x68] sm:$0x7] %v3855
        %3889 = vst [vmem:[%s233 + $0x6c] sm:$0xf] %v3856
        %3890 = vst [vmem:[%s233 + $0x70] sm:$0xf] %v3857
        %3891 = vst [vmem:[%s233 + $0x74] sm:$0x7] %v3858
        %3892 = vst [vmem:[%s233 + $0x78] sm:$0xf] %v3859
        %3893 = vst [vmem:[%s233 + $0x7c] sm:$0xf] %v3860
        %3894 = vst [vmem:[%s233 + $0x80] sm:$0x7] %v3861
        %s3895 = smul.u32 11, %s23
        %p3896 = scmp.lt.s32.totalorder %s22, 1
        %s3897 = scalar_select %p3896, %s22, 1
        %p3898 = scmp.lt.s32.totalorder %s3895, 21
        %s3899 = scalar_select %p3898, %s3895, 21
        %s3900 = smul.addr %s3899, 3
        %s3901 = smul.addr %s3897, 66
        %s3902 = sadd.s32 %s3900, %s3901
        %s3903 = smul.addr %s3902, 4
        %s3904 = scalar_lea.vmem %s3, %s3903
        // Predicated region
        $region41: #{tpu_custom_call.1} parent=31 // pred_check
          %p3905 = pneg %p118
        $region42: #{tpu_custom_call.1} parent=31 // pred_check_branch
          %3907 = sbr.rel (%p3905) target = $region44
        $region43: #{tpu_custom_call.1} parent=31 // pred_region
          %s3908 = smul.u32 11, %s23
        $region44: #{tpu_custom_call.1} parent=31 // pred_fallthru
          _
      $region32: #{tpu_custom_call.1} parent=5 // pred_fallthru
        _
      %p3909 = scmp.le.s32.totalorder 2, %s13
      // Predicated region
      $region45: #{tpu_custom_call.1} parent=5 // pred_check
        %p3910 = pneg %p3909
      $region46: #{tpu_custom_call.1} parent=5 // pred_check_branch
        %3912 = sbr.rel (%p3910) target = $region48
      $region47: #{tpu_custom_call.1} parent=5 // pred_region
        %s3913 = ssub.s32 %s13, 2
        // Predicated region
        $region49: #{tpu_custom_call.1} parent=47 // pred_check
          %p3914 = pneg %p124
        $region50: #{tpu_custom_call.1} parent=47 // pred_check_branch
          %3916 = sbr.rel (%p3914) target = $region52
        $region51: #{tpu_custom_call.1} parent=47 // pred_region
          %s3917 = smul.u32 11, %s25
          %p3918 = scmp.lt.s32.totalorder %s24, 1
          %s3919 = scalar_select %p3918, %s24, 1
          %p3920 = scmp.lt.s32.totalorder %s3917, 21
          %s3921 = scalar_select %p3920, %s3917, 21
          %s3922 = smul.addr %s3921, 3
          %s3923 = smul.addr %s3919, 66
          %s3924 = sadd.s32 %s3922, %s3923
          %s3925 = smul.addr %s3924, 4
          %s3926 = scalar_lea.vmem %s3, %s3925
        $region52: #{tpu_custom_call.1} parent=47 // pred_fallthru
          _
      $region48: #{tpu_custom_call.1} parent=5 // pred_fallthru
        _
    $region6: #{tpu_custom_call.1} parent=1 // loop_footer
      %s17 = sadd.s32 1, %s13
    $region7: #{tpu_custom_call.1} parent=1 // loop_footer_branch
      %12 = sbr.rel target = $region3
    $region8: #{tpu_custom_call.1} parent=1 // loop_exit
      _
    %3927 = vsyncpa [#allocation3], 1
    %s3928 = scalar_lea.sflag [#allocation3], 1
    %3929 = vsyncpa %s3928, 1
    %3930 = vsyncpa [#allocation5], 1

</llo_original>
